<compile_context>
chip_gen: v6e
topology: v6e:2x2x1
jax: 0.10.0
libtpu: 0.0.40
codegen_flags: <defaults>
</compile_context>

<pallas_src>
import math
import numpy as np
import jax
import jax.numpy as jnp
from jax.experimental import pallas as pl
from jax.experimental.pallas import tpu as pltpu

D = 128  # padded (lane-dense) feature width


def _round_up(a, m):
    return -(-a // m) * m


# ----------------------------- in-kernel helpers -----------------------------

def _silu(h):
    return h * jax.nn.sigmoid(h)


def _gelu(h):
    # matches torch.nn.GELU() default (exact erf form)
    return 0.5 * h * (1.0 + jax.lax.erf(h * 0.7071067811865475))


def _layernorm(h, gamma, beta, n_real, eps=1e-6):
    # One-pass stats in f32.  Padded lanes of h are exactly zero, so summing
    # over all 128 lanes and dividing by the REAL feature count is exact.
    inv_n = 1.0 / float(n_real)
    m1 = jnp.sum(h, axis=-1, keepdims=True) * inv_n
    m2 = jnp.sum(h * h, axis=-1, keepdims=True) * inv_n
    var = m2 - m1 * m1
    return (h - m1) * jax.lax.rsqrt(var + eps) * gamma + beta


# --------------------------------- kernel -----------------------------------

def _make_kernel(num_layer, projection_dim, mlp_dim):
    n_blocks = num_layer - 1   # number of (LayerNorm + ResNetDense) blocks
    n_hidden = num_layer       # ResNetDense(..., nlayers=num_layer, ...)

    def kernel(x_ref, c_ref, w1_ref, w2_ref, wfl_ref, v_ref, o_ref):
        def V(i):
            return v_ref[i:i + 1, :]                       # [1, 128] f32

        def dot(h, w):                                     # bf16 MXU, f32 acc
            return jnp.dot(h.astype(jnp.bfloat16), w,
                           preferred_element_type=jnp.float32)

        def lin(h, wi, vi):                                # square 128x128 linear
            return dot(h, w1_ref[wi]) + V(vi)

        # ---- conditioning front-end -------------------------------------
        # one [TB,256]x[256,256] matmul: block-diag (fourier layer0 | dense_label)
        fl = dot(c_ref[...], wfl_ref[...])                 # [TB, 256]
        t = _silu(fl[:, :D] + V(0))                        # FourierProjection MLP 0
        t = _silu(lin(t, 0, 1))                            # FourierProjection MLP 1
        cond = fl[:, D:] + V(2) + t                        # dense_label(label) + embed_time

        # dense_cond: fused Linear(P -> 2P) + GELU, chunk at the lane-128 boundary
        cs = dot(cond, w2_ref[0])                          # [TB, 256]
        scale = _gelu(cs[:, :D] + V(3))
        shift = _gelu(cs[:, D:] + V(4))

        # dense_layer (Linear + SiLU) followed by FiLM modulation
        h = _silu(lin(x_ref[...], 1, 5))
        h = h * (1.0 + scale) + shift

        # ---- (LayerNorm -> ResNetDense) blocks; dropout=0.0 -> identity ----
        wi1, vi = 2, 6
        for blk in range(n_blocks):
            din = projection_dim if blk == 0 else mlp_dim
            hn = _layernorm(h, V(vi), V(vi + 1), din)
            # fused (residual_layer | hidden_layers[0]) matmul on hn
            rh = dot(hn, w2_ref[1 + blk])                  # [TB, 256]
            residual = rh[:, :D] + V(vi + 2)
            hh = _silu(rh[:, D:] + V(vi + 3))
            vi += 4
            for _ in range(n_hidden - 1):
                hh = _silu(lin(hh, wi1, vi))
                wi1 += 1
                vi += 1
            h = residual + hh * V(vi)                      # LayerScale
            vi += 1

        # ---- output LayerNorm + zero-initialized output Linear -------------
        h = _layernorm(h, V(vi), V(vi + 1), mlp_dim)
        o_ref[...] = lin(h, wi1, vi + 2)                   # lane-dense [TB,128] store

    return kernel


# ------------------------- parameter init + packing --------------------------

def init_packed_params(key, *, num_layer, input_dim, label_dim,
                       projection_dim, mlp_dim, layer_scale_init):
    """PyTorch-style uniform(+-1/sqrt(fan_in)) init, packed into padded stacks.

    Returns (W1 [n1,128,128] bf16, W2 [n2,128,256] bf16, Wfl [256,256] bf16,
    V [nv,128] f32).  Real data sits in the top-left corners; everything else
    is zero so padded lanes stay exactly zero inside the kernel.
    """
    P, M = projection_dim, mlp_dim
    n_blocks = num_layer - 1
    n_hidden = num_layer
    n_w1 = 2 + n_blocks * (n_hidden - 1) + 1
    n_w2 = 1 + n_blocks
    n_v = 6 + n_blocks * (4 + n_hidden) + 3
    n_v_pad = _round_up(n_v, 8)

    W1 = np.zeros((n_w1, D, D), np.float32)
    W2 = np.zeros((n_w2, D, 2 * D), np.float32)
    Wfl = np.zeros((2 * D, 2 * D), np.float32)
    V = np.zeros((n_v_pad, D), np.float32)

    n_lin = 6 + n_blocks * (1 + n_hidden)
    kit = iter(jax.random.split(key, 2 * n_lin))

    def uni(shape, bound):
        return np.asarray(
            jax.random.uniform(next(kit), shape, jnp.float32, -bound, bound))

    # FourierProjection MLP layer 0 -> Wfl block (0:P, 0:P)
    b = 1.0 / math.sqrt(P)
    Wfl[:P, :P] = uni((P, P), b)
    V[0, :P] = uni((P,), b)
    # FourierProjection MLP layer 1 -> W1[0]
    W1[0, :P, :P] = uni((P, P), b)
    V[1, :P] = uni((P,), b)
    # dense_label -> Wfl block (128:128+label_dim, 128:128+P)
    b = 1.0 / math.sqrt(label_dim)
    Wfl[D:D + label_dim, D:D + P] = uni((label_dim, P), b)
    V[2, :P] = uni((P,), b)
    # dense_cond: fused Linear(P -> 2P); scale half -> cols [0:P],
    # shift half -> cols [128:128+P] (lane-block aligned chunk in the kernel)
    b = 1.0 / math.sqrt(P)
    wc = uni((P, 2 * P), b)
    bc = uni((2 * P,), b)
    W2[0, :P, :P] = wc[:, :P]
    W2[0, :P, D:D + P] = wc[:, P:]
    V[3, :P] = bc[:P]
    V[4, :P] = bc[P:]
    # dense_layer: Linear(input_dim, P)
    b = 1.0 / math.sqrt(input_dim)
    W1[1, :input_dim, :P] = uni((input_dim, P), b)
    V[5, :P] = uni((P,), b)

    wi1, vi = 2, 6
    for blk in range(n_blocks):
        din = P if blk == 0 else M
        V[vi, :din] = 1.0                        # LayerNorm gamma (beta row stays 0)
        b = 1.0 / math.sqrt(din)
        # fused (residual_layer | hidden_layers[0]) -> W2[1+blk]
        W2[1 + blk, :din, :M] = uni((din, M), b)           # residual_layer
        V[vi + 2, :M] = uni((M,), b)
        W2[1 + blk, :din, D:D + M] = uni((din, M), b)      # hidden_layers[0]
        V[vi + 3, :M] = uni((M,), b)
        vi += 4
        b = 1.0 / math.sqrt(M)
        for _ in range(n_hidden - 1):                      # hidden_layers[1:]
            W1[wi1, :M, :M] = uni((M, M), b)
            V[vi, :M] = uni((M,), b)
            wi1 += 1
            vi += 1
        V[vi, :M] = layer_scale_init                       # LayerScale gamma
        vi += 1

    # out_layer_norm
    V[vi, :M] = 1.0                                        # gamma (beta row stays 0)
    # out Linear: nn.init.zeros_(weight) -> W1[wi1] stays zero; default bias init
    V[vi + 2, :input_dim] = uni((input_dim,), 1.0 / math.sqrt(M))

    return (jnp.asarray(W1, jnp.bfloat16), jnp.asarray(W2, jnp.bfloat16),
            jnp.asarray(Wfl, jnp.bfloat16), jnp.asarray(V, jnp.float32))


# --------------------------------- wrapper -----------------------------------

def _forward(x, label, time, W1, W2, Wfl, V, *, num_layer, input_dim,
             label_dim, projection_dim, mlp_dim, batch_tile,
             single_buffer_weights):
    B = x.shape[0]
    P = projection_dim
    n_blocks = num_layer - 1
    n_hidden = num_layer

    # TODO(synk): FourierProjection class was not provided; implemented as the
    # standard sinusoidal time embedding (host-side, fused into this jit)
    # followed by a 2-layer SiLU MLP evaluated inside the kernel.
    half = P // 2
    freqs = jnp.exp(-math.log(10000.0) *
                    jnp.arange(half, dtype=jnp.float32) / (half - 1))
    ang = time.astype(jnp.float32).reshape(B, 1) * freqs[None, :]
    tfeat = jnp.concatenate([jnp.sin(ang), jnp.cos(ang)], axis=-1)   # [B, P]

    # lane-dense packed activations (padded feature lanes are exactly zero)
    xp = jnp.zeros((B, D), jnp.float32).at[:, :input_dim].set(x.astype(jnp.float32))
    cp = jnp.zeros((B, 2 * D), jnp.float32)
    cp = cp.at[:, :P].set(tfeat)
    cp = cp.at[:, D:D + label_dim].set(label.astype(jnp.float32))

    # Batch tiling: large tiles for MXU row utilization; when the whole batch
    # fits one tile, split into two grid steps so v7x's 2 TensorCores both work.
    TB = min(batch_tile, _round_up(B, 8))
    if B > 8 and _round_up(B, TB) == TB:
        TB = _round_up(TB // 2, 8)
    Bp = _round_up(B, TB)
    if Bp > B:
        xp = jnp.pad(xp, ((0, Bp - B), (0, 0)))
        cp = jnp.pad(cp, ((0, Bp - B), (0, 0)))

    kernel = _make_kernel(num_layer, projection_dim, mlp_dim)

    act128 = pl.BlockSpec((TB, D), lambda i: (i, 0))
    act256 = pl.BlockSpec((TB, 2 * D), lambda i: (i, 0))

    def const_spec(shape):
        idx = lambda i, _n=len(shape): (0,) * _n
        if single_buffer_weights:
            # Grid-invariant weights: single-buffer them so the scaled-up
            # (mlp_dim ~ 1024) weight stack is not double-buffered on v7x's
            # 64 MiB VMEM.  Fallback path uses default buffering.
            return pl.BlockSpec(shape, idx, pipeline_mode=pl.Buffered(1))
        return pl.BlockSpec(shape, idx)

    # Advisory cost estimate so XLA schedules surrounding ops around the call.
    n_mm_sq = 2 + n_blocks * (n_hidden - 1) + 1            # 128x128 matmuls
    n_mm_wide = 1 + n_blocks                               # 128x256 matmuls
    flops = 2 * Bp * D * D * (n_mm_sq + 2 * n_mm_wide + 4)  # +4: 256x256 front-end
    transcend = Bp * D * (3 + n_blocks * n_hidden + 2) + Bp * (n_blocks + 1)
    weight_bytes = (W1.size + W2.size + Wfl.size) * 2 + V.size * 4
    bytes_accessed = weight_bytes + Bp * 4 * (D + 2 * D + D)

    out = pl.pallas_call(
        kernel,
        out_shape=jax.ShapeDtypeStruct((Bp, D), jnp.float32),
        grid=(Bp // TB,),
        in_specs=[act128, act256,
                  const_spec(W1.shape), const_spec(W2.shape),
                  const_spec(Wfl.shape), const_spec(V.shape)],
        out_specs=act128,
        compiler_params=pltpu.CompilerParams(
            dimension_semantics=("parallel",),
            vmem_limit_bytes=48 * 1024 * 1024),
        cost_estimate=pl.CostEstimate(
            flops=int(flops),
            transcendentals=int(transcend),
            bytes_accessed=int(bytes_accessed)),
    )(xp, cp, W1, W2, Wfl, V)

    return out[:B, :input_dim]


_forward_jit = jax.jit(
    _forward,
    static_argnames=("num_layer", "input_dim", "label_dim", "projection_dim",
                     "mlp_dim", "batch_tile", "single_buffer_weights"))


def time_conditioned_resnet(x, label, time, packed, *, num_layer, input_dim,
                            label_dim, projection_dim, mlp_dim,
                            batch_tile=256):
    W1, W2, Wfl, V = packed
    kwargs = dict(num_layer=num_layer, input_dim=input_dim,
                  label_dim=label_dim, projection_dim=projection_dim,
                  mlp_dim=mlp_dim, batch_tile=batch_tile)
    try:
        return _forward_jit(x, label, time, W1, W2, Wfl, V,
                            single_buffer_weights=True, **kwargs)
    except Exception:
        # pl.Buffered(1) not supported by this JAX build -> default buffering.
        return _forward_jit(x, label, time, W1, W2, Wfl, V,
                            single_buffer_weights=False, **kwargs)


# ----------------------------------- main ------------------------------------

if __name__ == "__main__":
    # Module config (small, consistent with the PyTorch __init__)
    num_layer = 3
    input_dim = 4
    label_dim = 3
    projection_dim = 32
    mlp_dim = 32
    layer_scale_init = 1.0
    dropout = 0.0            # eval-mode: Dropout is identity
    sub_resnet_nlayer = 2    # stored by the module but unused in forward

    key = jax.random.PRNGKey(0)
    kx, kl, kt, kp = jax.random.split(key, 4)

    B = 16
    x = jax.random.normal(kx, (B, input_dim), jnp.float32)
    label = jax.random.normal(kl, (B, label_dim), jnp.float32)
    time = jax.random.uniform(kt, (B, 1), jnp.float32)

    packed = init_packed_params(kp, num_layer=num_layer, input_dim=input_dim,
                                label_dim=label_dim,
                                projection_dim=projection_dim, mlp_dim=mlp_dim,
                                layer_scale_init=layer_scale_init)

    out = time_conditioned_resnet(x, label, time, packed,
                                  num_layer=num_layer, input_dim=input_dim,
                                  label_dim=label_dim,
                                  projection_dim=projection_dim,
                                  mlp_dim=mlp_dim)
    jax.block_until_ready(out)
    assert out.shape == (B, input_dim) and out.dtype == jnp.float32
    assert bool(jnp.all(jnp.isfinite(out)))

    print("KERNEL_OK")
</pallas_src>

<mosaic_0001>
module attributes {stable_mosaic.version = 11 : i64} {
  func.func @kernel(%arg0: i32, %arg1: memref<8x128xf32, #tpu.memory_space<vmem>>, %arg2: memref<8x256xf32, #tpu.memory_space<vmem>>, %arg3: memref<7x128x128xbf16, #tpu.memory_space<vmem>>, %arg4: memref<3x128x256xbf16, #tpu.memory_space<vmem>>, %arg5: memref<256x256xbf16, #tpu.memory_space<vmem>>, %arg6: memref<24x128xf32, #tpu.memory_space<vmem>>, %arg7: memref<8x128xf32, #tpu.memory_space<vmem>>) attributes {dimension_semantics = [#tpu.dimension_semantics<parallel>], iteration_bounds = array<i64: 2>, scalar_prefetch = 0 : i64, scratch_operands = 0 : i64, tpu.core_type = #tpu.core_type<tc>, window_params = [{transform_indices = @transform_0, window_bounds = array<i64: 8, 128>}, {transform_indices = @transform_1, window_bounds = array<i64: 8, 256>}, {pipeline_mode = #tpu.pipeline_mode<synchronous>, transform_indices = @transform_2, window_bounds = array<i64: 7, 128, 128>}, {pipeline_mode = #tpu.pipeline_mode<synchronous>, transform_indices = @transform_3, window_bounds = array<i64: 3, 128, 256>}, {pipeline_mode = #tpu.pipeline_mode<synchronous>, transform_indices = @transform_4, window_bounds = array<i64: 256, 256>}, {pipeline_mode = #tpu.pipeline_mode<synchronous>, transform_indices = @transform_5, window_bounds = array<i64: 24, 128>}, {transform_indices = @transform_6, window_bounds = array<i64: 8, 128>}]} {
    %c0 = arith.constant 0 : index
    %c0_0 = arith.constant 0 : index
    %0 = vector.load %arg2[%c0, %c0_0] : memref<8x256xf32, #tpu.memory_space<vmem>>, vector<8x256xf32>
    %c0_1 = arith.constant 0 : index
    %c0_2 = arith.constant 0 : index
    %1 = vector.load %arg5[%c0_1, %c0_2] : memref<256x256xbf16, #tpu.memory_space<vmem>>, vector<256x256xbf16>
    %2 = arith.truncf %0 : vector<8x256xf32> to vector<8x256xbf16>
    %cst = arith.constant dense<0.000000e+00> : vector<8x256xf32>
    %3 = tpu.matmul %2, %1, %cst {dimension_numbers = #tpu.dot_dimension_numbers<[1], [0], [0], [1], [0, 0, 1, 1], [], []>} : vector<8x256xbf16>, vector<256x256xbf16>, vector<8x256xf32> -> vector<8x256xf32>
    %4 = vector.extract_strided_slice %3 {offsets = [0, 0], sizes = [8, 128], strides = [1, 1]} : vector<8x256xf32> to vector<8x128xf32>
    %c0_3 = arith.constant 0 : index
    %c0_4 = arith.constant 0 : index
    %5 = vector.load %arg6[%c0_3, %c0_4] : memref<24x128xf32, #tpu.memory_space<vmem>>, vector<1x128xf32>
    %6 = vector.broadcast %5 : vector<1x128xf32> to vector<8x128xf32>
    %7 = arith.addf %4, %6 : vector<8x128xf32>
    %8 = arith.negf %7 : vector<8x128xf32>
    %9 = math.exp %8 : vector<8x128xf32>
    %cst_5 = arith.constant 1.000000e+00 : f32
    %10 = vector.broadcast %cst_5 : f32 to vector<8x128xf32>
    %11 = arith.addf %10, %9 : vector<8x128xf32>
    %12 = arith.divf %10, %11 : vector<8x128xf32>
    %13 = arith.mulf %7, %12 : vector<8x128xf32>
    %c0_6 = arith.constant 0 : index
    %c0_7 = arith.constant 0 : index
    %c0_8 = arith.constant 0 : index
    %14 = vector.load %arg3[%c0_6, %c0_7, %c0_8] : memref<7x128x128xbf16, #tpu.memory_space<vmem>>, vector<1x128x128xbf16>
    %15 = vector.shape_cast %14 : vector<1x128x128xbf16> to vector<128x128xbf16>
    %16 = arith.truncf %13 : vector<8x128xf32> to vector<8x128xbf16>
    %cst_9 = arith.constant dense<0.000000e+00> : vector<8x128xf32>
    %17 = tpu.matmul %16, %15, %cst_9 {dimension_numbers = #tpu.dot_dimension_numbers<[1], [0], [0], [1], [0, 0, 1, 1], [], []>} : vector<8x128xbf16>, vector<128x128xbf16>, vector<8x128xf32> -> vector<8x128xf32>
    %c1 = arith.constant 1 : index
    %c0_10 = arith.constant 0 : index
    %18 = vector.load %arg6[%c1, %c0_10] : memref<24x128xf32, #tpu.memory_space<vmem>>, vector<1x128xf32>
    %19 = vector.broadcast %18 : vector<1x128xf32> to vector<8x128xf32>
    %20 = arith.addf %17, %19 : vector<8x128xf32>
    %21 = arith.negf %20 : vector<8x128xf32>
    %22 = math.exp %21 : vector<8x128xf32>
    %cst_11 = arith.constant 1.000000e+00 : f32
    %23 = vector.broadcast %cst_11 : f32 to vector<8x128xf32>
    %24 = arith.addf %23, %22 : vector<8x128xf32>
    %25 = arith.divf %23, %24 : vector<8x128xf32>
    %26 = arith.mulf %20, %25 : vector<8x128xf32>
    %27 = vector.extract_strided_slice %3 {offsets = [0, 128], sizes = [8, 128], strides = [1, 1]} : vector<8x256xf32> to vector<8x128xf32>
    %c2 = arith.constant 2 : index
    %c0_12 = arith.constant 0 : index
    %28 = vector.load %arg6[%c2, %c0_12] : memref<24x128xf32, #tpu.memory_space<vmem>>, vector<1x128xf32>
    %29 = vector.broadcast %28 : vector<1x128xf32> to vector<8x128xf32>
    %30 = arith.addf %27, %29 : vector<8x128xf32>
    %31 = arith.addf %30, %26 : vector<8x128xf32>
    %c0_13 = arith.constant 0 : index
    %c0_14 = arith.constant 0 : index
    %c0_15 = arith.constant 0 : index
    %32 = vector.load %arg4[%c0_13, %c0_14, %c0_15] : memref<3x128x256xbf16, #tpu.memory_space<vmem>>, vector<1x128x256xbf16>
    %33 = vector.shape_cast %32 : vector<1x128x256xbf16> to vector<128x256xbf16>
    %34 = arith.truncf %31 : vector<8x128xf32> to vector<8x128xbf16>
    %cst_16 = arith.constant dense<0.000000e+00> : vector<8x256xf32>
    %35 = tpu.matmul %34, %33, %cst_16 {dimension_numbers = #tpu.dot_dimension_numbers<[1], [0], [0], [1], [0, 0, 1, 1], [], []>} : vector<8x128xbf16>, vector<128x256xbf16>, vector<8x256xf32> -> vector<8x256xf32>
    %36 = vector.extract_strided_slice %35 {offsets = [0, 0], sizes = [8, 128], strides = [1, 1]} : vector<8x256xf32> to vector<8x128xf32>
    %c3 = arith.constant 3 : index
    %c0_17 = arith.constant 0 : index
    %37 = vector.load %arg6[%c3, %c0_17] : memref<24x128xf32, #tpu.memory_space<vmem>>, vector<1x128xf32>
    %38 = vector.broadcast %37 : vector<1x128xf32> to vector<8x128xf32>
    %39 = arith.addf %36, %38 : vector<8x128xf32>
    %cst_18 = arith.constant 5.000000e-01 : f32
    %40 = vector.broadcast %cst_18 : f32 to vector<8x128xf32>
    %41 = arith.mulf %40, %39 : vector<8x128xf32>
    %cst_19 = arith.constant 0.707106769 : f32
    %42 = vector.broadcast %cst_19 : f32 to vector<8x128xf32>
    %43 = arith.mulf %39, %42 : vector<8x128xf32>
    %44 = math.erf %43 : vector<8x128xf32>
    %cst_20 = arith.constant 1.000000e+00 : f32
    %45 = vector.broadcast %cst_20 : f32 to vector<8x128xf32>
    %46 = arith.addf %45, %44 : vector<8x128xf32>
    %47 = arith.mulf %41, %46 : vector<8x128xf32>
    %48 = vector.extract_strided_slice %35 {offsets = [0, 128], sizes = [8, 128], strides = [1, 1]} : vector<8x256xf32> to vector<8x128xf32>
    %c4 = arith.constant 4 : index
    %c0_21 = arith.constant 0 : index
    %49 = vector.load %arg6[%c4, %c0_21] : memref<24x128xf32, #tpu.memory_space<vmem>>, vector<1x128xf32>
    %50 = vector.broadcast %49 : vector<1x128xf32> to vector<8x128xf32>
    %51 = arith.addf %48, %50 : vector<8x128xf32>
    %cst_22 = arith.constant 5.000000e-01 : f32
    %52 = vector.broadcast %cst_22 : f32 to vector<8x128xf32>
    %53 = arith.mulf %52, %51 : vector<8x128xf32>
    %cst_23 = arith.constant 0.707106769 : f32
    %54 = vector.broadcast %cst_23 : f32 to vector<8x128xf32>
    %55 = arith.mulf %51, %54 : vector<8x128xf32>
    %56 = math.erf %55 : vector<8x128xf32>
    %cst_24 = arith.constant 1.000000e+00 : f32
    %57 = vector.broadcast %cst_24 : f32 to vector<8x128xf32>
    %58 = arith.addf %57, %56 : vector<8x128xf32>
    %59 = arith.mulf %53, %58 : vector<8x128xf32>
    %c0_25 = arith.constant 0 : index
    %c0_26 = arith.constant 0 : index
    %60 = vector.load %arg1[%c0_25, %c0_26] : memref<8x128xf32, #tpu.memory_space<vmem>>, vector<8x128xf32>
    %c1_27 = arith.constant 1 : index
    %c0_28 = arith.constant 0 : index
    %c0_29 = arith.constant 0 : index
    %61 = vector.load %arg3[%c1_27, %c0_28, %c0_29] : memref<7x128x128xbf16, #tpu.memory_space<vmem>>, vector<1x128x128xbf16>
    %62 = vector.shape_cast %61 : vector<1x128x128xbf16> to vector<128x128xbf16>
    %63 = arith.truncf %60 : vector<8x128xf32> to vector<8x128xbf16>
    %cst_30 = arith.constant dense<0.000000e+00> : vector<8x128xf32>
    %64 = tpu.matmul %63, %62, %cst_30 {dimension_numbers = #tpu.dot_dimension_numbers<[1], [0], [0], [1], [0, 0, 1, 1], [], []>} : vector<8x128xbf16>, vector<128x128xbf16>, vector<8x128xf32> -> vector<8x128xf32>
    %c5 = arith.constant 5 : index
    %c0_31 = arith.constant 0 : index
    %65 = vector.load %arg6[%c5, %c0_31] : memref<24x128xf32, #tpu.memory_space<vmem>>, vector<1x128xf32>
    %66 = vector.broadcast %65 : vector<1x128xf32> to vector<8x128xf32>
    %67 = arith.addf %64, %66 : vector<8x128xf32>
    %68 = arith.negf %67 : vector<8x128xf32>
    %69 = math.exp %68 : vector<8x128xf32>
    %cst_32 = arith.constant 1.000000e+00 : f32
    %70 = vector.broadcast %cst_32 : f32 to vector<8x128xf32>
    %71 = arith.addf %70, %69 : vector<8x128xf32>
    %72 = arith.divf %70, %71 : vector<8x128xf32>
    %73 = arith.mulf %67, %72 : vector<8x128xf32>
    %cst_33 = arith.constant 1.000000e+00 : f32
    %74 = vector.broadcast %cst_33 : f32 to vector<8x128xf32>
    %75 = arith.addf %74, %47 : vector<8x128xf32>
    %76 = arith.mulf %73, %75 : vector<8x128xf32>
    %77 = arith.addf %76, %59 : vector<8x128xf32>
    %c6 = arith.constant 6 : index
    %c0_34 = arith.constant 0 : index
    %78 = vector.load %arg6[%c6, %c0_34] : memref<24x128xf32, #tpu.memory_space<vmem>>, vector<1x128xf32>
    %c7 = arith.constant 7 : index
    %c0_35 = arith.constant 0 : index
    %79 = vector.load %arg6[%c7, %c0_35] : memref<24x128xf32, #tpu.memory_space<vmem>>, vector<1x128xf32>
    %cst_36 = arith.constant dense<0.000000e+00> : vector<8xf32>
    %80 = vector.multi_reduction <add>, %77, %cst_36 [1] : vector<8x128xf32> to vector<8xf32>
    %81 = vector.shape_cast %80 : vector<8xf32> to vector<8x1xf32>
    %cst_37 = arith.constant 3.125000e-02 : f32
    %82 = vector.broadcast %cst_37 : f32 to vector<8x1xf32>
    %83 = arith.mulf %81, %82 : vector<8x1xf32>
    %84 = arith.mulf %77, %77 : vector<8x128xf32>
    %cst_38 = arith.constant dense<0.000000e+00> : vector<8xf32>
    %85 = vector.multi_reduction <add>, %84, %cst_38 [1] : vector<8x128xf32> to vector<8xf32>
    %86 = vector.shape_cast %85 : vector<8xf32> to vector<8x1xf32>
    %cst_39 = arith.constant 3.125000e-02 : f32
    %87 = vector.broadcast %cst_39 : f32 to vector<8x1xf32>
    %88 = arith.mulf %86, %87 : vector<8x1xf32>
    %89 = arith.mulf %83, %83 : vector<8x1xf32>
    %90 = arith.subf %88, %89 : vector<8x1xf32>
    %91 = vector.broadcast %83 : vector<8x1xf32> to vector<8x128xf32>
    %92 = arith.subf %77, %91 : vector<8x128xf32>
    %cst_40 = arith.constant 9.99999997E-7 : f32
    %93 = vector.broadcast %cst_40 : f32 to vector<8x1xf32>
    %94 = arith.addf %90, %93 : vector<8x1xf32>
    %95 = math.rsqrt %94 : vector<8x1xf32>
    %96 = vector.broadcast %95 : vector<8x1xf32> to vector<8x128xf32>
    %97 = arith.mulf %92, %96 : vector<8x128xf32>
    %98 = vector.broadcast %78 : vector<1x128xf32> to vector<8x128xf32>
    %99 = arith.mulf %97, %98 : vector<8x128xf32>
    %100 = vector.broadcast %79 : vector<1x128xf32> to vector<8x128xf32>
    %101 = arith.addf %99, %100 : vector<8x128xf32>
    %c1_41 = arith.constant 1 : index
    %c0_42 = arith.constant 0 : index
    %c0_43 = arith.constant 0 : index
    %102 = vector.load %arg4[%c1_41, %c0_42, %c0_43] : memref<3x128x256xbf16, #tpu.memory_space<vmem>>, vector<1x128x256xbf16>
    %103 = vector.shape_cast %102 : vector<1x128x256xbf16> to vector<128x256xbf16>
    %104 = arith.truncf %101 : vector<8x128xf32> to vector<8x128xbf16>
    %cst_44 = arith.constant dense<0.000000e+00> : vector<8x256xf32>
    %105 = tpu.matmul %104, %103, %cst_44 {dimension_numbers = #tpu.dot_dimension_numbers<[1], [0], [0], [1], [0, 0, 1, 1], [], []>} : vector<8x128xbf16>, vector<128x256xbf16>, vector<8x256xf32> -> vector<8x256xf32>
    %106 = vector.extract_strided_slice %105 {offsets = [0, 0], sizes = [8, 128], strides = [1, 1]} : vector<8x256xf32> to vector<8x128xf32>
    %c8 = arith.constant 8 : index
    %c0_45 = arith.constant 0 : index
    %107 = vector.load %arg6[%c8, %c0_45] : memref<24x128xf32, #tpu.memory_space<vmem>>, vector<1x128xf32>
    %108 = vector.broadcast %107 : vector<1x128xf32> to vector<8x128xf32>
    %109 = arith.addf %106, %108 : vector<8x128xf32>
    %110 = vector.extract_strided_slice %105 {offsets = [0, 128], sizes = [8, 128], strides = [1, 1]} : vector<8x256xf32> to vector<8x128xf32>
    %c9 = arith.constant 9 : index
    %c0_46 = arith.constant 0 : index
    %111 = vector.load %arg6[%c9, %c0_46] : memref<24x128xf32, #tpu.memory_space<vmem>>, vector<1x128xf32>
    %112 = vector.broadcast %111 : vector<1x128xf32> to vector<8x128xf32>
    %113 = arith.addf %110, %112 : vector<8x128xf32>
    %114 = arith.negf %113 : vector<8x128xf32>
    %115 = math.exp %114 : vector<8x128xf32>
    %cst_47 = arith.constant 1.000000e+00 : f32
    %116 = vector.broadcast %cst_47 : f32 to vector<8x128xf32>
    %117 = arith.addf %116, %115 : vector<8x128xf32>
    %118 = arith.divf %116, %117 : vector<8x128xf32>
    %119 = arith.mulf %113, %118 : vector<8x128xf32>
    %c2_48 = arith.constant 2 : index
    %c0_49 = arith.constant 0 : index
    %c0_50 = arith.constant 0 : index
    %120 = vector.load %arg3[%c2_48, %c0_49, %c0_50] : memref<7x128x128xbf16, #tpu.memory_space<vmem>>, vector<1x128x128xbf16>
    %121 = vector.shape_cast %120 : vector<1x128x128xbf16> to vector<128x128xbf16>
    %122 = arith.truncf %119 : vector<8x128xf32> to vector<8x128xbf16>
    %cst_51 = arith.constant dense<0.000000e+00> : vector<8x128xf32>
    %123 = tpu.matmul %122, %121, %cst_51 {dimension_numbers = #tpu.dot_dimension_numbers<[1], [0], [0], [1], [0, 0, 1, 1], [], []>} : vector<8x128xbf16>, vector<128x128xbf16>, vector<8x128xf32> -> vector<8x128xf32>
    %c10 = arith.constant 10 : index
    %c0_52 = arith.constant 0 : index
    %124 = vector.load %arg6[%c10, %c0_52] : memref<24x128xf32, #tpu.memory_space<vmem>>, vector<1x128xf32>
    %125 = vector.broadcast %124 : vector<1x128xf32> to vector<8x128xf32>
    %126 = arith.addf %123, %125 : vector<8x128xf32>
    %127 = arith.negf %126 : vector<8x128xf32>
    %128 = math.exp %127 : vector<8x128xf32>
    %cst_53 = arith.constant 1.000000e+00 : f32
    %129 = vector.broadcast %cst_53 : f32 to vector<8x128xf32>
    %130 = arith.addf %129, %128 : vector<8x128xf32>
    %131 = arith.divf %129, %130 : vector<8x128xf32>
    %132 = arith.mulf %126, %131 : vector<8x128xf32>
    %c3_54 = arith.constant 3 : index
    %c0_55 = arith.constant 0 : index
    %c0_56 = arith.constant 0 : index
    %133 = vector.load %arg3[%c3_54, %c0_55, %c0_56] : memref<7x128x128xbf16, #tpu.memory_space<vmem>>, vector<1x128x128xbf16>
    %134 = vector.shape_cast %133 : vector<1x128x128xbf16> to vector<128x128xbf16>
    %135 = arith.truncf %132 : vector<8x128xf32> to vector<8x128xbf16>
    %cst_57 = arith.constant dense<0.000000e+00> : vector<8x128xf32>
    %136 = tpu.matmul %135, %134, %cst_57 {dimension_numbers = #tpu.dot_dimension_numbers<[1], [0], [0], [1], [0, 0, 1, 1], [], []>} : vector<8x128xbf16>, vector<128x128xbf16>, vector<8x128xf32> -> vector<8x128xf32>
    %c11 = arith.constant 11 : index
    %c0_58 = arith.constant 0 : index
    %137 = vector.load %arg6[%c11, %c0_58] : memref<24x128xf32, #tpu.memory_space<vmem>>, vector<1x128xf32>
    %138 = vector.broadcast %137 : vector<1x128xf32> to vector<8x128xf32>
    %139 = arith.addf %136, %138 : vector<8x128xf32>
    %140 = arith.negf %139 : vector<8x128xf32>
    %141 = math.exp %140 : vector<8x128xf32>
    %cst_59 = arith.constant 1.000000e+00 : f32
    %142 = vector.broadcast %cst_59 : f32 to vector<8x128xf32>
    %143 = arith.addf %142, %141 : vector<8x128xf32>
    %144 = arith.divf %142, %143 : vector<8x128xf32>
    %145 = arith.mulf %139, %144 : vector<8x128xf32>
    %c12 = arith.constant 12 : index
    %c0_60 = arith.constant 0 : index
    %146 = vector.load %arg6[%c12, %c0_60] : memref<24x128xf32, #tpu.memory_space<vmem>>, vector<1x128xf32>
    %147 = vector.broadcast %146 : vector<1x128xf32> to vector<8x128xf32>
    %148 = arith.mulf %145, %147 : vector<8x128xf32>
    %149 = arith.addf %109, %148 : vector<8x128xf32>
    %c13 = arith.constant 13 : index
    %c0_61 = arith.constant 0 : index
    %150 = vector.load %arg6[%c13, %c0_61] : memref<24x128xf32, #tpu.memory_space<vmem>>, vector<1x128xf32>
    %c14 = arith.constant 14 : index
    %c0_62 = arith.constant 0 : index
    %151 = vector.load %arg6[%c14, %c0_62] : memref<24x128xf32, #tpu.memory_space<vmem>>, vector<1x128xf32>
    %cst_63 = arith.constant dense<0.000000e+00> : vector<8xf32>
    %152 = vector.multi_reduction <add>, %149, %cst_63 [1] : vector<8x128xf32> to vector<8xf32>
    %153 = vector.shape_cast %152 : vector<8xf32> to vector<8x1xf32>
    %cst_64 = arith.constant 3.125000e-02 : f32
    %154 = vector.broadcast %cst_64 : f32 to vector<8x1xf32>
    %155 = arith.mulf %153, %154 : vector<8x1xf32>
    %156 = arith.mulf %149, %149 : vector<8x128xf32>
    %cst_65 = arith.constant dense<0.000000e+00> : vector<8xf32>
    %157 = vector.multi_reduction <add>, %156, %cst_65 [1] : vector<8x128xf32> to vector<8xf32>
    %158 = vector.shape_cast %157 : vector<8xf32> to vector<8x1xf32>
    %cst_66 = arith.constant 3.125000e-02 : f32
    %159 = vector.broadcast %cst_66 : f32 to vector<8x1xf32>
    %160 = arith.mulf %158, %159 : vector<8x1xf32>
    %161 = arith.mulf %155, %155 : vector<8x1xf32>
    %162 = arith.subf %160, %161 : vector<8x1xf32>
    %163 = vector.broadcast %155 : vector<8x1xf32> to vector<8x128xf32>
    %164 = arith.subf %149, %163 : vector<8x128xf32>
    %cst_67 = arith.constant 9.99999997E-7 : f32
    %165 = vector.broadcast %cst_67 : f32 to vector<8x1xf32>
    %166 = arith.addf %162, %165 : vector<8x1xf32>
    %167 = math.rsqrt %166 : vector<8x1xf32>
    %168 = vector.broadcast %167 : vector<8x1xf32> to vector<8x128xf32>
    %169 = arith.mulf %164, %168 : vector<8x128xf32>
    %170 = vector.broadcast %150 : vector<1x128xf32> to vector<8x128xf32>
    %171 = arith.mulf %169, %170 : vector<8x128xf32>
    %172 = vector.broadcast %151 : vector<1x128xf32> to vector<8x128xf32>
    %173 = arith.addf %171, %172 : vector<8x128xf32>
    %c2_68 = arith.constant 2 : index
    %c0_69 = arith.constant 0 : index
    %c0_70 = arith.constant 0 : index
    %174 = vector.load %arg4[%c2_68, %c0_69, %c0_70] : memref<3x128x256xbf16, #tpu.memory_space<vmem>>, vector<1x128x256xbf16>
    %175 = vector.shape_cast %174 : vector<1x128x256xbf16> to vector<128x256xbf16>
    %176 = arith.truncf %173 : vector<8x128xf32> to vector<8x128xbf16>
    %cst_71 = arith.constant dense<0.000000e+00> : vector<8x256xf32>
    %177 = tpu.matmul %176, %175, %cst_71 {dimension_numbers = #tpu.dot_dimension_numbers<[1], [0], [0], [1], [0, 0, 1, 1], [], []>} : vector<8x128xbf16>, vector<128x256xbf16>, vector<8x256xf32> -> vector<8x256xf32>
    %178 = vector.extract_strided_slice %177 {offsets = [0, 0], sizes = [8, 128], strides = [1, 1]} : vector<8x256xf32> to vector<8x128xf32>
    %c15 = arith.constant 15 : index
    %c0_72 = arith.constant 0 : index
    %179 = vector.load %arg6[%c15, %c0_72] : memref<24x128xf32, #tpu.memory_space<vmem>>, vector<1x128xf32>
    %180 = vector.broadcast %179 : vector<1x128xf32> to vector<8x128xf32>
    %181 = arith.addf %178, %180 : vector<8x128xf32>
    %182 = vector.extract_strided_slice %177 {offsets = [0, 128], sizes = [8, 128], strides = [1, 1]} : vector<8x256xf32> to vector<8x128xf32>
    %c16 = arith.constant 16 : index
    %c0_73 = arith.constant 0 : index
    %183 = vector.load %arg6[%c16, %c0_73] : memref<24x128xf32, #tpu.memory_space<vmem>>, vector<1x128xf32>
    %184 = vector.broadcast %183 : vector<1x128xf32> to vector<8x128xf32>
    %185 = arith.addf %182, %184 : vector<8x128xf32>
    %186 = arith.negf %185 : vector<8x128xf32>
    %187 = math.exp %186 : vector<8x128xf32>
    %cst_74 = arith.constant 1.000000e+00 : f32
    %188 = vector.broadcast %cst_74 : f32 to vector<8x128xf32>
    %189 = arith.addf %188, %187 : vector<8x128xf32>
    %190 = arith.divf %188, %189 : vector<8x128xf32>
    %191 = arith.mulf %185, %190 : vector<8x128xf32>
    %c4_75 = arith.constant 4 : index
    %c0_76 = arith.constant 0 : index
    %c0_77 = arith.constant 0 : index
    %192 = vector.load %arg3[%c4_75, %c0_76, %c0_77] : memref<7x128x128xbf16, #tpu.memory_space<vmem>>, vector<1x128x128xbf16>
    %193 = vector.shape_cast %192 : vector<1x128x128xbf16> to vector<128x128xbf16>
    %194 = arith.truncf %191 : vector<8x128xf32> to vector<8x128xbf16>
    %cst_78 = arith.constant dense<0.000000e+00> : vector<8x128xf32>
    %195 = tpu.matmul %194, %193, %cst_78 {dimension_numbers = #tpu.dot_dimension_numbers<[1], [0], [0], [1], [0, 0, 1, 1], [], []>} : vector<8x128xbf16>, vector<128x128xbf16>, vector<8x128xf32> -> vector<8x128xf32>
    %c17 = arith.constant 17 : index
    %c0_79 = arith.constant 0 : index
    %196 = vector.load %arg6[%c17, %c0_79] : memref<24x128xf32, #tpu.memory_space<vmem>>, vector<1x128xf32>
    %197 = vector.broadcast %196 : vector<1x128xf32> to vector<8x128xf32>
    %198 = arith.addf %195, %197 : vector<8x128xf32>
    %199 = arith.negf %198 : vector<8x128xf32>
    %200 = math.exp %199 : vector<8x128xf32>
    %cst_80 = arith.constant 1.000000e+00 : f32
    %201 = vector.broadcast %cst_80 : f32 to vector<8x128xf32>
    %202 = arith.addf %201, %200 : vector<8x128xf32>
    %203 = arith.divf %201, %202 : vector<8x128xf32>
    %204 = arith.mulf %198, %203 : vector<8x128xf32>
    %c5_81 = arith.constant 5 : index
    %c0_82 = arith.constant 0 : index
    %c0_83 = arith.constant 0 : index
    %205 = vector.load %arg3[%c5_81, %c0_82, %c0_83] : memref<7x128x128xbf16, #tpu.memory_space<vmem>>, vector<1x128x128xbf16>
    %206 = vector.shape_cast %205 : vector<1x128x128xbf16> to vector<128x128xbf16>
    %207 = arith.truncf %204 : vector<8x128xf32> to vector<8x128xbf16>
    %cst_84 = arith.constant dense<0.000000e+00> : vector<8x128xf32>
    %208 = tpu.matmul %207, %206, %cst_84 {dimension_numbers = #tpu.dot_dimension_numbers<[1], [0], [0], [1], [0, 0, 1, 1], [], []>} : vector<8x128xbf16>, vector<128x128xbf16>, vector<8x128xf32> -> vector<8x128xf32>
    %c18 = arith.constant 18 : index
    %c0_85 = arith.constant 0 : index
    %209 = vector.load %arg6[%c18, %c0_85] : memref<24x128xf32, #tpu.memory_space<vmem>>, vector<1x128xf32>
    %210 = vector.broadcast %209 : vector<1x128xf32> to vector<8x128xf32>
    %211 = arith.addf %208, %210 : vector<8x128xf32>
    %212 = arith.negf %211 : vector<8x128xf32>
    %213 = math.exp %212 : vector<8x128xf32>
    %cst_86 = arith.constant 1.000000e+00 : f32
    %214 = vector.broadcast %cst_86 : f32 to vector<8x128xf32>
    %215 = arith.addf %214, %213 : vector<8x128xf32>
    %216 = arith.divf %214, %215 : vector<8x128xf32>
    %217 = arith.mulf %211, %216 : vector<8x128xf32>
    %c19 = arith.constant 19 : index
    %c0_87 = arith.constant 0 : index
    %218 = vector.load %arg6[%c19, %c0_87] : memref<24x128xf32, #tpu.memory_space<vmem>>, vector<1x128xf32>
    %219 = vector.broadcast %218 : vector<1x128xf32> to vector<8x128xf32>
    %220 = arith.mulf %217, %219 : vector<8x128xf32>
    %221 = arith.addf %181, %220 : vector<8x128xf32>
    %c20 = arith.constant 20 : index
    %c0_88 = arith.constant 0 : index
    %222 = vector.load %arg6[%c20, %c0_88] : memref<24x128xf32, #tpu.memory_space<vmem>>, vector<1x128xf32>
    %c21 = arith.constant 21 : index
    %c0_89 = arith.constant 0 : index
    %223 = vector.load %arg6[%c21, %c0_89] : memref<24x128xf32, #tpu.memory_space<vmem>>, vector<1x128xf32>
    %cst_90 = arith.constant dense<0.000000e+00> : vector<8xf32>
    %224 = vector.multi_reduction <add>, %221, %cst_90 [1] : vector<8x128xf32> to vector<8xf32>
    %225 = vector.shape_cast %224 : vector<8xf32> to vector<8x1xf32>
    %cst_91 = arith.constant 3.125000e-02 : f32
    %226 = vector.broadcast %cst_91 : f32 to vector<8x1xf32>
    %227 = arith.mulf %225, %226 : vector<8x1xf32>
    %228 = arith.mulf %221, %221 : vector<8x128xf32>
    %cst_92 = arith.constant dense<0.000000e+00> : vector<8xf32>
    %229 = vector.multi_reduction <add>, %228, %cst_92 [1] : vector<8x128xf32> to vector<8xf32>
    %230 = vector.shape_cast %229 : vector<8xf32> to vector<8x1xf32>
    %cst_93 = arith.constant 3.125000e-02 : f32
    %231 = vector.broadcast %cst_93 : f32 to vector<8x1xf32>
    %232 = arith.mulf %230, %231 : vector<8x1xf32>
    %233 = arith.mulf %227, %227 : vector<8x1xf32>
    %234 = arith.subf %232, %233 : vector<8x1xf32>
    %235 = vector.broadcast %227 : vector<8x1xf32> to vector<8x128xf32>
    %236 = arith.subf %221, %235 : vector<8x128xf32>
    %cst_94 = arith.constant 9.99999997E-7 : f32
    %237 = vector.broadcast %cst_94 : f32 to vector<8x1xf32>
    %238 = arith.addf %234, %237 : vector<8x1xf32>
    %239 = math.rsqrt %238 : vector<8x1xf32>
    %240 = vector.broadcast %239 : vector<8x1xf32> to vector<8x128xf32>
    %241 = arith.mulf %236, %240 : vector<8x128xf32>
    %242 = vector.broadcast %222 : vector<1x128xf32> to vector<8x128xf32>
    %243 = arith.mulf %241, %242 : vector<8x128xf32>
    %244 = vector.broadcast %223 : vector<1x128xf32> to vector<8x128xf32>
    %245 = arith.addf %243, %244 : vector<8x128xf32>
    %c6_95 = arith.constant 6 : index
    %c0_96 = arith.constant 0 : index
    %c0_97 = arith.constant 0 : index
    %246 = vector.load %arg3[%c6_95, %c0_96, %c0_97] : memref<7x128x128xbf16, #tpu.memory_space<vmem>>, vector<1x128x128xbf16>
    %247 = vector.shape_cast %246 : vector<1x128x128xbf16> to vector<128x128xbf16>
    %248 = arith.truncf %245 : vector<8x128xf32> to vector<8x128xbf16>
    %cst_98 = arith.constant dense<0.000000e+00> : vector<8x128xf32>
    %249 = tpu.matmul %248, %247, %cst_98 {dimension_numbers = #tpu.dot_dimension_numbers<[1], [0], [0], [1], [0, 0, 1, 1], [], []>} : vector<8x128xbf16>, vector<128x128xbf16>, vector<8x128xf32> -> vector<8x128xf32>
    %c22 = arith.constant 22 : index
    %c0_99 = arith.constant 0 : index
    %250 = vector.load %arg6[%c22, %c0_99] : memref<24x128xf32, #tpu.memory_space<vmem>>, vector<1x128xf32>
    %251 = vector.broadcast %250 : vector<1x128xf32> to vector<8x128xf32>
    %252 = arith.addf %249, %251 : vector<8x128xf32>
    %c0_100 = arith.constant 0 : index
    %c0_101 = arith.constant 0 : index
    %253 = vector.load %arg7[%c0_100, %c0_101] : memref<8x128xf32, #tpu.memory_space<vmem>>, vector<8x128xf32>
    tpu.vector_store %arg7[%c0_100, %c0_101], %252 {strides = array<i32>} : memref<8x128xf32, #tpu.memory_space<vmem>>, vector<8x128xf32>,
    return
  }
  func.func @transform_0(%arg0: i32) -> (i32, i32) {
    %c0_i32 = arith.constant 0 : i32
    %c0_i32_0 = arith.constant 0 : i32
    return %arg0, %c0_i32 : i32, i32
  }
  func.func @transform_1(%arg0: i32) -> (i32, i32) {
    %c0_i32 = arith.constant 0 : i32
    %c0_i32_0 = arith.constant 0 : i32
    return %arg0, %c0_i32 : i32, i32
  }
  func.func @transform_2(%arg0: i32) -> (i32, i32, i32) {
    %c0_i32 = arith.constant 0 : i32
    %c0_i32_0 = arith.constant 0 : i32
    %c0_i32_1 = arith.constant 0 : i32
    %c0_i32_2 = arith.constant 0 : i32
    return %c0_i32, %c0_i32_0, %c0_i32_1 : i32, i32, i32
  }
  func.func @transform_3(%arg0: i32) -> (i32, i32, i32) {
    %c0_i32 = arith.constant 0 : i32
    %c0_i32_0 = arith.constant 0 : i32
    %c0_i32_1 = arith.constant 0 : i32
    %c0_i32_2 = arith.constant 0 : i32
    return %c0_i32, %c0_i32_0, %c0_i32_1 : i32, i32, i32
  }
  func.func @transform_4(%arg0: i32) -> (i32, i32) {
    %c0_i32 = arith.constant 0 : i32
    %c0_i32_0 = arith.constant 0 : i32
    %c0_i32_1 = arith.constant 0 : i32
    return %c0_i32, %c0_i32_0 : i32, i32
  }
  func.func @transform_5(%arg0: i32) -> (i32, i32) {
    %c0_i32 = arith.constant 0 : i32
    %c0_i32_0 = arith.constant 0 : i32
    %c0_i32_1 = arith.constant 0 : i32
    return %c0_i32, %c0_i32_0 : i32, i32
  }
  func.func @transform_6(%arg0: i32) -> (i32, i32) {
    %c0_i32 = arith.constant 0 : i32
    %c0_i32_0 = arith.constant 0 : i32
    return %arg0, %c0_i32 : i32, i32
  }
}

module attributes {stable_mosaic.version = 11 : i64} {
  func.func @kernel(%arg0: i32, %arg1: memref<8x128xf32, #tpu.memory_space<vmem>>, %arg2: memref<8x256xf32, #tpu.memory_space<vmem>>, %arg3: memref<7x128x128xbf16, #tpu.memory_space<vmem>>, %arg4: memref<3x128x256xbf16, #tpu.memory_space<vmem>>, %arg5: memref<256x256xbf16, #tpu.memory_space<vmem>>, %arg6: memref<24x128xf32, #tpu.memory_space<vmem>>, %arg7: memref<8x128xf32, #tpu.memory_space<vmem>>) attributes {dimension_semantics = [#tpu.dimension_semantics<parallel>], iteration_bounds = array<i64: 2>, scalar_prefetch = 0 : i64, scratch_operands = 0 : i64, tpu.core_type = #tpu.core_type<tc>, window_params = [{transform_indices = @transform_0, window_bounds = array<i64: 8, 128>}, {transform_indices = @transform_1, window_bounds = array<i64: 8, 256>}, {pipeline_mode = #tpu.pipeline_mode<synchronous>, transform_indices = @transform_2, window_bounds = array<i64: 7, 128, 128>}, {pipeline_mode = #tpu.pipeline_mode<synchronous>, transform_indices = @transform_3, window_bounds = array<i64: 3, 128, 256>}, {pipeline_mode = #tpu.pipeline_mode<synchronous>, transform_indices = @transform_4, window_bounds = array<i64: 256, 256>}, {pipeline_mode = #tpu.pipeline_mode<synchronous>, transform_indices = @transform_5, window_bounds = array<i64: 24, 128>}, {transform_indices = @transform_6, window_bounds = array<i64: 8, 128>}]} {
    %c0 = arith.constant 0 : index
    %c0_0 = arith.constant 0 : index
    %0 = vector.load %arg2[%c0, %c0_0] : memref<8x256xf32, #tpu.memory_space<vmem>>, vector<8x256xf32>
    %c0_1 = arith.constant 0 : index
    %c0_2 = arith.constant 0 : index
    %1 = vector.load %arg5[%c0_1, %c0_2] : memref<256x256xbf16, #tpu.memory_space<vmem>>, vector<256x256xbf16>
    %2 = arith.truncf %0 : vector<8x256xf32> to vector<8x256xbf16>
    %cst = arith.constant dense<0.000000e+00> : vector<8x256xf32>
    %3 = tpu.matmul %2, %1, %cst {dimension_numbers = #tpu.dot_dimension_numbers<[1], [0], [0], [1], [0, 0, 1, 1], [], []>} : vector<8x256xbf16>, vector<256x256xbf16>, vector<8x256xf32> -> vector<8x256xf32>
    %4 = vector.extract_strided_slice %3 {offsets = [0, 0], sizes = [8, 128], strides = [1, 1]} : vector<8x256xf32> to vector<8x128xf32>
    %c0_3 = arith.constant 0 : index
    %c0_4 = arith.constant 0 : index
    %5 = vector.load %arg6[%c0_3, %c0_4] : memref<24x128xf32, #tpu.memory_space<vmem>>, vector<1x128xf32>
    %6 = vector.broadcast %5 : vector<1x128xf32> to vector<8x128xf32>
    %7 = arith.addf %4, %6 : vector<8x128xf32>
    %8 = arith.negf %7 : vector<8x128xf32>
    %9 = math.exp %8 : vector<8x128xf32>
    %cst_5 = arith.constant 1.000000e+00 : f32
    %10 = vector.broadcast %cst_5 : f32 to vector<8x128xf32>
    %11 = arith.addf %10, %9 : vector<8x128xf32>
    %12 = arith.divf %10, %11 : vector<8x128xf32>
    %13 = arith.mulf %7, %12 : vector<8x128xf32>
    %c0_6 = arith.constant 0 : index
    %c0_7 = arith.constant 0 : index
    %c0_8 = arith.constant 0 : index
    %14 = vector.load %arg3[%c0_6, %c0_7, %c0_8] : memref<7x128x128xbf16, #tpu.memory_space<vmem>>, vector<1x128x128xbf16>
    %15 = vector.shape_cast %14 : vector<1x128x128xbf16> to vector<128x128xbf16>
    %16 = arith.truncf %13 : vector<8x128xf32> to vector<8x128xbf16>
    %cst_9 = arith.constant dense<0.000000e+00> : vector<8x128xf32>
    %17 = tpu.matmul %16, %15, %cst_9 {dimension_numbers = #tpu.dot_dimension_numbers<[1], [0], [0], [1], [0, 0, 1, 1], [], []>} : vector<8x128xbf16>, vector<128x128xbf16>, vector<8x128xf32> -> vector<8x128xf32>
    %c1 = arith.constant 1 : index
    %c0_10 = arith.constant 0 : index
    %18 = vector.load %arg6[%c1, %c0_10] : memref<24x128xf32, #tpu.memory_space<vmem>>, vector<1x128xf32>
    %19 = vector.broadcast %18 : vector<1x128xf32> to vector<8x128xf32>
    %20 = arith.addf %17, %19 : vector<8x128xf32>
    %21 = arith.negf %20 : vector<8x128xf32>
    %22 = math.exp %21 : vector<8x128xf32>
    %cst_11 = arith.constant 1.000000e+00 : f32
    %23 = vector.broadcast %cst_11 : f32 to vector<8x128xf32>
    %24 = arith.addf %23, %22 : vector<8x128xf32>
    %25 = arith.divf %23, %24 : vector<8x128xf32>
    %26 = arith.mulf %20, %25 : vector<8x128xf32>
    %27 = vector.extract_strided_slice %3 {offsets = [0, 128], sizes = [8, 128], strides = [1, 1]} : vector<8x256xf32> to vector<8x128xf32>
    %c2 = arith.constant 2 : index
    %c0_12 = arith.constant 0 : index
    %28 = vector.load %arg6[%c2, %c0_12] : memref<24x128xf32, #tpu.memory_space<vmem>>, vector<1x128xf32>
    %29 = vector.broadcast %28 : vector<1x128xf32> to vector<8x128xf32>
    %30 = arith.addf %27, %29 : vector<8x128xf32>
    %31 = arith.addf %30, %26 : vector<8x128xf32>
    %c0_13 = arith.constant 0 : index
    %c0_14 = arith.constant 0 : index
    %c0_15 = arith.constant 0 : index
    %32 = vector.load %arg4[%c0_13, %c0_14, %c0_15] : memref<3x128x256xbf16, #tpu.memory_space<vmem>>, vector<1x128x256xbf16>
    %33 = vector.shape_cast %32 : vector<1x128x256xbf16> to vector<128x256xbf16>
    %34 = arith.truncf %31 : vector<8x128xf32> to vector<8x128xbf16>
    %cst_16 = arith.constant dense<0.000000e+00> : vector<8x256xf32>
    %35 = tpu.matmul %34, %33, %cst_16 {dimension_numbers = #tpu.dot_dimension_numbers<[1], [0], [0], [1], [0, 0, 1, 1], [], []>} : vector<8x128xbf16>, vector<128x256xbf16>, vector<8x256xf32> -> vector<8x256xf32>
    %36 = vector.extract_strided_slice %35 {offsets = [0, 0], sizes = [8, 128], strides = [1, 1]} : vector<8x256xf32> to vector<8x128xf32>
    %c3 = arith.constant 3 : index
    %c0_17 = arith.constant 0 : index
    %37 = vector.load %arg6[%c3, %c0_17] : memref<24x128xf32, #tpu.memory_space<vmem>>, vector<1x128xf32>
    %38 = vector.broadcast %37 : vector<1x128xf32> to vector<8x128xf32>
    %39 = arith.addf %36, %38 : vector<8x128xf32>
    %cst_18 = arith.constant 5.000000e-01 : f32
    %40 = vector.broadcast %cst_18 : f32 to vector<8x128xf32>
    %41 = arith.mulf %40, %39 : vector<8x128xf32>
    %cst_19 = arith.constant 0.707106769 : f32
    %42 = vector.broadcast %cst_19 : f32 to vector<8x128xf32>
    %43 = arith.mulf %39, %42 : vector<8x128xf32>
    %44 = math.erf %43 : vector<8x128xf32>
    %cst_20 = arith.constant 1.000000e+00 : f32
    %45 = vector.broadcast %cst_20 : f32 to vector<8x128xf32>
    %46 = arith.addf %45, %44 : vector<8x128xf32>
    %47 = arith.mulf %41, %46 : vector<8x128xf32>
    %48 = vector.extract_strided_slice %35 {offsets = [0, 128], sizes = [8, 128], strides = [1, 1]} : vector<8x256xf32> to vector<8x128xf32>
    %c4 = arith.constant 4 : index
    %c0_21 = arith.constant 0 : index
    %49 = vector.load %arg6[%c4, %c0_21] : memref<24x128xf32, #tpu.memory_space<vmem>>, vector<1x128xf32>
    %50 = vector.broadcast %49 : vector<1x128xf32> to vector<8x128xf32>
    %51 = arith.addf %48, %50 : vector<8x128xf32>
    %cst_22 = arith.constant 5.000000e-01 : f32
    %52 = vector.broadcast %cst_22 : f32 to vector<8x128xf32>
    %53 = arith.mulf %52, %51 : vector<8x128xf32>
    %cst_23 = arith.constant 0.707106769 : f32
    %54 = vector.broadcast %cst_23 : f32 to vector<8x128xf32>
    %55 = arith.mulf %51, %54 : vector<8x128xf32>
    %56 = math.erf %55 : vector<8x128xf32>
    %cst_24 = arith.constant 1.000000e+00 : f32
    %57 = vector.broadcast %cst_24 : f32 to vector<8x128xf32>
    %58 = arith.addf %57, %56 : vector<8x128xf32>
    %59 = arith.mulf %53, %58 : vector<8x128xf32>
    %c0_25 = arith.constant 0 : index
    %c0_26 = arith.constant 0 : index
    %60 = vector.load %arg1[%c0_25, %c0_26] : memref<8x128xf32, #tpu.memory_space<vmem>>, vector<8x128xf32>
    %c1_27 = arith.constant 1 : index
    %c0_28 = arith.constant 0 : index
    %c0_29 = arith.constant 0 : index
    %61 = vector.load %arg3[%c1_27, %c0_28, %c0_29] : memref<7x128x128xbf16, #tpu.memory_space<vmem>>, vector<1x128x128xbf16>
    %62 = vector.shape_cast %61 : vector<1x128x128xbf16> to vector<128x128xbf16>
    %63 = arith.truncf %60 : vector<8x128xf32> to vector<8x128xbf16>
    %cst_30 = arith.constant dense<0.000000e+00> : vector<8x128xf32>
    %64 = tpu.matmul %63, %62, %cst_30 {dimension_numbers = #tpu.dot_dimension_numbers<[1], [0], [0], [1], [0, 0, 1, 1], [], []>} : vector<8x128xbf16>, vector<128x128xbf16>, vector<8x128xf32> -> vector<8x128xf32>
    %c5 = arith.constant 5 : index
    %c0_31 = arith.constant 0 : index
    %65 = vector.load %arg6[%c5, %c0_31] : memref<24x128xf32, #tpu.memory_space<vmem>>, vector<1x128xf32>
    %66 = vector.broadcast %65 : vector<1x128xf32> to vector<8x128xf32>
    %67 = arith.addf %64, %66 : vector<8x128xf32>
    %68 = arith.negf %67 : vector<8x128xf32>
    %69 = math.exp %68 : vector<8x128xf32>
    %cst_32 = arith.constant 1.000000e+00 : f32
    %70 = vector.broadcast %cst_32 : f32 to vector<8x128xf32>
    %71 = arith.addf %70, %69 : vector<8x128xf32>
    %72 = arith.divf %70, %71 : vector<8x128xf32>
    %73 = arith.mulf %67, %72 : vector<8x128xf32>
    %cst_33 = arith.constant 1.000000e+00 : f32
    %74 = vector.broadcast %cst_33 : f32 to vector<8x128xf32>
    %75 = arith.addf %74, %47 : vector<8x128xf32>
    %76 = arith.mulf %73, %75 : vector<8x128xf32>
    %77 = arith.addf %76, %59 : vector<8x128xf32>
    %c6 = arith.constant 6 : index
    %c0_34 = arith.constant 0 : index
    %78 = vector.load %arg6[%c6, %c0_34] : memref<24x128xf32, #tpu.memory_space<vmem>>, vector<1x128xf32>
    %c7 = arith.constant 7 : index
    %c0_35 = arith.constant 0 : index
    %79 = vector.load %arg6[%c7, %c0_35] : memref<24x128xf32, #tpu.memory_space<vmem>>, vector<1x128xf32>
    %cst_36 = arith.constant dense<0.000000e+00> : vector<8xf32>
    %80 = vector.multi_reduction <add>, %77, %cst_36 [1] : vector<8x128xf32> to vector<8xf32>
    %81 = vector.shape_cast %80 : vector<8xf32> to vector<8x1xf32>
    %cst_37 = arith.constant 3.125000e-02 : f32
    %82 = vector.broadcast %cst_37 : f32 to vector<8x1xf32>
    %83 = arith.mulf %81, %82 : vector<8x1xf32>
    %84 = arith.mulf %77, %77 : vector<8x128xf32>
    %cst_38 = arith.constant dense<0.000000e+00> : vector<8xf32>
    %85 = vector.multi_reduction <add>, %84, %cst_38 [1] : vector<8x128xf32> to vector<8xf32>
    %86 = vector.shape_cast %85 : vector<8xf32> to vector<8x1xf32>
    %cst_39 = arith.constant 3.125000e-02 : f32
    %87 = vector.broadcast %cst_39 : f32 to vector<8x1xf32>
    %88 = arith.mulf %86, %87 : vector<8x1xf32>
    %89 = arith.mulf %83, %83 : vector<8x1xf32>
    %90 = arith.subf %88, %89 : vector<8x1xf32>
    %91 = vector.broadcast %83 : vector<8x1xf32> to vector<8x128xf32>
    %92 = arith.subf %77, %91 : vector<8x128xf32>
    %cst_40 = arith.constant 9.99999997E-7 : f32
    %93 = vector.broadcast %cst_40 : f32 to vector<8x1xf32>
    %94 = arith.addf %90, %93 : vector<8x1xf32>
    %95 = math.rsqrt %94 : vector<8x1xf32>
    %96 = vector.broadcast %95 : vector<8x1xf32> to vector<8x128xf32>
    %97 = arith.mulf %92, %96 : vector<8x128xf32>
    %98 = vector.broadcast %78 : vector<1x128xf32> to vector<8x128xf32>
    %99 = arith.mulf %97, %98 : vector<8x128xf32>
    %100 = vector.broadcast %79 : vector<1x128xf32> to vector<8x128xf32>
    %101 = arith.addf %99, %100 : vector<8x128xf32>
    %c1_41 = arith.constant 1 : index
    %c0_42 = arith.constant 0 : index
    %c0_43 = arith.constant 0 : index
    %102 = vector.load %arg4[%c1_41, %c0_42, %c0_43] : memref<3x128x256xbf16, #tpu.memory_space<vmem>>, vector<1x128x256xbf16>
    %103 = vector.shape_cast %102 : vector<1x128x256xbf16> to vector<128x256xbf16>
    %104 = arith.truncf %101 : vector<8x128xf32> to vector<8x128xbf16>
    %cst_44 = arith.constant dense<0.000000e+00> : vector<8x256xf32>
    %105 = tpu.matmul %104, %103, %cst_44 {dimension_numbers = #tpu.dot_dimension_numbers<[1], [0], [0], [1], [0, 0, 1, 1], [], []>} : vector<8x128xbf16>, vector<128x256xbf16>, vector<8x256xf32> -> vector<8x256xf32>
    %106 = vector.extract_strided_slice %105 {offsets = [0, 0], sizes = [8, 128], strides = [1, 1]} : vector<8x256xf32> to vector<8x128xf32>
    %c8 = arith.constant 8 : index
    %c0_45 = arith.constant 0 : index
    %107 = vector.load %arg6[%c8, %c0_45] : memref<24x128xf32, #tpu.memory_space<vmem>>, vector<1x128xf32>
    %108 = vector.broadcast %107 : vector<1x128xf32> to vector<8x128xf32>
    %109 = arith.addf %106, %108 : vector<8x128xf32>
    %110 = vector.extract_strided_slice %105 {offsets = [0, 128], sizes = [8, 128], strides = [1, 1]} : vector<8x256xf32> to vector<8x128xf32>
    %c9 = arith.constant 9 : index
    %c0_46 = arith.constant 0 : index
    %111 = vector.load %arg6[%c9, %c0_46] : memref<24x128xf32, #tpu.memory_space<vmem>>, vector<1x128xf32>
    %112 = vector.broadcast %111 : vector<1x128xf32> to vector<8x128xf32>
    %113 = arith.addf %110, %112 : vector<8x128xf32>
    %114 = arith.negf %113 : vector<8x128xf32>
    %115 = math.exp %114 : vector<8x128xf32>
    %cst_47 = arith.constant 1.000000e+00 : f32
    %116 = vector.broadcast %cst_47 : f32 to vector<8x128xf32>
    %117 = arith.addf %116, %115 : vector<8x128xf32>
    %118 = arith.divf %116, %117 : vector<8x128xf32>
    %119 = arith.mulf %113, %118 : vector<8x128xf32>
    %c2_48 = arith.constant 2 : index
    %c0_49 = arith.constant 0 : index
    %c0_50 = arith.constant 0 : index
    %120 = vector.load %arg3[%c2_48, %c0_49, %c0_50] : memref<7x128x128xbf16, #tpu.memory_space<vmem>>, vector<1x128x128xbf16>
    %121 = vector.shape_cast %120 : vector<1x128x128xbf16> to vector<128x128xbf16>
    %122 = arith.truncf %119 : vector<8x128xf32> to vector<8x128xbf16>
    %cst_51 = arith.constant dense<0.000000e+00> : vector<8x128xf32>
    %123 = tpu.matmul %122, %121, %cst_51 {dimension_numbers = #tpu.dot_dimension_numbers<[1], [0], [0], [1], [0, 0, 1, 1], [], []>} : vector<8x128xbf16>, vector<128x128xbf16>, vector<8x128xf32> -> vector<8x128xf32>
    %c10 = arith.constant 10 : index
    %c0_52 = arith.constant 0 : index
    %124 = vector.load %arg6[%c10, %c0_52] : memref<24x128xf32, #tpu.memory_space<vmem>>, vector<1x128xf32>
    %125 = vector.broadcast %124 : vector<1x128xf32> to vector<8x128xf32>
    %126 = arith.addf %123, %125 : vector<8x128xf32>
    %127 = arith.negf %126 : vector<8x128xf32>
    %128 = math.exp %127 : vector<8x128xf32>
    %cst_53 = arith.constant 1.000000e+00 : f32
    %129 = vector.broadcast %cst_53 : f32 to vector<8x128xf32>
    %130 = arith.addf %129, %128 : vector<8x128xf32>
    %131 = arith.divf %129, %130 : vector<8x128xf32>
    %132 = arith.mulf %126, %131 : vector<8x128xf32>
    %c3_54 = arith.constant 3 : index
    %c0_55 = arith.constant 0 : index
    %c0_56 = arith.constant 0 : index
    %133 = vector.load %arg3[%c3_54, %c0_55, %c0_56] : memref<7x128x128xbf16, #tpu.memory_space<vmem>>, vector<1x128x128xbf16>
    %134 = vector.shape_cast %133 : vector<1x128x128xbf16> to vector<128x128xbf16>
    %135 = arith.truncf %132 : vector<8x128xf32> to vector<8x128xbf16>
    %cst_57 = arith.constant dense<0.000000e+00> : vector<8x128xf32>
    %136 = tpu.matmul %135, %134, %cst_57 {dimension_numbers = #tpu.dot_dimension_numbers<[1], [0], [0], [1], [0, 0, 1, 1], [], []>} : vector<8x128xbf16>, vector<128x128xbf16>, vector<8x128xf32> -> vector<8x128xf32>
    %c11 = arith.constant 11 : index
    %c0_58 = arith.constant 0 : index
    %137 = vector.load %arg6[%c11, %c0_58] : memref<24x128xf32, #tpu.memory_space<vmem>>, vector<1x128xf32>
    %138 = vector.broadcast %137 : vector<1x128xf32> to vector<8x128xf32>
    %139 = arith.addf %136, %138 : vector<8x128xf32>
    %140 = arith.negf %139 : vector<8x128xf32>
    %141 = math.exp %140 : vector<8x128xf32>
    %cst_59 = arith.constant 1.000000e+00 : f32
    %142 = vector.broadcast %cst_59 : f32 to vector<8x128xf32>
    %143 = arith.addf %142, %141 : vector<8x128xf32>
    %144 = arith.divf %142, %143 : vector<8x128xf32>
    %145 = arith.mulf %139, %144 : vector<8x128xf32>
    %c12 = arith.constant 12 : index
    %c0_60 = arith.constant 0 : index
    %146 = vector.load %arg6[%c12, %c0_60] : memref<24x128xf32, #tpu.memory_space<vmem>>, vector<1x128xf32>
    %147 = vector.broadcast %146 : vector<1x128xf32> to vector<8x128xf32>
    %148 = arith.mulf %145, %147 : vector<8x128xf32>
    %149 = arith.addf %109, %148 : vector<8x128xf32>
    %c13 = arith.constant 13 : index
    %c0_61 = arith.constant 0 : index
    %150 = vector.load %arg6[%c13, %c0_61] : memref<24x128xf32, #tpu.memory_space<vmem>>, vector<1x128xf32>
    %c14 = arith.constant 14 : index
    %c0_62 = arith.constant 0 : index
    %151 = vector.load %arg6[%c14, %c0_62] : memref<24x128xf32, #tpu.memory_space<vmem>>, vector<1x128xf32>
    %cst_63 = arith.constant dense<0.000000e+00> : vector<8xf32>
    %152 = vector.multi_reduction <add>, %149, %cst_63 [1] : vector<8x128xf32> to vector<8xf32>
    %153 = vector.shape_cast %152 : vector<8xf32> to vector<8x1xf32>
    %cst_64 = arith.constant 3.125000e-02 : f32
    %154 = vector.broadcast %cst_64 : f32 to vector<8x1xf32>
    %155 = arith.mulf %153, %154 : vector<8x1xf32>
    %156 = arith.mulf %149, %149 : vector<8x128xf32>
    %cst_65 = arith.constant dense<0.000000e+00> : vector<8xf32>
    %157 = vector.multi_reduction <add>, %156, %cst_65 [1] : vector<8x128xf32> to vector<8xf32>
    %158 = vector.shape_cast %157 : vector<8xf32> to vector<8x1xf32>
    %cst_66 = arith.constant 3.125000e-02 : f32
    %159 = vector.broadcast %cst_66 : f32 to vector<8x1xf32>
    %160 = arith.mulf %158, %159 : vector<8x1xf32>
    %161 = arith.mulf %155, %155 : vector<8x1xf32>
    %162 = arith.subf %160, %161 : vector<8x1xf32>
    %163 = vector.broadcast %155 : vector<8x1xf32> to vector<8x128xf32>
    %164 = arith.subf %149, %163 : vector<8x128xf32>
    %cst_67 = arith.constant 9.99999997E-7 : f32
    %165 = vector.broadcast %cst_67 : f32 to vector<8x1xf32>
    %166 = arith.addf %162, %165 : vector<8x1xf32>
    %167 = math.rsqrt %166 : vector<8x1xf32>
    %168 = vector.broadcast %167 : vector<8x1xf32> to vector<8x128xf32>
    %169 = arith.mulf %164, %168 : vector<8x128xf32>
    %170 = vector.broadcast %150 : vector<1x128xf32> to vector<8x128xf32>
    %171 = arith.mulf %169, %170 : vector<8x128xf32>
    %172 = vector.broadcast %151 : vector<1x128xf32> to vector<8x128xf32>
    %173 = arith.addf %171, %172 : vector<8x128xf32>
    %c2_68 = arith.constant 2 : index
    %c0_69 = arith.constant 0 : index
    %c0_70 = arith.constant 0 : index
    %174 = vector.load %arg4[%c2_68, %c0_69, %c0_70] : memref<3x128x256xbf16, #tpu.memory_space<vmem>>, vector<1x128x256xbf16>
    %175 = vector.shape_cast %174 : vector<1x128x256xbf16> to vector<128x256xbf16>
    %176 = arith.truncf %173 : vector<8x128xf32> to vector<8x128xbf16>
    %cst_71 = arith.constant dense<0.000000e+00> : vector<8x256xf32>
    %177 = tpu.matmul %176, %175, %cst_71 {dimension_numbers = #tpu.dot_dimension_numbers<[1], [0], [0], [1], [0, 0, 1, 1], [], []>} : vector<8x128xbf16>, vector<128x256xbf16>, vector<8x256xf32> -> vector<8x256xf32>
    %178 = vector.extract_strided_slice %177 {offsets = [0, 0], sizes = [8, 128], strides = [1, 1]} : vector<8x256xf32> to vector<8x128xf32>
    %c15 = arith.constant 15 : index
    %c0_72 = arith.constant 0 : index
    %179 = vector.load %arg6[%c15, %c0_72] : memref<24x128xf32, #tpu.memory_space<vmem>>, vector<1x128xf32>
    %180 = vector.broadcast %179 : vector<1x128xf32> to vector<8x128xf32>
    %181 = arith.addf %178, %180 : vector<8x128xf32>
    %182 = vector.extract_strided_slice %177 {offsets = [0, 128], sizes = [8, 128], strides = [1, 1]} : vector<8x256xf32> to vector<8x128xf32>
    %c16 = arith.constant 16 : index
    %c0_73 = arith.constant 0 : index
    %183 = vector.load %arg6[%c16, %c0_73] : memref<24x128xf32, #tpu.memory_space<vmem>>, vector<1x128xf32>
    %184 = vector.broadcast %183 : vector<1x128xf32> to vector<8x128xf32>
    %185 = arith.addf %182, %184 : vector<8x128xf32>
    %186 = arith.negf %185 : vector<8x128xf32>
    %187 = math.exp %186 : vector<8x128xf32>
    %cst_74 = arith.constant 1.000000e+00 : f32
    %188 = vector.broadcast %cst_74 : f32 to vector<8x128xf32>
    %189 = arith.addf %188, %187 : vector<8x128xf32>
    %190 = arith.divf %188, %189 : vector<8x128xf32>
    %191 = arith.mulf %185, %190 : vector<8x128xf32>
    %c4_75 = arith.constant 4 : index
    %c0_76 = arith.constant 0 : index
    %c0_77 = arith.constant 0 : index
    %192 = vector.load %arg3[%c4_75, %c0_76, %c0_77] : memref<7x128x128xbf16, #tpu.memory_space<vmem>>, vector<1x128x128xbf16>
    %193 = vector.shape_cast %192 : vector<1x128x128xbf16> to vector<128x128xbf16>
    %194 = arith.truncf %191 : vector<8x128xf32> to vector<8x128xbf16>
    %cst_78 = arith.constant dense<0.000000e+00> : vector<8x128xf32>
    %195 = tpu.matmul %194, %193, %cst_78 {dimension_numbers = #tpu.dot_dimension_numbers<[1], [0], [0], [1], [0, 0, 1, 1], [], []>} : vector<8x128xbf16>, vector<128x128xbf16>, vector<8x128xf32> -> vector<8x128xf32>
    %c17 = arith.constant 17 : index
    %c0_79 = arith.constant 0 : index
    %196 = vector.load %arg6[%c17, %c0_79] : memref<24x128xf32, #tpu.memory_space<vmem>>, vector<1x128xf32>
    %197 = vector.broadcast %196 : vector<1x128xf32> to vector<8x128xf32>
    %198 = arith.addf %195, %197 : vector<8x128xf32>
    %199 = arith.negf %198 : vector<8x128xf32>
    %200 = math.exp %199 : vector<8x128xf32>
    %cst_80 = arith.constant 1.000000e+00 : f32
    %201 = vector.broadcast %cst_80 : f32 to vector<8x128xf32>
    %202 = arith.addf %201, %200 : vector<8x128xf32>
    %203 = arith.divf %201, %202 : vector<8x128xf32>
    %204 = arith.mulf %198, %203 : vector<8x128xf32>
    %c5_81 = arith.constant 5 : index
    %c0_82 = arith.constant 0 : index
    %c0_83 = arith.constant 0 : index
    %205 = vector.load %arg3[%c5_81, %c0_82, %c0_83] : memref<7x128x128xbf16, #tpu.memory_space<vmem>>, vector<1x128x128xbf16>
    %206 = vector.shape_cast %205 : vector<1x128x128xbf16> to vector<128x128xbf16>
    %207 = arith.truncf %204 : vector<8x128xf32> to vector<8x128xbf16>
    %cst_84 = arith.constant dense<0.000000e+00> : vector<8x128xf32>
    %208 = tpu.matmul %207, %206, %cst_84 {dimension_numbers = #tpu.dot_dimension_numbers<[1], [0], [0], [1], [0, 0, 1, 1], [], []>} : vector<8x128xbf16>, vector<128x128xbf16>, vector<8x128xf32> -> vector<8x128xf32>
    %c18 = arith.constant 18 : index
    %c0_85 = arith.constant 0 : index
    %209 = vector.load %arg6[%c18, %c0_85] : memref<24x128xf32, #tpu.memory_space<vmem>>, vector<1x128xf32>
    %210 = vector.broadcast %209 : vector<1x128xf32> to vector<8x128xf32>
    %211 = arith.addf %208, %210 : vector<8x128xf32>
    %212 = arith.negf %211 : vector<8x128xf32>
    %213 = math.exp %212 : vector<8x128xf32>
    %cst_86 = arith.constant 1.000000e+00 : f32
    %214 = vector.broadcast %cst_86 : f32 to vector<8x128xf32>
    %215 = arith.addf %214, %213 : vector<8x128xf32>
    %216 = arith.divf %214, %215 : vector<8x128xf32>
    %217 = arith.mulf %211, %216 : vector<8x128xf32>
    %c19 = arith.constant 19 : index
    %c0_87 = arith.constant 0 : index
    %218 = vector.load %arg6[%c19, %c0_87] : memref<24x128xf32, #tpu.memory_space<vmem>>, vector<1x128xf32>
    %219 = vector.broadcast %218 : vector<1x128xf32> to vector<8x128xf32>
    %220 = arith.mulf %217, %219 : vector<8x128xf32>
    %221 = arith.addf %181, %220 : vector<8x128xf32>
    %c20 = arith.constant 20 : index
    %c0_88 = arith.constant 0 : index
    %222 = vector.load %arg6[%c20, %c0_88] : memref<24x128xf32, #tpu.memory_space<vmem>>, vector<1x128xf32>
    %c21 = arith.constant 21 : index
    %c0_89 = arith.constant 0 : index
    %223 = vector.load %arg6[%c21, %c0_89] : memref<24x128xf32, #tpu.memory_space<vmem>>, vector<1x128xf32>
    %cst_90 = arith.constant dense<0.000000e+00> : vector<8xf32>
    %224 = vector.multi_reduction <add>, %221, %cst_90 [1] : vector<8x128xf32> to vector<8xf32>
    %225 = vector.shape_cast %224 : vector<8xf32> to vector<8x1xf32>
    %cst_91 = arith.constant 3.125000e-02 : f32
    %226 = vector.broadcast %cst_91 : f32 to vector<8x1xf32>
    %227 = arith.mulf %225, %226 : vector<8x1xf32>
    %228 = arith.mulf %221, %221 : vector<8x128xf32>
    %cst_92 = arith.constant dense<0.000000e+00> : vector<8xf32>
    %229 = vector.multi_reduction <add>, %228, %cst_92 [1] : vector<8x128xf32> to vector<8xf32>
    %230 = vector.shape_cast %229 : vector<8xf32> to vector<8x1xf32>
    %cst_93 = arith.constant 3.125000e-02 : f32
    %231 = vector.broadcast %cst_93 : f32 to vector<8x1xf32>
    %232 = arith.mulf %230, %231 : vector<8x1xf32>
    %233 = arith.mulf %227, %227 : vector<8x1xf32>
    %234 = arith.subf %232, %233 : vector<8x1xf32>
    %235 = vector.broadcast %227 : vector<8x1xf32> to vector<8x128xf32>
    %236 = arith.subf %221, %235 : vector<8x128xf32>
    %cst_94 = arith.constant 9.99999997E-7 : f32
    %237 = vector.broadcast %cst_94 : f32 to vector<8x1xf32>
    %238 = arith.addf %234, %237 : vector<8x1xf32>
    %239 = math.rsqrt %238 : vector<8x1xf32>
    %240 = vector.broadcast %239 : vector<8x1xf32> to vector<8x128xf32>
    %241 = arith.mulf %236, %240 : vector<8x128xf32>
    %242 = vector.broadcast %222 : vector<1x128xf32> to vector<8x128xf32>
    %243 = arith.mulf %241, %242 : vector<8x128xf32>
    %244 = vector.broadcast %223 : vector<1x128xf32> to vector<8x128xf32>
    %245 = arith.addf %243, %244 : vector<8x128xf32>
    %c6_95 = arith.constant 6 : index
    %c0_96 = arith.constant 0 : index
    %c0_97 = arith.constant 0 : index
    %246 = vector.load %arg3[%c6_95, %c0_96, %c0_97] : memref<7x128x128xbf16, #tpu.memory_space<vmem>>, vector<1x128x128xbf16>
    %247 = vector.shape_cast %246 : vector<1x128x128xbf16> to vector<128x128xbf16>
    %248 = arith.truncf %245 : vector<8x128xf32> to vector<8x128xbf16>
    %cst_98 = arith.constant dense<0.000000e+00> : vector<8x128xf32>
    %249 = tpu.matmul %248, %247, %cst_98 {dimension_numbers = #tpu.dot_dimension_numbers<[1], [0], [0], [1], [0, 0, 1, 1], [], []>} : vector<8x128xbf16>, vector<128x128xbf16>, vector<8x128xf32> -> vector<8x128xf32>
    %c22 = arith.constant 22 : index
    %c0_99 = arith.constant 0 : index
    %250 = vector.load %arg6[%c22, %c0_99] : memref<24x128xf32, #tpu.memory_space<vmem>>, vector<1x128xf32>
    %251 = vector.broadcast %250 : vector<1x128xf32> to vector<8x128xf32>
    %252 = arith.addf %249, %251 : vector<8x128xf32>
    %c0_100 = arith.constant 0 : index
    %c0_101 = arith.constant 0 : index
    %253 = vector.load %arg7[%c0_100, %c0_101] : memref<8x128xf32, #tpu.memory_space<vmem>>, vector<8x128xf32>
    tpu.vector_store %arg7[%c0_100, %c0_101], %252 {strides = array<i32>} : memref<8x128xf32, #tpu.memory_space<vmem>>, vector<8x128xf32>,
    return
  }
  func.func @transform_0(%arg0: i32) -> (i32, i32) {
    %c0_i32 = arith.constant 0 : i32
    %c0_i32_0 = arith.constant 0 : i32
    return %arg0, %c0_i32 : i32, i32
  }
  func.func @transform_1(%arg0: i32) -> (i32, i32) {
    %c0_i32 = arith.constant 0 : i32
    %c0_i32_0 = arith.constant 0 : i32
    return %arg0, %c0_i32 : i32, i32
  }
  func.func @transform_2(%arg0: i32) -> (i32, i32, i32) {
    %c0_i32 = arith.constant 0 : i32
    %c0_i32_0 = arith.constant 0 : i32
    %c0_i32_1 = arith.constant 0 : i32
    %c0_i32_2 = arith.constant 0 : i32
    return %c0_i32, %c0_i32_0, %c0_i32_1 : i32, i32, i32
  }
  func.func @transform_3(%arg0: i32) -> (i32, i32, i32) {
    %c0_i32 = arith.constant 0 : i32
    %c0_i32_0 = arith.constant 0 : i32
    %c0_i32_1 = arith.constant 0 : i32
    %c0_i32_2 = arith.constant 0 : i32
    return %c0_i32, %c0_i32_0, %c0_i32_1 : i32, i32, i32
  }
  func.func @transform_4(%arg0: i32) -> (i32, i32) {
    %c0_i32 = arith.constant 0 : i32
    %c0_i32_0 = arith.constant 0 : i32
    %c0_i32_1 = arith.constant 0 : i32
    return %c0_i32, %c0_i32_0 : i32, i32
  }
  func.func @transform_5(%arg0: i32) -> (i32, i32) {
    %c0_i32 = arith.constant 0 : i32
    %c0_i32_0 = arith.constant 0 : i32
    %c0_i32_1 = arith.constant 0 : i32
    return %c0_i32, %c0_i32_0 : i32, i32
  }
  func.func @transform_6(%arg0: i32) -> (i32, i32) {
    %c0_i32 = arith.constant 0 : i32
    %c0_i32_0 = arith.constant 0 : i32
    return %arg0, %c0_i32 : i32, i32
  }
}

</mosaic_0001>

<llo_original>
// kernel: _forward.1
$region0: #{_forward.1}
  #allocation0 [shape = 'u32[]', space=smem, size = 0x4, offset = 0x4, fixed_abs, tag = 'smem constant byte address 0x4 - core index']
  #allocation1 [shape = 'u32[144,128]{1,0:T(1,128)}', space=vmem, size = 0x12000, scoped, tag = 'internal scratch']
  %s0 = inlined_call_operand.vmem [shape: f32[16,128], index: 0, kind: input, shape index: {}]
  %s1 = inlined_call_operand.vmem [shape: f32[16,256], index: 1, kind: input, shape index: {}]
  %s2 = inlined_call_operand.hbm [shape: bf16[7,128,128], index: 2, kind: input, shape index: {}]
  %s3 = inlined_call_operand.hbm [shape: bf16[3,128,256], index: 3, kind: input, shape index: {}]
  %s4 = inlined_call_operand.vmem [shape: bf16[256,256], index: 4, kind: input, shape index: {}]
  %s5 = inlined_call_operand.vmem [shape: f32[24,128], index: 5, kind: input, shape index: {}]
  %s6 = inlined_call_operand.vmem [shape: f32[16,128], index: 6, kind: output, shape index: {}]
  %s7 = sld [smem:[#allocation0]]
  $region65: #{_forward.1} parent=0
    _
  %s9 = ssub.s32 1, %s7
  %s10 = scalar_select 0, %s9, %s7
  $region1: #{_forward.1} parent=0
    #allocation2 [shape = 'u8[229376]{0}', space=vmem, size = 0x38000, scoped, tag = 'input window, operand 2, single buffered']
    #allocation3 [shape = 's32[2]{0}', space=sflag, size = 0x8, scoped, tag = 'scoped memory for _forward.1']
    #allocation4 [shape = 'u8[196608]{0}', space=vmem, size = 0x30000, scoped, tag = 'input window, operand 3, single buffered']
    #allocation5 [shape = 's32[1]{0}', space=sflag, size = 0x4, scoped, tag = 'scoped memory for _forward.1']
    %11 = vsyncpa [#allocation3], 0
    %12 = vsyncpa [#allocation5], 0
    loop: start=0, step=1, limit=4
    $region2: #{_forward.1} parent=1 // loop_pre_header
      _
    $region3: #{_forward.1} parent=1 // loop_header
      %s14 = sphi 0, %s18
      %p15 = scmp.ge.s32.totalorder %s14, 4
      %s24 = sphi 0, %s26
      %s27 = sphi 0, %s24
      %s28 = sphi 0, %s27
      %s44 = sphi 0, %s28
      %s50 = sphi 0, %s52
      %s53 = sphi 0, %s50
      %s54 = sphi 0, %s53
      %s70 = sphi 0, %s54
      %s74 = sphi 0, %s74
      %s76 = sphi 0, %s74
      %s77 = sphi 0, %s76
      %s91 = sphi 0, %s77
      %s95 = sphi 0, %s95
      %s97 = sphi 0, %s95
      %s98 = sphi 0, %s97
      %s112 = sphi 0, %s98
      %s116 = sphi 0, %s116
      %s118 = sphi 0, %s116
      %s119 = sphi 0, %s118
      %s133 = sphi 0, %s119
      %s137 = sphi 0, %s137
      %s139 = sphi 0, %s137
      %s140 = sphi 0, %s139
      %s154 = sphi 0, %s140
      %s160 = sphi 0, %s162
      %s163 = sphi 0, %s160
      %s164 = sphi 0, %s163
      %s180 = sphi 0, %s164
    $region4: #{_forward.1} parent=1 // loop_header_branch
      %17 = sbr.rel (%p15) target = $region8
    $region5: #{_forward.1} parent=1 // loop_body
      %s19 = ssub.s32 %s14, 1
      %s20 = ssub.s32 %s14, 2
      %s21 = sadd.s32 %s14, 1
      %s22 = ssub.s32 %s14, %s21
      %p23 = scmp.eq.s32.totalorder %s22, 0
      %s25 = sadd.s32 %s24, 1
      %s26 = scalar_select %p23, %s24, %s25
      %p29 = pneg %p23
      %p30 = scmp.eq.s32.totalorder %s14, 1
      %p31 = por %p29, %p30
      %p32 = scmp.ne.s32.totalorder %s24, %s27
      %p33 = scmp.eq.s32.totalorder %s14, 0
      %p34 = por %p32, %p33
      %p35 = scmp.ne.s32.totalorder %s24, %s27
      %p36 = scmp.eq.s32.totalorder %s19, 1
      %p37 = por %p35, %p36
      %p38 = scmp.ne.s32.totalorder %s27, %s28
      %p39 = scmp.eq.s32.totalorder %s19, 0
      %p40 = por %p38, %p39
      %p41 = scmp.ne.s32.totalorder %s27, %s28
      %p42 = scmp.eq.s32.totalorder %s20, 1
      %p43 = por %p41, %p42
      %p45 = scmp.ne.s32.totalorder %s28, %s44
      %p46 = scmp.eq.s32.totalorder %s20, 0
      %p47 = por %p45, %p46
      %s48 = ssub.s32 %s14, %s21
      %p49 = scmp.eq.s32.totalorder %s48, 0
      %s51 = sadd.s32 %s50, 1
      %s52 = scalar_select %p49, %s50, %s51
      %p55 = pneg %p49
      %p56 = scmp.eq.s32.totalorder %s14, 1
      %p57 = por %p55, %p56
      %p58 = scmp.ne.s32.totalorder %s50, %s53
      %p59 = scmp.eq.s32.totalorder %s14, 0
      %p60 = por %p58, %p59
      %p61 = scmp.ne.s32.totalorder %s50, %s53
      %p62 = scmp.eq.s32.totalorder %s19, 1
      %p63 = por %p61, %p62
      %p64 = scmp.ne.s32.totalorder %s53, %s54
      %p65 = scmp.eq.s32.totalorder %s19, 0
      %p66 = por %p64, %p65
      %p67 = scmp.ne.s32.totalorder %s53, %s54
      %p68 = scmp.eq.s32.totalorder %s20, 1
      %p69 = por %p67, %p68
      %p71 = scmp.ne.s32.totalorder %s54, %s70
      %p72 = scmp.eq.s32.totalorder %s20, 0
      %p73 = por %p71, %p72
      %s75 = sadd.s32 %s74, 1
      %p78 = scmp.eq.s32.totalorder %s14, 1
      %p79 = scmp.ne.s32.totalorder %s74, %s76
      %p80 = scmp.eq.s32.totalorder %s14, 0
      %p81 = por %p79, %p80
      %p82 = scmp.ne.s32.totalorder %s74, %s76
      %p83 = scmp.eq.s32.totalorder %s19, 1
      %p84 = por %p82, %p83
      %p85 = scmp.ne.s32.totalorder %s76, %s77
      %p86 = scmp.eq.s32.totalorder %s19, 0
      %p87 = por %p85, %p86
      %p88 = scmp.ne.s32.totalorder %s76, %s77
      %p89 = scmp.eq.s32.totalorder %s20, 1
      %p90 = por %p88, %p89
      %p92 = scmp.ne.s32.totalorder %s77, %s91
      %p93 = scmp.eq.s32.totalorder %s20, 0
      %p94 = por %p92, %p93
      %s96 = sadd.s32 %s95, 1
      %p99 = scmp.eq.s32.totalorder %s14, 1
      %p100 = scmp.ne.s32.totalorder %s95, %s97
      %p101 = scmp.eq.s32.totalorder %s14, 0
      %p102 = por %p100, %p101
      %p103 = scmp.ne.s32.totalorder %s95, %s97
      %p104 = scmp.eq.s32.totalorder %s19, 1
      %p105 = por %p103, %p104
      %p106 = scmp.ne.s32.totalorder %s97, %s98
      %p107 = scmp.eq.s32.totalorder %s19, 0
      %p108 = por %p106, %p107
      %p109 = scmp.ne.s32.totalorder %s97, %s98
      %p110 = scmp.eq.s32.totalorder %s20, 1
      %p111 = por %p109, %p110
      %p113 = scmp.ne.s32.totalorder %s98, %s112
      %p114 = scmp.eq.s32.totalorder %s20, 0
      %p115 = por %p113, %p114
      %s117 = sadd.s32 %s116, 1
      %p120 = scmp.eq.s32.totalorder %s14, 1
      %p121 = scmp.ne.s32.totalorder %s116, %s118
      %p122 = scmp.eq.s32.totalorder %s14, 0
      %p123 = por %p121, %p122
      %p124 = scmp.ne.s32.totalorder %s116, %s118
      %p125 = scmp.eq.s32.totalorder %s19, 1
      %p126 = por %p124, %p125
      %p127 = scmp.ne.s32.totalorder %s118, %s119
      %p128 = scmp.eq.s32.totalorder %s19, 0
      %p129 = por %p127, %p128
      %p130 = scmp.ne.s32.totalorder %s118, %s119
      %p131 = scmp.eq.s32.totalorder %s20, 1
      %p132 = por %p130, %p131
      %p134 = scmp.ne.s32.totalorder %s119, %s133
      %p135 = scmp.eq.s32.totalorder %s20, 0
      %p136 = por %p134, %p135
      %s138 = sadd.s32 %s137, 1
      %p141 = scmp.eq.s32.totalorder %s14, 1
      %p142 = scmp.ne.s32.totalorder %s137, %s139
      %p143 = scmp.eq.s32.totalorder %s14, 0
      %p144 = por %p142, %p143
      %p145 = scmp.ne.s32.totalorder %s137, %s139
      %p146 = scmp.eq.s32.totalorder %s19, 1
      %p147 = por %p145, %p146
      %p148 = scmp.ne.s32.totalorder %s139, %s140
      %p149 = scmp.eq.s32.totalorder %s19, 0
      %p150 = por %p148, %p149
      %p151 = scmp.ne.s32.totalorder %s139, %s140
      %p152 = scmp.eq.s32.totalorder %s20, 1
      %p153 = por %p151, %p152
      %p155 = scmp.ne.s32.totalorder %s140, %s154
      %p156 = scmp.eq.s32.totalorder %s20, 0
      %p157 = por %p155, %p156
      %s158 = ssub.s32 %s14, %s21
      %p159 = scmp.eq.s32.totalorder %s158, 0
      %s161 = sadd.s32 %s160, 1
      %s162 = scalar_select %p159, %s160, %s161
      %p165 = pneg %p159
      %p166 = scmp.eq.s32.totalorder %s14, 1
      %p167 = por %p165, %p166
      %p168 = scmp.ne.s32.totalorder %s160, %s163
      %p169 = scmp.eq.s32.totalorder %s14, 0
      %p170 = por %p168, %p169
      %p171 = scmp.ne.s32.totalorder %s160, %s163
      %p172 = scmp.eq.s32.totalorder %s19, 1
      %p173 = por %p171, %p172
      %p174 = scmp.ne.s32.totalorder %s163, %s164
      %p175 = scmp.eq.s32.totalorder %s19, 0
      %p176 = por %p174, %p175
      %p177 = scmp.ne.s32.totalorder %s163, %s164
      %p178 = scmp.eq.s32.totalorder %s20, 1
      %p179 = por %p177, %p178
      %p181 = scmp.ne.s32.totalorder %s164, %s180
      %p182 = scmp.eq.s32.totalorder %s20, 0
      %p183 = por %p181, %p182
      %p184 = scmp.le.s32.totalorder 1, %s14
      %p185 = scmp.lt.s32.totalorder %s14, 3
      %p186 = pnand %p184, %p185
      %p187 = pneg %p186
      // Predicated region
      $region9: #{_forward.1} parent=5 // pred_check
        _
      $region10: #{_forward.1} parent=5 // pred_check_branch
        %189 = sbr.rel (%p186) target = $region12
      $region11: #{_forward.1} parent=5 // pred_region
        %s190 = ssub.s32 %s14, 1
        // Predicated region
        $region13: #{_forward.1} parent=11 // pred_check
          %p191 = pneg %p87
        $region14: #{_forward.1} parent=11 // pred_check_branch
          %193 = sbr.rel (%p191) target = $region16
        $region15: #{_forward.1} parent=11 // pred_region
          %s195 = ssub.s32 7168, 7168
          %196 = vsyncadd [#allocation3], %s195
          %s197 = sshll.u32 [#allocation2], 4
          %s198 = int_to_ptr.vmem [resolvable:$true] %s197
          %203 = dma.hbm_to_vmem [thread:$0]  %s2, 7168, %s198, [#allocation3], 64, 64, 4
        $region16: #{_forward.1} parent=11 // pred_fallthru
          _
        // Predicated region
        $region17: #{_forward.1} parent=11 // pred_check
          %p204 = pneg %p108
        $region18: #{_forward.1} parent=11 // pred_check_branch
          %206 = sbr.rel (%p204) target = $region20
        $region19: #{_forward.1} parent=11 // pred_region
          %s208 = ssub.s32 6144, 6144
          %209 = vsyncadd [#allocation5], %s208
          %s210 = sshll.u32 [#allocation4], 4
          %s211 = int_to_ptr.vmem [resolvable:$true] %s210
          %216 = dma.hbm_to_vmem [thread:$0]  %s3, 6144, %s211, [#allocation5], 128, 128, 8
        $region20: #{_forward.1} parent=11 // pred_fallthru
          _
        // Predicated region
        $region21: #{_forward.1} parent=11 // pred_check
          %p217 = pneg %p129
        $region22: #{_forward.1} parent=11 // pred_check_branch
          %219 = sbr.rel (%p217) target = $region24
        $region23: #{_forward.1} parent=11 // pred_region
          _
        $region24: #{_forward.1} parent=11 // pred_fallthru
          _
        // Predicated region
        $region25: #{_forward.1} parent=11 // pred_check
          %p220 = pneg %p150
        $region26: #{_forward.1} parent=11 // pred_check_branch
          %222 = sbr.rel (%p220) target = $region28
        $region27: #{_forward.1} parent=11 // pred_region
          _
        $region28: #{_forward.1} parent=11 // pred_fallthru
          _
      $region12: #{_forward.1} parent=5 // pred_fallthru
        _
      %p223 = scmp.lt.s32.totalorder %s14, 2
      // Predicated region
      $region29: #{_forward.1} parent=5 // pred_check
        %p224 = pneg %p223
      $region30: #{_forward.1} parent=5 // pred_check_branch
        %226 = sbr.rel (%p224) target = $region32
      $region31: #{_forward.1} parent=5 // pred_region
        // Predicated region
        $region33: #{_forward.1} parent=31 // pred_check
          %p227 = pneg %p34
        $region34: #{_forward.1} parent=31 // pred_check_branch
          %229 = sbr.rel (%p227) target = $region36
        $region35: #{_forward.1} parent=31 // pred_region
          %p230 = scmp.lt.s32.totalorder %s14, 1
          %s231 = scalar_select %p230, %s14, 1
          %s232 = smul.addr %s231, 8
          %s233 = scalar_lea.vmem %s0, %s232
        $region36: #{_forward.1} parent=31 // pred_fallthru
          _
        // Predicated region
        $region37: #{_forward.1} parent=31 // pred_check
          %p234 = pneg %p60
        $region38: #{_forward.1} parent=31 // pred_check_branch
          %236 = sbr.rel (%p234) target = $region40
        $region39: #{_forward.1} parent=31 // pred_region
          %p237 = scmp.lt.s32.totalorder %s14, 1
          %s238 = scalar_select %p237, %s14, 1
          %s239 = smul.addr %s238, 2
          %s240 = smul.addr %s239, 8
          %s241 = scalar_lea.vmem %s1, %s240
        $region40: #{_forward.1} parent=31 // pred_fallthru
          _
      $region32: #{_forward.1} parent=5 // pred_fallthru
        _
      %p242 = scmp.le.s32.totalorder 1, %s14
      %p243 = scmp.lt.s32.totalorder %s14, 3
      %p244 = pnand %p242, %p243
      %p245 = pneg %p244
      // Predicated region
      $region41: #{_forward.1} parent=5 // pred_check
        _
      $region42: #{_forward.1} parent=5 // pred_check_branch
        %247 = sbr.rel (%p244) target = $region44
      $region43: #{_forward.1} parent=5 // pred_region
        %s248 = ssub.s32 %s14, 1
        // Predicated region
        $region45: #{_forward.1} parent=43 // pred_check
          %p249 = pneg %p87
        $region46: #{_forward.1} parent=43 // pred_check_branch
          %251 = sbr.rel (%p249) target = $region48
        $region47: #{_forward.1} parent=43 // pred_region
          %252 = dma.done [#allocation3], 7168
        $region48: #{_forward.1} parent=43 // pred_fallthru
          _
        // Predicated region
        $region49: #{_forward.1} parent=43 // pred_check
          %p253 = pneg %p108
        $region50: #{_forward.1} parent=43 // pred_check_branch
          %255 = sbr.rel (%p253) target = $region52
        $region51: #{_forward.1} parent=43 // pred_region
          %256 = dma.done [#allocation5], 6144
        $region52: #{_forward.1} parent=43 // pred_fallthru
          _
        %p257 = scmp.lt.s32.totalorder %s19, 1
        %s258 = scalar_select %p257, %s19, 1
        %s259 = smul.addr %s258, 8
        %s260 = scalar_lea.vmem %s0, %s259
        %p261 = pneg %p40
        %p262 = pneg %p37
        %p263 = scmp.lt.s32.totalorder %s19, 1
        %s264 = scalar_select %p263, %s19, 1
        %s265 = smul.addr %s264, 2
        %s266 = smul.addr %s265, 8
        %s267 = scalar_lea.vmem %s1, %s266
        %p268 = pneg %p66
        %p269 = pneg %p63
        %p270 = pneg %p87
        %p271 = pneg %p84
        %p272 = pneg %p108
        %p273 = pneg %p105
        %p274 = pneg %p129
        %p275 = pneg %p126
        %p276 = pneg %p150
        %p277 = pneg %p147
        %p278 = pneg %p176
        %p279 = pneg %p173
        %p280 = scmp.lt.s32.totalorder %s19, 1
        %s281 = scalar_select %p280, %s19, 1
        %s282 = smul.addr %s281, 8
        %s283 = scalar_lea.vmem %s6, %s282
        %p284 = scmp.lt.s32.totalorder %s19, 1
        %s285 = scalar_select %p284, %s19, 1
        %s286 = smul.addr %s285, 8
        %s287 = scalar_lea.vmem %s0, %s286
        %p288 = scmp.lt.s32.totalorder %s19, 1
        %s289 = scalar_select %p288, %s19, 1
        %s290 = smul.addr %s289, 2
        %s291 = smul.addr %s290, 8
        %s292 = scalar_lea.vmem %s1, %s291
        %p293 = scmp.lt.s32.totalorder %s19, 1
        %s294 = scalar_select %p293, %s19, 1
        %s295 = smul.addr %s294, 8
        %s296 = scalar_lea.vmem %s6, %s295
        %v298 = vld [vmem:[%s292] sm:$0xff]
        %v299 = vld [vmem:[%s292 + $0x8] sm:$0xff]
        %v300 = vld [vmem:[%s4] sm:$0xff]
        %v301 = vld [vmem:[%s4 + $0x8] sm:$0xff]
        %v302 = vld [vmem:[%s4 + $0x10] sm:$0xff]
        %v303 = vld [vmem:[%s4 + $0x18] sm:$0xff]
        %v304 = vld [vmem:[%s4 + $0x20] sm:$0xff]
        %v305 = vld [vmem:[%s4 + $0x28] sm:$0xff]
        %v306 = vld [vmem:[%s4 + $0x30] sm:$0xff]
        %v307 = vld [vmem:[%s4 + $0x38] sm:$0xff]
        %v308 = vld [vmem:[%s4 + $0x40] sm:$0xff]
        %v309 = vld [vmem:[%s4 + $0x48] sm:$0xff]
        %v310 = vld [vmem:[%s4 + $0x50] sm:$0xff]
        %v311 = vld [vmem:[%s4 + $0x58] sm:$0xff]
        %v312 = vld [vmem:[%s4 + $0x60] sm:$0xff]
        %v313 = vld [vmem:[%s4 + $0x68] sm:$0xff]
        %v314 = vld [vmem:[%s4 + $0x70] sm:$0xff]
        %v315 = vld [vmem:[%s4 + $0x78] sm:$0xff]
        %v316 = vld [vmem:[%s4 + $0x80] sm:$0xff]
        %v317 = vld [vmem:[%s4 + $0x88] sm:$0xff]
        %v318 = vld [vmem:[%s4 + $0x90] sm:$0xff]
        %v319 = vld [vmem:[%s4 + $0x98] sm:$0xff]
        %v320 = vld [vmem:[%s4 + $0xa0] sm:$0xff]
        %v321 = vld [vmem:[%s4 + $0xa8] sm:$0xff]
        %v322 = vld [vmem:[%s4 + $0xb0] sm:$0xff]
        %v323 = vld [vmem:[%s4 + $0xb8] sm:$0xff]
        %v324 = vld [vmem:[%s4 + $0xc0] sm:$0xff]
        %v325 = vld [vmem:[%s4 + $0xc8] sm:$0xff]
        %v326 = vld [vmem:[%s4 + $0xd0] sm:$0xff]
        %v327 = vld [vmem:[%s4 + $0xd8] sm:$0xff]
        %v328 = vld [vmem:[%s4 + $0xe0] sm:$0xff]
        %v329 = vld [vmem:[%s4 + $0xe8] sm:$0xff]
        %v330 = vld [vmem:[%s4 + $0xf0] sm:$0xff]
        %v331 = vld [vmem:[%s4 + $0xf8] sm:$0xff]
        %v332 = vpack.c.bf16 %v298, %v298
        %v333 = vpack.c.bf16 %v299, %v299
        %v366 = vunpack.c.l.b16 %v300
        %v367 = vunpack.c.h.b16 %v300
        %v368 = vunpack.c.l.b16 %v301
        %v369 = vunpack.c.h.b16 %v301
        %v370 = vunpack.c.l.b16 %v302
        %v371 = vunpack.c.h.b16 %v302
        %v372 = vunpack.c.l.b16 %v303
        %v373 = vunpack.c.h.b16 %v303
        %v374 = vunpack.c.l.b16 %v304
        %v375 = vunpack.c.h.b16 %v304
        %v376 = vunpack.c.l.b16 %v305
        %v377 = vunpack.c.h.b16 %v305
        %v378 = vunpack.c.l.b16 %v306
        %v379 = vunpack.c.h.b16 %v306
        %v380 = vunpack.c.l.b16 %v307
        %v381 = vunpack.c.h.b16 %v307
        %v382 = vunpack.c.l.b16 %v308
        %v383 = vunpack.c.h.b16 %v308
        %v384 = vunpack.c.l.b16 %v309
        %v385 = vunpack.c.h.b16 %v309
        %v386 = vunpack.c.l.b16 %v310
        %v387 = vunpack.c.h.b16 %v310
        %v388 = vunpack.c.l.b16 %v311
        %v389 = vunpack.c.h.b16 %v311
        %v390 = vunpack.c.l.b16 %v312
        %v391 = vunpack.c.h.b16 %v312
        %v392 = vunpack.c.l.b16 %v313
        %v393 = vunpack.c.h.b16 %v313
        %v394 = vunpack.c.l.b16 %v314
        %v395 = vunpack.c.h.b16 %v314
        %v396 = vunpack.c.l.b16 %v315
        %v397 = vunpack.c.h.b16 %v315
        %v398 = vunpack.c.l.b16 %v316
        %v399 = vunpack.c.h.b16 %v316
        %v400 = vunpack.c.l.b16 %v317
        %v401 = vunpack.c.h.b16 %v317
        %v402 = vunpack.c.l.b16 %v318
        %v403 = vunpack.c.h.b16 %v318
        %v404 = vunpack.c.l.b16 %v319
        %v405 = vunpack.c.h.b16 %v319
        %v406 = vunpack.c.l.b16 %v320
        %v407 = vunpack.c.h.b16 %v320
        %v408 = vunpack.c.l.b16 %v321
        %v409 = vunpack.c.h.b16 %v321
        %v410 = vunpack.c.l.b16 %v322
        %v411 = vunpack.c.h.b16 %v322
        %v412 = vunpack.c.l.b16 %v323
        %v413 = vunpack.c.h.b16 %v323
        %v414 = vunpack.c.l.b16 %v324
        %v415 = vunpack.c.h.b16 %v324
        %v416 = vunpack.c.l.b16 %v325
        %v417 = vunpack.c.h.b16 %v325
        %v418 = vunpack.c.l.b16 %v326
        %v419 = vunpack.c.h.b16 %v326
        %v420 = vunpack.c.l.b16 %v327
        %v421 = vunpack.c.h.b16 %v327
        %v422 = vunpack.c.l.b16 %v328
        %v423 = vunpack.c.h.b16 %v328
        %v424 = vunpack.c.l.b16 %v329
        %v425 = vunpack.c.h.b16 %v329
        %v426 = vunpack.c.l.b16 %v330
        %v427 = vunpack.c.h.b16 %v330
        %v428 = vunpack.c.l.b16 %v331
        %v429 = vunpack.c.h.b16 %v331
        %v430 = vpack.c.b16 %v368, %v366
        %v431 = vpack.c.b16 %v369, %v367
        %v432 = vpack.c.b16 %v372, %v370
        %v433 = vpack.c.b16 %v373, %v371
        %v434 = vpack.c.b16 %v376, %v374
        %v435 = vpack.c.b16 %v377, %v375
        %v436 = vpack.c.b16 %v380, %v378
        %v437 = vpack.c.b16 %v381, %v379
        %v438 = vpack.c.b16 %v384, %v382
        %v439 = vpack.c.b16 %v385, %v383
        %v440 = vpack.c.b16 %v388, %v386
        %v441 = vpack.c.b16 %v389, %v387
        %v442 = vpack.c.b16 %v392, %v390
        %v443 = vpack.c.b16 %v393, %v391
        %v444 = vpack.c.b16 %v396, %v394
        %v445 = vpack.c.b16 %v397, %v395
        %v446 = vpack.c.b16 %v400, %v398
        %v447 = vpack.c.b16 %v401, %v399
        %v448 = vpack.c.b16 %v404, %v402
        %v449 = vpack.c.b16 %v405, %v403
        %v450 = vpack.c.b16 %v408, %v406
        %v451 = vpack.c.b16 %v409, %v407
        %v452 = vpack.c.b16 %v412, %v410
        %v453 = vpack.c.b16 %v413, %v411
        %v454 = vpack.c.b16 %v416, %v414
        %v455 = vpack.c.b16 %v417, %v415
        %v456 = vpack.c.b16 %v420, %v418
        %v457 = vpack.c.b16 %v421, %v419
        %v458 = vpack.c.b16 %v424, %v422
        %v459 = vpack.c.b16 %v425, %v423
        %v460 = vpack.c.b16 %v428, %v426
        %v461 = vpack.c.b16 %v429, %v427
        %494 = vmatprep.subr.bf16.mxu0 %v445
        %495 = vmatpush1.bf16.msra.mxu0 %v444
        %496 = vmatprep.subr.bf16.mxu0 %v443
        %497 = vmatpush1.bf16.msra.mxu0 %v442
        %498 = vmatprep.subr.bf16.mxu0 %v441
        %499 = vmatpush1.bf16.msra.mxu0 %v440
        %500 = vmatprep.subr.bf16.mxu0 %v439
        %501 = vmatpush1.bf16.msra.mxu0 %v438
        %502 = vmatprep.subr.bf16.mxu0 %v437
        %503 = vmatpush1.bf16.msra.mxu0 %v436
        %504 = vmatprep.subr.bf16.mxu0 %v435
        %505 = vmatpush1.bf16.msra.mxu0 %v434
        %506 = vmatprep.subr.bf16.mxu0 %v433
        %507 = vmatpush1.bf16.msra.mxu0 %v432
        %508 = vmatprep.subr.bf16.mxu0 %v431
        %509 = vmatpush1.bf16.msra.mxu0 %v430
        %510 = vmatprep.subr.bf16.mxu0 %v461
        %511 = vmatpush2.bf16.msra.mxu0 %v460
        %512 = vmatprep.subr.bf16.mxu0 %v459
        %513 = vmatpush2.bf16.msra.mxu0 %v458
        %514 = vmatprep.subr.bf16.mxu0 %v457
        %515 = vmatpush2.bf16.msra.mxu0 %v456
        %516 = vmatprep.subr.bf16.mxu0 %v455
        %517 = vmatpush2.bf16.msra.mxu0 %v454
        %518 = vmatprep.subr.bf16.mxu0 %v453
        %519 = vmatpush2.bf16.msra.mxu0 %v452
        %520 = vmatprep.subr.bf16.mxu0 %v451
        %521 = vmatpush2.bf16.msra.mxu0 %v450
        %522 = vmatprep.subr.bf16.mxu0 %v449
        %523 = vmatpush2.bf16.msra.mxu0 %v448
        %524 = vmatprep.subr.bf16.mxu0 %v447
        %525 = vmatpush2.bf16.msra.mxu0 %v446
        %526 = vmatprep.mubr.bf16.mxu0 %v333
        %527 = vmatmul.mubr.bf16.gmra.mxu0 %v332
        %v528 = vpop.f32.mrf.mxu0
        %v529 = vadd.f32 0.0, %v528
        %v530 = vpop.f32.mrf.mxu0
        %v531 = vadd.f32 0.0, %v530
        %v532 = vpop.f32.mrf.mxu0
        %v533 = vpop.f32.mrf.mxu0
        %534 = vdwg.mxu0
        %v535 = vld [vmem:[%s5] sm:$0x1]
        %v536 = vlaneseq
        %v537 = vshrl.u32 %v536, 7
        %v538 = vsub.s32 0, %v537
        %v539 = vrot.slane %v535, %v538
        %v540 = vadd.f32 %v529, %v539
        %v541 = vxor.u32 %v540, 2147483648
        %v542 = vmul.f32 %v541, 1.442695
        %v543 = vpow.pop %v542
        %v544 = vadd.f32 %v543, 1.0
        %v545 = vrcp.pop %v544
        %v546 = vmul.f32 1.0, %v545
        %v547 = vmul.f32 %v540, %v546
        %v548 = vld [vmem:[#allocation2] sm:$0xf]
        %v549 = vld [vmem:[#allocation2 + $0x4] sm:$0xf]
        %v550 = vld [vmem:[#allocation2 + $0x8] sm:$0xf]
        %v551 = vld [vmem:[#allocation2 + $0xc] sm:$0xf]
        %v552 = vld [vmem:[#allocation2 + $0x10] sm:$0xf]
        %v553 = vld [vmem:[#allocation2 + $0x14] sm:$0xf]
        %v554 = vld [vmem:[#allocation2 + $0x18] sm:$0xf]
        %v555 = vld [vmem:[#allocation2 + $0x1c] sm:$0xf]
        %v556 = vld [vmem:[#allocation2 + $0x20] sm:$0xf]
        %v557 = vld [vmem:[#allocation2 + $0x24] sm:$0xf]
        %v558 = vld [vmem:[#allocation2 + $0x28] sm:$0xf]
        %v559 = vld [vmem:[#allocation2 + $0x2c] sm:$0xf]
        %v560 = vld [vmem:[#allocation2 + $0x30] sm:$0xf]
        %v561 = vld [vmem:[#allocation2 + $0x34] sm:$0xf]
        %v562 = vld [vmem:[#allocation2 + $0x38] sm:$0xf]
        %v563 = vld [vmem:[#allocation2 + $0x3c] sm:$0xf]
        %v564 = vpack.c.bf16 %v547, %v547
        %v565 = vld [vmem:[%s5 + $0x1] sm:$0x1]
        %v566 = vlaneseq
        %v567 = vshrl.u32 %v566, 7
        %v568 = vsub.s32 0, %v567
        %v569 = vrot.slane %v565, %v568
        %v586 = vunpack.c.l.b16 %v548
        %v587 = vunpack.c.l.b16 %v549
        %v588 = vunpack.c.l.b16 %v550
        %v589 = vunpack.c.l.b16 %v551
        %v590 = vunpack.c.l.b16 %v552
        %v591 = vunpack.c.l.b16 %v553
        %v592 = vunpack.c.l.b16 %v554
        %v593 = vunpack.c.l.b16 %v555
        %v594 = vunpack.c.l.b16 %v556
        %v595 = vunpack.c.l.b16 %v557
        %v596 = vunpack.c.l.b16 %v558
        %v597 = vunpack.c.l.b16 %v559
        %v598 = vunpack.c.l.b16 %v560
        %v599 = vunpack.c.l.b16 %v561
        %v600 = vunpack.c.l.b16 %v562
        %v601 = vunpack.c.l.b16 %v563
        %v602 = vpack.c.b16 %v587, %v586
        %v603 = vpack.c.b16 %v589, %v588
        %v604 = vpack.c.b16 %v591, %v590
        %v605 = vpack.c.b16 %v593, %v592
        %v606 = vpack.c.b16 %v595, %v594
        %v607 = vpack.c.b16 %v597, %v596
        %v608 = vpack.c.b16 %v599, %v598
        %v609 = vpack.c.b16 %v601, %v600
        %618 = vmatprep.subr.bf16.mxu0 0
        %619 = vmatpush1.bf16.msra.mxu0 %v609
        %620 = vmatprep.subr.bf16.mxu0 0
        %621 = vmatpush1.bf16.msra.mxu0 %v608
        %622 = vmatprep.subr.bf16.mxu0 0
        %623 = vmatpush1.bf16.msra.mxu0 %v607
        %624 = vmatprep.subr.bf16.mxu0 0
        %625 = vmatpush1.bf16.msra.mxu0 %v606
        %626 = vmatprep.subr.bf16.mxu0 0
        %627 = vmatpush1.bf16.msra.mxu0 %v605
        %628 = vmatprep.subr.bf16.mxu0 0
        %629 = vmatpush1.bf16.msra.mxu0 %v604
        %630 = vmatprep.subr.bf16.mxu0 0
        %631 = vmatpush1.bf16.msra.mxu0 %v603
        %632 = vmatprep.subr.bf16.mxu0 0
        %633 = vmatpush1.bf16.msra.mxu0 %v602
        %634 = vmatprep.subr.bf16.mxu0 0
        %635 = vmatpush2.bf16.msra.mxu0 0
        %636 = vmatprep.subr.bf16.mxu0 0
        %637 = vmatpush2.bf16.msra.mxu0 0
        %638 = vmatprep.subr.bf16.mxu0 0
        %639 = vmatpush2.bf16.msra.mxu0 0
        %640 = vmatprep.subr.bf16.mxu0 0
        %641 = vmatpush2.bf16.msra.mxu0 0
        %642 = vmatprep.subr.bf16.mxu0 0
        %643 = vmatpush2.bf16.msra.mxu0 0
        %644 = vmatprep.subr.bf16.mxu0 0
        %645 = vmatpush2.bf16.msra.mxu0 0
        %646 = vmatprep.subr.bf16.mxu0 0
        %647 = vmatpush2.bf16.msra.mxu0 0
        %648 = vmatprep.subr.bf16.mxu0 0
        %649 = vmatpush2.bf16.msra.mxu0 0
        %650 = vmatprep.mubr.bf16.mxu0 0
        %651 = vmatmul.mubr.bf16.gmra.mxu0 %v564
        %v652 = vpop.f32.mrf.mxu0
        %v653 = vadd.f32 %v569, %v652
        %v654 = vpop.f32.mrf.mxu0
        %v655 = vpop.f32.mrf.mxu0
        %v656 = vpop.f32.mrf.mxu0
        %657 = vdwg.mxu0
        %v658 = vxor.u32 %v653, 2147483648
        %v659 = vmul.f32 %v658, 1.442695
        %v660 = vpow.pop %v659
        %v661 = vadd.f32 %v660, 1.0
        %v662 = vrcp.pop %v661
        %v663 = vmul.f32 1.0, %v662
        %v664 = vmul.f32 %v653, %v663
        %v665 = vld [vmem:[%s5 + $0x2] sm:$0x1]
        %v666 = vlaneseq
        %v667 = vshrl.u32 %v666, 7
        %v668 = vsub.s32 0, %v667
        %v669 = vrot.slane %v665, %v668
        %v670 = vadd.f32 %v531, %v669
        %v671 = vadd.f32 %v670, %v664
        %v672 = vld [vmem:[#allocation4] sm:$0xff]
        %v673 = vld [vmem:[#allocation4 + $0x8] sm:$0xff]
        %v674 = vld [vmem:[#allocation4 + $0x10] sm:$0xff]
        %v675 = vld [vmem:[#allocation4 + $0x18] sm:$0xff]
        %v676 = vld [vmem:[#allocation4 + $0x20] sm:$0xff]
        %v677 = vld [vmem:[#allocation4 + $0x28] sm:$0xff]
        %v678 = vld [vmem:[#allocation4 + $0x30] sm:$0xff]
        %v679 = vld [vmem:[#allocation4 + $0x38] sm:$0xff]
        %v680 = vld [vmem:[#allocation4 + $0x40] sm:$0xff]
        %v681 = vld [vmem:[#allocation4 + $0x48] sm:$0xff]
        %v682 = vld [vmem:[#allocation4 + $0x50] sm:$0xff]
        %v683 = vld [vmem:[#allocation4 + $0x58] sm:$0xff]
        %v684 = vld [vmem:[#allocation4 + $0x60] sm:$0xff]
        %v685 = vld [vmem:[#allocation4 + $0x68] sm:$0xff]
        %v686 = vld [vmem:[#allocation4 + $0x70] sm:$0xff]
        %v687 = vld [vmem:[#allocation4 + $0x78] sm:$0xff]
        %v688 = vpack.c.bf16 %v671, %v671
        %v705 = vunpack.c.l.b16 %v672
        %v706 = vunpack.c.h.b16 %v672
        %v707 = vunpack.c.l.b16 %v673
        %v708 = vunpack.c.h.b16 %v673
        %v709 = vunpack.c.l.b16 %v674
        %v710 = vunpack.c.h.b16 %v674
        %v711 = vunpack.c.l.b16 %v675
        %v712 = vunpack.c.h.b16 %v675
        %v713 = vunpack.c.l.b16 %v676
        %v714 = vunpack.c.h.b16 %v676
        %v715 = vunpack.c.l.b16 %v677
        %v716 = vunpack.c.h.b16 %v677
        %v717 = vunpack.c.l.b16 %v678
        %v718 = vunpack.c.h.b16 %v678
        %v719 = vunpack.c.l.b16 %v679
        %v720 = vunpack.c.h.b16 %v679
        %v721 = vunpack.c.l.b16 %v680
        %v722 = vunpack.c.h.b16 %v680
        %v723 = vunpack.c.l.b16 %v681
        %v724 = vunpack.c.h.b16 %v681
        %v725 = vunpack.c.l.b16 %v682
        %v726 = vunpack.c.h.b16 %v682
        %v727 = vunpack.c.l.b16 %v683
        %v728 = vunpack.c.h.b16 %v683
        %v729 = vunpack.c.l.b16 %v684
        %v730 = vunpack.c.h.b16 %v684
        %v731 = vunpack.c.l.b16 %v685
        %v732 = vunpack.c.h.b16 %v685
        %v733 = vunpack.c.l.b16 %v686
        %v734 = vunpack.c.h.b16 %v686
        %v735 = vunpack.c.l.b16 %v687
        %v736 = vunpack.c.h.b16 %v687
        %v737 = vpack.c.b16 %v707, %v705
        %v738 = vpack.c.b16 %v708, %v706
        %v739 = vpack.c.b16 %v711, %v709
        %v740 = vpack.c.b16 %v712, %v710
        %v741 = vpack.c.b16 %v715, %v713
        %v742 = vpack.c.b16 %v716, %v714
        %v743 = vpack.c.b16 %v719, %v717
        %v744 = vpack.c.b16 %v720, %v718
        %v745 = vpack.c.b16 %v723, %v721
        %v746 = vpack.c.b16 %v724, %v722
        %v747 = vpack.c.b16 %v727, %v725
        %v748 = vpack.c.b16 %v728, %v726
        %v749 = vpack.c.b16 %v731, %v729
        %v750 = vpack.c.b16 %v732, %v730
        %v751 = vpack.c.b16 %v735, %v733
        %v752 = vpack.c.b16 %v736, %v734
        %769 = vmatprep.subr.bf16.mxu0 %v752
        %770 = vmatpush1.bf16.msra.mxu0 %v751
        %771 = vmatprep.subr.bf16.mxu0 %v750
        %772 = vmatpush1.bf16.msra.mxu0 %v749
        %773 = vmatprep.subr.bf16.mxu0 %v748
        %774 = vmatpush1.bf16.msra.mxu0 %v747
        %775 = vmatprep.subr.bf16.mxu0 %v746
        %776 = vmatpush1.bf16.msra.mxu0 %v745
        %777 = vmatprep.subr.bf16.mxu0 %v744
        %778 = vmatpush1.bf16.msra.mxu0 %v743
        %779 = vmatprep.subr.bf16.mxu0 %v742
        %780 = vmatpush1.bf16.msra.mxu0 %v741
        %781 = vmatprep.subr.bf16.mxu0 %v740
        %782 = vmatpush1.bf16.msra.mxu0 %v739
        %783 = vmatprep.subr.bf16.mxu0 %v738
        %784 = vmatpush1.bf16.msra.mxu0 %v737
        %785 = vmatprep.subr.bf16.mxu0 0
        %786 = vmatpush2.bf16.msra.mxu0 0
        %787 = vmatprep.subr.bf16.mxu0 0
        %788 = vmatpush2.bf16.msra.mxu0 0
        %789 = vmatprep.subr.bf16.mxu0 0
        %790 = vmatpush2.bf16.msra.mxu0 0
        %791 = vmatprep.subr.bf16.mxu0 0
        %792 = vmatpush2.bf16.msra.mxu0 0
        %793 = vmatprep.subr.bf16.mxu0 0
        %794 = vmatpush2.bf16.msra.mxu0 0
        %795 = vmatprep.subr.bf16.mxu0 0
        %796 = vmatpush2.bf16.msra.mxu0 0
        %797 = vmatprep.subr.bf16.mxu0 0
        %798 = vmatpush2.bf16.msra.mxu0 0
        %799 = vmatprep.subr.bf16.mxu0 0
        %800 = vmatpush2.bf16.msra.mxu0 0
        %801 = vmatprep.mubr.bf16.mxu0 0
        %802 = vmatmul.mubr.bf16.gmra.mxu0 %v688
        %v803 = vpop.f32.mrf.mxu0
        %v804 = vadd.f32 0.0, %v803
        %v805 = vpop.f32.mrf.mxu0
        %v806 = vadd.f32 0.0, %v805
        %v807 = vpop.f32.mrf.mxu0
        %v808 = vpop.f32.mrf.mxu0
        %809 = vdwg.mxu0
        %v810 = vld [vmem:[%s5 + $0x3] sm:$0x1]
        %v811 = vlaneseq
        %v812 = vshrl.u32 %v811, 7
        %v813 = vsub.s32 0, %v812
        %v814 = vrot.slane %v810, %v813
        %v815 = vadd.f32 %v804, %v814
        %v816 = vmul.f32 %v815, 0.5
        %v817 = vmul.f32 %v815, 0.70710677
        %v818 = verf.f32.pop %v817
        %v819 = vadd.f32 %v818, 1.0
        %v820 = vmul.f32 %v816, %v819
        %v821 = vld [vmem:[%s5 + $0x4] sm:$0x1]
        %v822 = vlaneseq
        %v823 = vshrl.u32 %v822, 7
        %v824 = vsub.s32 0, %v823
        %v825 = vrot.slane %v821, %v824
        %v826 = vadd.f32 %v806, %v825
        %v827 = vmul.f32 %v826, 0.5
        %v828 = vmul.f32 %v826, 0.70710677
        %v829 = verf.f32.pop %v828
        %v830 = vadd.f32 %v829, 1.0
        %v831 = vmul.f32 %v827, %v830
        %v832 = vld [vmem:[%s287] sm:$0xff]
        %s833 = scalar_lea.vmem [#allocation2], 64
        %v834 = vld [vmem:[%s833] sm:$0xf]
        %v835 = vld [vmem:[%s833 + $0x4] sm:$0xf]
        %v836 = vld [vmem:[%s833 + $0x8] sm:$0xf]
        %v837 = vld [vmem:[%s833 + $0xc] sm:$0xf]
        %v838 = vld [vmem:[%s833 + $0x10] sm:$0xf]
        %v839 = vld [vmem:[%s833 + $0x14] sm:$0xf]
        %v840 = vld [vmem:[%s833 + $0x18] sm:$0xf]
        %v841 = vld [vmem:[%s833 + $0x1c] sm:$0xf]
        %v842 = vld [vmem:[%s833 + $0x20] sm:$0xf]
        %v843 = vld [vmem:[%s833 + $0x24] sm:$0xf]
        %v844 = vld [vmem:[%s833 + $0x28] sm:$0xf]
        %v845 = vld [vmem:[%s833 + $0x2c] sm:$0xf]
        %v846 = vld [vmem:[%s833 + $0x30] sm:$0xf]
        %v847 = vld [vmem:[%s833 + $0x34] sm:$0xf]
        %v848 = vld [vmem:[%s833 + $0x38] sm:$0xf]
        %v849 = vld [vmem:[%s833 + $0x3c] sm:$0xf]
        %v850 = vpack.c.bf16 %v832, %v832
        %v851 = vld [vmem:[%s5 + $0x5] sm:$0x1]
        %v852 = vlaneseq
        %v853 = vshrl.u32 %v852, 7
        %v854 = vsub.s32 0, %v853
        %v855 = vrot.slane %v851, %v854
        %v872 = vunpack.c.l.b16 %v834
        %v873 = vunpack.c.l.b16 %v835
        %v874 = vunpack.c.l.b16 %v836
        %v875 = vunpack.c.l.b16 %v837
        %v876 = vunpack.c.l.b16 %v838
        %v877 = vunpack.c.l.b16 %v839
        %v878 = vunpack.c.l.b16 %v840
        %v879 = vunpack.c.l.b16 %v841
        %v880 = vunpack.c.l.b16 %v842
        %v881 = vunpack.c.l.b16 %v843
        %v882 = vunpack.c.l.b16 %v844
        %v883 = vunpack.c.l.b16 %v845
        %v884 = vunpack.c.l.b16 %v846
        %v885 = vunpack.c.l.b16 %v847
        %v886 = vunpack.c.l.b16 %v848
        %v887 = vunpack.c.l.b16 %v849
        %v888 = vpack.c.b16 %v873, %v872
        %v889 = vpack.c.b16 %v875, %v874
        %v890 = vpack.c.b16 %v877, %v876
        %v891 = vpack.c.b16 %v879, %v878
        %v892 = vpack.c.b16 %v881, %v880
        %v893 = vpack.c.b16 %v883, %v882
        %v894 = vpack.c.b16 %v885, %v884
        %v895 = vpack.c.b16 %v887, %v886
        %904 = vmatprep.subr.bf16.mxu0 0
        %905 = vmatpush1.bf16.msra.mxu0 %v895
        %906 = vmatprep.subr.bf16.mxu0 0
        %907 = vmatpush1.bf16.msra.mxu0 %v894
        %908 = vmatprep.subr.bf16.mxu0 0
        %909 = vmatpush1.bf16.msra.mxu0 %v893
        %910 = vmatprep.subr.bf16.mxu0 0
        %911 = vmatpush1.bf16.msra.mxu0 %v892
        %912 = vmatprep.subr.bf16.mxu0 0
        %913 = vmatpush1.bf16.msra.mxu0 %v891
        %914 = vmatprep.subr.bf16.mxu0 0
        %915 = vmatpush1.bf16.msra.mxu0 %v890
        %916 = vmatprep.subr.bf16.mxu0 0
        %917 = vmatpush1.bf16.msra.mxu0 %v889
        %918 = vmatprep.subr.bf16.mxu0 0
        %919 = vmatpush1.bf16.msra.mxu0 %v888
        %920 = vmatprep.subr.bf16.mxu0 0
        %921 = vmatpush2.bf16.msra.mxu0 0
        %922 = vmatprep.subr.bf16.mxu0 0
        %923 = vmatpush2.bf16.msra.mxu0 0
        %924 = vmatprep.subr.bf16.mxu0 0
        %925 = vmatpush2.bf16.msra.mxu0 0
        %926 = vmatprep.subr.bf16.mxu0 0
        %927 = vmatpush2.bf16.msra.mxu0 0
        %928 = vmatprep.subr.bf16.mxu0 0
        %929 = vmatpush2.bf16.msra.mxu0 0
        %930 = vmatprep.subr.bf16.mxu0 0
        %931 = vmatpush2.bf16.msra.mxu0 0
        %932 = vmatprep.subr.bf16.mxu0 0
        %933 = vmatpush2.bf16.msra.mxu0 0
        %934 = vmatprep.subr.bf16.mxu0 0
        %935 = vmatpush2.bf16.msra.mxu0 0
        %936 = vmatprep.mubr.bf16.mxu0 0
        %937 = vmatmul.mubr.bf16.gmra.mxu0 %v850
        %v938 = vpop.f32.mrf.mxu0
        %v939 = vadd.f32 %v855, %v938
        %v940 = vpop.f32.mrf.mxu0
        %v941 = vpop.f32.mrf.mxu0
        %v942 = vpop.f32.mrf.mxu0
        %943 = vdwg.mxu0
        %v944 = vxor.u32 %v939, 2147483648
        %v945 = vmul.f32 %v944, 1.442695
        %v946 = vpow.pop %v945
        %v947 = vadd.f32 %v946, 1.0
        %v948 = vrcp.pop %v947
        %v949 = vmul.f32 1.0, %v948
        %v950 = vmul.f32 %v939, %v949
        %v951 = vadd.f32 %v820, 1.0
        %v952 = vmul.f32 %v950, %v951
        %v953 = vadd.f32 %v952, %v831
        %v954 = vld [vmem:[%s5 + $0x6] sm:$0x1]
        %v955 = vld [vmem:[%s5 + $0x7] sm:$0x1]
        %956 = vadd.xlane.f32.xlu0 %v953
        %v957 = vpop.xlane.xlu0 %956
        %v958 = vmul.f32 %v957, 0.03125
        %v959 = vmul.f32 %v953, %v953
        %960 = vadd.xlane.f32.xlu0 %v959
        %v961 = vpop.xlane.xlu0 %960
        %v962 = vmul.f32 %v961, 0.03125
        %v963 = vmul.f32 %v958, %v958
        %v964 = vsub.f32 %v962, %v963
        %v965 = vsub.f32 %v953, %v958
        %v966 = vadd.f32 %v964, 1e-06
        %v967 = vrsqrt.pop %v966
        %v968 = vmul.f32 %v965, %v967
        %v969 = vlaneseq
        %v970 = vshrl.u32 %v969, 7
        %v971 = vsub.s32 0, %v970
        %v972 = vrot.slane %v954, %v971
        %v973 = vmul.f32 %v968, %v972
        %v974 = vlaneseq
        %v975 = vshrl.u32 %v974, 7
        %v976 = vsub.s32 0, %v975
        %v977 = vrot.slane %v955, %v976
        %v978 = vadd.f32 %v973, %v977
        %s979 = scalar_lea.vmem [#allocation4], 128
        %v980 = vld [vmem:[%s979] sm:$0xff]
        %v981 = vld [vmem:[%s979 + $0x8] sm:$0xff]
        %v982 = vld [vmem:[%s979 + $0x10] sm:$0xff]
        %v983 = vld [vmem:[%s979 + $0x18] sm:$0xff]
        %v984 = vld [vmem:[%s979 + $0x20] sm:$0xff]
        %v985 = vld [vmem:[%s979 + $0x28] sm:$0xff]
        %v986 = vld [vmem:[%s979 + $0x30] sm:$0xff]
        %v987 = vld [vmem:[%s979 + $0x38] sm:$0xff]
        %v988 = vld [vmem:[%s979 + $0x40] sm:$0xff]
        %v989 = vld [vmem:[%s979 + $0x48] sm:$0xff]
        %v990 = vld [vmem:[%s979 + $0x50] sm:$0xff]
        %v991 = vld [vmem:[%s979 + $0x58] sm:$0xff]
        %v992 = vld [vmem:[%s979 + $0x60] sm:$0xff]
        %v993 = vld [vmem:[%s979 + $0x68] sm:$0xff]
        %v994 = vld [vmem:[%s979 + $0x70] sm:$0xff]
        %v995 = vld [vmem:[%s979 + $0x78] sm:$0xff]
        %v996 = vpack.c.bf16 %v978, %v978
        %v1013 = vunpack.c.l.b16 %v980
        %v1014 = vunpack.c.h.b16 %v980
        %v1015 = vunpack.c.l.b16 %v981
        %v1016 = vunpack.c.h.b16 %v981
        %v1017 = vunpack.c.l.b16 %v982
        %v1018 = vunpack.c.h.b16 %v982
        %v1019 = vunpack.c.l.b16 %v983
        %v1020 = vunpack.c.h.b16 %v983
        %v1021 = vunpack.c.l.b16 %v984
        %v1022 = vunpack.c.h.b16 %v984
        %v1023 = vunpack.c.l.b16 %v985
        %v1024 = vunpack.c.h.b16 %v985
        %v1025 = vunpack.c.l.b16 %v986
        %v1026 = vunpack.c.h.b16 %v986
        %v1027 = vunpack.c.l.b16 %v987
        %v1028 = vunpack.c.h.b16 %v987
        %v1029 = vunpack.c.l.b16 %v988
        %v1030 = vunpack.c.h.b16 %v988
        %v1031 = vunpack.c.l.b16 %v989
        %v1032 = vunpack.c.h.b16 %v989
        %v1033 = vunpack.c.l.b16 %v990
        %v1034 = vunpack.c.h.b16 %v990
        %v1035 = vunpack.c.l.b16 %v991
        %v1036 = vunpack.c.h.b16 %v991
        %v1037 = vunpack.c.l.b16 %v992
        %v1038 = vunpack.c.h.b16 %v992
        %v1039 = vunpack.c.l.b16 %v993
        %v1040 = vunpack.c.h.b16 %v993
        %v1041 = vunpack.c.l.b16 %v994
        %v1042 = vunpack.c.h.b16 %v994
        %v1043 = vunpack.c.l.b16 %v995
        %v1044 = vunpack.c.h.b16 %v995
        %v1045 = vpack.c.b16 %v1015, %v1013
        %v1046 = vpack.c.b16 %v1016, %v1014
        %v1047 = vpack.c.b16 %v1019, %v1017
        %v1048 = vpack.c.b16 %v1020, %v1018
        %v1049 = vpack.c.b16 %v1023, %v1021
        %v1050 = vpack.c.b16 %v1024, %v1022
        %v1051 = vpack.c.b16 %v1027, %v1025
        %v1052 = vpack.c.b16 %v1028, %v1026
        %v1053 = vpack.c.b16 %v1031, %v1029
        %v1054 = vpack.c.b16 %v1032, %v1030
        %v1055 = vpack.c.b16 %v1035, %v1033
        %v1056 = vpack.c.b16 %v1036, %v1034
        %v1057 = vpack.c.b16 %v1039, %v1037
        %v1058 = vpack.c.b16 %v1040, %v1038
        %v1059 = vpack.c.b16 %v1043, %v1041
        %v1060 = vpack.c.b16 %v1044, %v1042
        %1077 = vmatprep.subr.bf16.mxu0 %v1060
        %1078 = vmatpush1.bf16.msra.mxu0 %v1059
        %1079 = vmatprep.subr.bf16.mxu0 %v1058
        %1080 = vmatpush1.bf16.msra.mxu0 %v1057
        %1081 = vmatprep.subr.bf16.mxu0 %v1056
        %1082 = vmatpush1.bf16.msra.mxu0 %v1055
        %1083 = vmatprep.subr.bf16.mxu0 %v1054
        %1084 = vmatpush1.bf16.msra.mxu0 %v1053
        %1085 = vmatprep.subr.bf16.mxu0 %v1052
        %1086 = vmatpush1.bf16.msra.mxu0 %v1051
        %1087 = vmatprep.subr.bf16.mxu0 %v1050
        %1088 = vmatpush1.bf16.msra.mxu0 %v1049
        %1089 = vmatprep.subr.bf16.mxu0 %v1048
        %1090 = vmatpush1.bf16.msra.mxu0 %v1047
        %1091 = vmatprep.subr.bf16.mxu0 %v1046
        %1092 = vmatpush1.bf16.msra.mxu0 %v1045
        %1093 = vmatprep.subr.bf16.mxu0 0
        %1094 = vmatpush2.bf16.msra.mxu0 0
        %1095 = vmatprep.subr.bf16.mxu0 0
        %1096 = vmatpush2.bf16.msra.mxu0 0
        %1097 = vmatprep.subr.bf16.mxu0 0
        %1098 = vmatpush2.bf16.msra.mxu0 0
        %1099 = vmatprep.subr.bf16.mxu0 0
        %1100 = vmatpush2.bf16.msra.mxu0 0
        %1101 = vmatprep.subr.bf16.mxu0 0
        %1102 = vmatpush2.bf16.msra.mxu0 0
        %1103 = vmatprep.subr.bf16.mxu0 0
        %1104 = vmatpush2.bf16.msra.mxu0 0
        %1105 = vmatprep.subr.bf16.mxu0 0
        %1106 = vmatpush2.bf16.msra.mxu0 0
        %1107 = vmatprep.subr.bf16.mxu0 0
        %1108 = vmatpush2.bf16.msra.mxu0 0
        %1109 = vmatprep.mubr.bf16.mxu0 0
        %1110 = vmatmul.mubr.bf16.gmra.mxu0 %v996
        %v1111 = vpop.f32.mrf.mxu0
        %v1112 = vadd.f32 0.0, %v1111
        %v1113 = vpop.f32.mrf.mxu0
        %v1114 = vadd.f32 0.0, %v1113
        %v1115 = vpop.f32.mrf.mxu0
        %v1116 = vpop.f32.mrf.mxu0
        %1117 = vdwg.mxu0
        %v1118 = vld [vmem:[%s5 + $0x8] sm:$0x1]
        %v1119 = vlaneseq
        %v1120 = vshrl.u32 %v1119, 7
        %v1121 = vsub.s32 0, %v1120
        %v1122 = vrot.slane %v1118, %v1121
        %v1123 = vadd.f32 %v1112, %v1122
        %v1124 = vld [vmem:[%s5 + $0x9] sm:$0x1]
        %v1125 = vlaneseq
        %v1126 = vshrl.u32 %v1125, 7
        %v1127 = vsub.s32 0, %v1126
        %v1128 = vrot.slane %v1124, %v1127
        %v1129 = vadd.f32 %v1114, %v1128
        %v1130 = vxor.u32 %v1129, 2147483648
        %v1131 = vmul.f32 %v1130, 1.442695
        %v1132 = vpow.pop %v1131
        %v1133 = vadd.f32 %v1132, 1.0
        %v1134 = vrcp.pop %v1133
        %v1135 = vmul.f32 1.0, %v1134
        %v1136 = vmul.f32 %v1129, %v1135
        %s1137 = scalar_lea.vmem [#allocation2], 128
        %v1138 = vld [vmem:[%s1137] sm:$0xf]
        %v1139 = vld [vmem:[%s1137 + $0x4] sm:$0xf]
        %v1140 = vld [vmem:[%s1137 + $0x8] sm:$0xf]
        %v1141 = vld [vmem:[%s1137 + $0xc] sm:$0xf]
        %v1142 = vld [vmem:[%s1137 + $0x10] sm:$0xf]
        %v1143 = vld [vmem:[%s1137 + $0x14] sm:$0xf]
        %v1144 = vld [vmem:[%s1137 + $0x18] sm:$0xf]
        %v1145 = vld [vmem:[%s1137 + $0x1c] sm:$0xf]
        %v1146 = vld [vmem:[%s1137 + $0x20] sm:$0xf]
        %v1147 = vld [vmem:[%s1137 + $0x24] sm:$0xf]
        %v1148 = vld [vmem:[%s1137 + $0x28] sm:$0xf]
        %v1149 = vld [vmem:[%s1137 + $0x2c] sm:$0xf]
        %v1150 = vld [vmem:[%s1137 + $0x30] sm:$0xf]
        %v1151 = vld [vmem:[%s1137 + $0x34] sm:$0xf]
        %v1152 = vld [vmem:[%s1137 + $0x38] sm:$0xf]
        %v1153 = vld [vmem:[%s1137 + $0x3c] sm:$0xf]
        %v1154 = vpack.c.bf16 %v1136, %v1136
        %v1155 = vld [vmem:[%s5 + $0xa] sm:$0x1]
        %v1156 = vlaneseq
        %v1157 = vshrl.u32 %v1156, 7
        %v1158 = vsub.s32 0, %v1157
        %v1159 = vrot.slane %v1155, %v1158
        %v1176 = vunpack.c.l.b16 %v1138
        %v1177 = vunpack.c.l.b16 %v1139
        %v1178 = vunpack.c.l.b16 %v1140
        %v1179 = vunpack.c.l.b16 %v1141
        %v1180 = vunpack.c.l.b16 %v1142
        %v1181 = vunpack.c.l.b16 %v1143
        %v1182 = vunpack.c.l.b16 %v1144
        %v1183 = vunpack.c.l.b16 %v1145
        %v1184 = vunpack.c.l.b16 %v1146
        %v1185 = vunpack.c.l.b16 %v1147
        %v1186 = vunpack.c.l.b16 %v1148
        %v1187 = vunpack.c.l.b16 %v1149
        %v1188 = vunpack.c.l.b16 %v1150
        %v1189 = vunpack.c.l.b16 %v1151
        %v1190 = vunpack.c.l.b16 %v1152
        %v1191 = vunpack.c.l.b16 %v1153
        %v1192 = vpack.c.b16 %v1177, %v1176
        %v1193 = vpack.c.b16 %v1179, %v1178
        %v1194 = vpack.c.b16 %v1181, %v1180
        %v1195 = vpack.c.b16 %v1183, %v1182
        %v1196 = vpack.c.b16 %v1185, %v1184
        %v1197 = vpack.c.b16 %v1187, %v1186
        %v1198 = vpack.c.b16 %v1189, %v1188
        %v1199 = vpack.c.b16 %v1191, %v1190
        %1208 = vmatprep.subr.bf16.mxu0 0
        %1209 = vmatpush1.bf16.msra.mxu0 %v1199
        %1210 = vmatprep.subr.bf16.mxu0 0
        %1211 = vmatpush1.bf16.msra.mxu0 %v1198
        %1212 = vmatprep.subr.bf16.mxu0 0
        %1213 = vmatpush1.bf16.msra.mxu0 %v1197
        %1214 = vmatprep.subr.bf16.mxu0 0
        %1215 = vmatpush1.bf16.msra.mxu0 %v1196
        %1216 = vmatprep.subr.bf16.mxu0 0
        %1217 = vmatpush1.bf16.msra.mxu0 %v1195
        %1218 = vmatprep.subr.bf16.mxu0 0
        %1219 = vmatpush1.bf16.msra.mxu0 %v1194
        %1220 = vmatprep.subr.bf16.mxu0 0
        %1221 = vmatpush1.bf16.msra.mxu0 %v1193
        %1222 = vmatprep.subr.bf16.mxu0 0
        %1223 = vmatpush1.bf16.msra.mxu0 %v1192
        %1224 = vmatprep.subr.bf16.mxu0 0
        %1225 = vmatpush2.bf16.msra.mxu0 0
        %1226 = vmatprep.subr.bf16.mxu0 0
        %1227 = vmatpush2.bf16.msra.mxu0 0
        %1228 = vmatprep.subr.bf16.mxu0 0
        %1229 = vmatpush2.bf16.msra.mxu0 0
        %1230 = vmatprep.subr.bf16.mxu0 0
        %1231 = vmatpush2.bf16.msra.mxu0 0
        %1232 = vmatprep.subr.bf16.mxu0 0
        %1233 = vmatpush2.bf16.msra.mxu0 0
        %1234 = vmatprep.subr.bf16.mxu0 0
        %1235 = vmatpush2.bf16.msra.mxu0 0
        %1236 = vmatprep.subr.bf16.mxu0 0
        %1237 = vmatpush2.bf16.msra.mxu0 0
        %1238 = vmatprep.subr.bf16.mxu0 0
        %1239 = vmatpush2.bf16.msra.mxu0 0
        %1240 = vmatprep.mubr.bf16.mxu0 0
        %1241 = vmatmul.mubr.bf16.gmra.mxu0 %v1154
        %v1242 = vpop.f32.mrf.mxu0
        %v1243 = vadd.f32 %v1159, %v1242
        %v1244 = vpop.f32.mrf.mxu0
        %v1245 = vpop.f32.mrf.mxu0
        %v1246 = vpop.f32.mrf.mxu0
        %1247 = vdwg.mxu0
        %v1248 = vxor.u32 %v1243, 2147483648
        %v1249 = vmul.f32 %v1248, 1.442695
        %v1250 = vpow.pop %v1249
        %v1251 = vadd.f32 %v1250, 1.0
        %v1252 = vrcp.pop %v1251
        %v1253 = vmul.f32 1.0, %v1252
        %v1254 = vmul.f32 %v1243, %v1253
        %s1255 = scalar_lea.vmem [#allocation2], 192
        %v1256 = vld [vmem:[%s1255] sm:$0xf]
        %v1257 = vld [vmem:[%s1255 + $0x4] sm:$0xf]
        %v1258 = vld [vmem:[%s1255 + $0x8] sm:$0xf]
        %v1259 = vld [vmem:[%s1255 + $0xc] sm:$0xf]
        %v1260 = vld [vmem:[%s1255 + $0x10] sm:$0xf]
        %v1261 = vld [vmem:[%s1255 + $0x14] sm:$0xf]
        %v1262 = vld [vmem:[%s1255 + $0x18] sm:$0xf]
        %v1263 = vld [vmem:[%s1255 + $0x1c] sm:$0xf]
        %v1264 = vld [vmem:[%s1255 + $0x20] sm:$0xf]
        %v1265 = vld [vmem:[%s1255 + $0x24] sm:$0xf]
        %v1266 = vld [vmem:[%s1255 + $0x28] sm:$0xf]
        %v1267 = vld [vmem:[%s1255 + $0x2c] sm:$0xf]
        %v1268 = vld [vmem:[%s1255 + $0x30] sm:$0xf]
        %v1269 = vld [vmem:[%s1255 + $0x34] sm:$0xf]
        %v1270 = vld [vmem:[%s1255 + $0x38] sm:$0xf]
        %v1271 = vld [vmem:[%s1255 + $0x3c] sm:$0xf]
        %v1272 = vpack.c.bf16 %v1254, %v1254
        %v1273 = vld [vmem:[%s5 + $0xb] sm:$0x1]
        %v1274 = vlaneseq
        %v1275 = vshrl.u32 %v1274, 7
        %v1276 = vsub.s32 0, %v1275
        %v1277 = vrot.slane %v1273, %v1276
        %v1294 = vunpack.c.l.b16 %v1256
        %v1295 = vunpack.c.l.b16 %v1257
        %v1296 = vunpack.c.l.b16 %v1258
        %v1297 = vunpack.c.l.b16 %v1259
        %v1298 = vunpack.c.l.b16 %v1260
        %v1299 = vunpack.c.l.b16 %v1261
        %v1300 = vunpack.c.l.b16 %v1262
        %v1301 = vunpack.c.l.b16 %v1263
        %v1302 = vunpack.c.l.b16 %v1264
        %v1303 = vunpack.c.l.b16 %v1265
        %v1304 = vunpack.c.l.b16 %v1266
        %v1305 = vunpack.c.l.b16 %v1267
        %v1306 = vunpack.c.l.b16 %v1268
        %v1307 = vunpack.c.l.b16 %v1269
        %v1308 = vunpack.c.l.b16 %v1270
        %v1309 = vunpack.c.l.b16 %v1271
        %v1310 = vpack.c.b16 %v1295, %v1294
        %v1311 = vpack.c.b16 %v1297, %v1296
        %v1312 = vpack.c.b16 %v1299, %v1298
        %v1313 = vpack.c.b16 %v1301, %v1300
        %v1314 = vpack.c.b16 %v1303, %v1302
        %v1315 = vpack.c.b16 %v1305, %v1304
        %v1316 = vpack.c.b16 %v1307, %v1306
        %v1317 = vpack.c.b16 %v1309, %v1308
        %1326 = vmatprep.subr.bf16.mxu0 0
        %1327 = vmatpush1.bf16.msra.mxu0 %v1317
        %1328 = vmatprep.subr.bf16.mxu0 0
        %1329 = vmatpush1.bf16.msra.mxu0 %v1316
        %1330 = vmatprep.subr.bf16.mxu0 0
        %1331 = vmatpush1.bf16.msra.mxu0 %v1315
        %1332 = vmatprep.subr.bf16.mxu0 0
        %1333 = vmatpush1.bf16.msra.mxu0 %v1314
        %1334 = vmatprep.subr.bf16.mxu0 0
        %1335 = vmatpush1.bf16.msra.mxu0 %v1313
        %1336 = vmatprep.subr.bf16.mxu0 0
        %1337 = vmatpush1.bf16.msra.mxu0 %v1312
        %1338 = vmatprep.subr.bf16.mxu0 0
        %1339 = vmatpush1.bf16.msra.mxu0 %v1311
        %1340 = vmatprep.subr.bf16.mxu0 0
        %1341 = vmatpush1.bf16.msra.mxu0 %v1310
        %1342 = vmatprep.subr.bf16.mxu0 0
        %1343 = vmatpush2.bf16.msra.mxu0 0
        %1344 = vmatprep.subr.bf16.mxu0 0
        %1345 = vmatpush2.bf16.msra.mxu0 0
        %1346 = vmatprep.subr.bf16.mxu0 0
        %1347 = vmatpush2.bf16.msra.mxu0 0
        %1348 = vmatprep.subr.bf16.mxu0 0
        %1349 = vmatpush2.bf16.msra.mxu0 0
        %1350 = vmatprep.subr.bf16.mxu0 0
        %1351 = vmatpush2.bf16.msra.mxu0 0
        %1352 = vmatprep.subr.bf16.mxu0 0
        %1353 = vmatpush2.bf16.msra.mxu0 0
        %1354 = vmatprep.subr.bf16.mxu0 0
        %1355 = vmatpush2.bf16.msra.mxu0 0
        %1356 = vmatprep.subr.bf16.mxu0 0
        %1357 = vmatpush2.bf16.msra.mxu0 0
        %1358 = vmatprep.mubr.bf16.mxu0 0
        %1359 = vmatmul.mubr.bf16.gmra.mxu0 %v1272
        %v1360 = vpop.f32.mrf.mxu0
        %v1361 = vadd.f32 %v1277, %v1360
        %v1362 = vpop.f32.mrf.mxu0
        %v1363 = vpop.f32.mrf.mxu0
        %v1364 = vpop.f32.mrf.mxu0
        %1365 = vdwg.mxu0
        %v1366 = vxor.u32 %v1361, 2147483648
        %v1367 = vmul.f32 %v1366, 1.442695
        %v1368 = vpow.pop %v1367
        %v1369 = vadd.f32 %v1368, 1.0
        %v1370 = vrcp.pop %v1369
        %v1371 = vmul.f32 1.0, %v1370
        %v1372 = vmul.f32 %v1361, %v1371
        %v1373 = vld [vmem:[%s5 + $0xc] sm:$0x1]
        %v1374 = vlaneseq
        %v1375 = vshrl.u32 %v1374, 7
        %v1376 = vsub.s32 0, %v1375
        %v1377 = vrot.slane %v1373, %v1376
        %v1378 = vmul.f32 %v1372, %v1377
        %v1379 = vadd.f32 %v1123, %v1378
        %v1380 = vld [vmem:[%s5 + $0xd] sm:$0x1]
        %v1381 = vld [vmem:[%s5 + $0xe] sm:$0x1]
        %1382 = vadd.xlane.f32.xlu0 %v1379
        %v1383 = vpop.xlane.xlu0 %1382
        %v1384 = vmul.f32 %v1383, 0.03125
        %v1385 = vmul.f32 %v1379, %v1379
        %1386 = vadd.xlane.f32.xlu0 %v1385
        %v1387 = vpop.xlane.xlu0 %1386
        %v1388 = vmul.f32 %v1387, 0.03125
        %v1389 = vmul.f32 %v1384, %v1384
        %v1390 = vsub.f32 %v1388, %v1389
        %v1391 = vsub.f32 %v1379, %v1384
        %v1392 = vadd.f32 %v1390, 1e-06
        %v1393 = vrsqrt.pop %v1392
        %v1394 = vmul.f32 %v1391, %v1393
        %v1395 = vlaneseq
        %v1396 = vshrl.u32 %v1395, 7
        %v1397 = vsub.s32 0, %v1396
        %v1398 = vrot.slane %v1380, %v1397
        %v1399 = vmul.f32 %v1394, %v1398
        %v1400 = vlaneseq
        %v1401 = vshrl.u32 %v1400, 7
        %v1402 = vsub.s32 0, %v1401
        %v1403 = vrot.slane %v1381, %v1402
        %v1404 = vadd.f32 %v1399, %v1403
        %s1405 = scalar_lea.vmem [#allocation4], 256
        %v1406 = vld [vmem:[%s1405] sm:$0xff]
        %v1407 = vld [vmem:[%s1405 + $0x8] sm:$0xff]
        %v1408 = vld [vmem:[%s1405 + $0x10] sm:$0xff]
        %v1409 = vld [vmem:[%s1405 + $0x18] sm:$0xff]
        %v1410 = vld [vmem:[%s1405 + $0x20] sm:$0xff]
        %v1411 = vld [vmem:[%s1405 + $0x28] sm:$0xff]
        %v1412 = vld [vmem:[%s1405 + $0x30] sm:$0xff]
        %v1413 = vld [vmem:[%s1405 + $0x38] sm:$0xff]
        %v1414 = vld [vmem:[%s1405 + $0x40] sm:$0xff]
        %v1415 = vld [vmem:[%s1405 + $0x48] sm:$0xff]
        %v1416 = vld [vmem:[%s1405 + $0x50] sm:$0xff]
        %v1417 = vld [vmem:[%s1405 + $0x58] sm:$0xff]
        %v1418 = vld [vmem:[%s1405 + $0x60] sm:$0xff]
        %v1419 = vld [vmem:[%s1405 + $0x68] sm:$0xff]
        %v1420 = vld [vmem:[%s1405 + $0x70] sm:$0xff]
        %v1421 = vld [vmem:[%s1405 + $0x78] sm:$0xff]
        %v1422 = vpack.c.bf16 %v1404, %v1404
        %v1439 = vunpack.c.l.b16 %v1406
        %v1440 = vunpack.c.h.b16 %v1406
        %v1441 = vunpack.c.l.b16 %v1407
        %v1442 = vunpack.c.h.b16 %v1407
        %v1443 = vunpack.c.l.b16 %v1408
        %v1444 = vunpack.c.h.b16 %v1408
        %v1445 = vunpack.c.l.b16 %v1409
        %v1446 = vunpack.c.h.b16 %v1409
        %v1447 = vunpack.c.l.b16 %v1410
        %v1448 = vunpack.c.h.b16 %v1410
        %v1449 = vunpack.c.l.b16 %v1411
        %v1450 = vunpack.c.h.b16 %v1411
        %v1451 = vunpack.c.l.b16 %v1412
        %v1452 = vunpack.c.h.b16 %v1412
        %v1453 = vunpack.c.l.b16 %v1413
        %v1454 = vunpack.c.h.b16 %v1413
        %v1455 = vunpack.c.l.b16 %v1414
        %v1456 = vunpack.c.h.b16 %v1414
        %v1457 = vunpack.c.l.b16 %v1415
        %v1458 = vunpack.c.h.b16 %v1415
        %v1459 = vunpack.c.l.b16 %v1416
        %v1460 = vunpack.c.h.b16 %v1416
        %v1461 = vunpack.c.l.b16 %v1417
        %v1462 = vunpack.c.h.b16 %v1417
        %v1463 = vunpack.c.l.b16 %v1418
        %v1464 = vunpack.c.h.b16 %v1418
        %v1465 = vunpack.c.l.b16 %v1419
        %v1466 = vunpack.c.h.b16 %v1419
        %v1467 = vunpack.c.l.b16 %v1420
        %v1468 = vunpack.c.h.b16 %v1420
        %v1469 = vunpack.c.l.b16 %v1421
        %v1470 = vunpack.c.h.b16 %v1421
        %v1471 = vpack.c.b16 %v1441, %v1439
        %v1472 = vpack.c.b16 %v1442, %v1440
        %v1473 = vpack.c.b16 %v1445, %v1443
        %v1474 = vpack.c.b16 %v1446, %v1444
        %v1475 = vpack.c.b16 %v1449, %v1447
        %v1476 = vpack.c.b16 %v1450, %v1448
        %v1477 = vpack.c.b16 %v1453, %v1451
        %v1478 = vpack.c.b16 %v1454, %v1452
        %v1479 = vpack.c.b16 %v1457, %v1455
        %v1480 = vpack.c.b16 %v1458, %v1456
        %v1481 = vpack.c.b16 %v1461, %v1459
        %v1482 = vpack.c.b16 %v1462, %v1460
        %v1483 = vpack.c.b16 %v1465, %v1463
        %v1484 = vpack.c.b16 %v1466, %v1464
        %v1485 = vpack.c.b16 %v1469, %v1467
        %v1486 = vpack.c.b16 %v1470, %v1468
        %1503 = vmatprep.subr.bf16.mxu0 %v1486
        %1504 = vmatpush1.bf16.msra.mxu0 %v1485
        %1505 = vmatprep.subr.bf16.mxu0 %v1484
        %1506 = vmatpush1.bf16.msra.mxu0 %v1483
        %1507 = vmatprep.subr.bf16.mxu0 %v1482
        %1508 = vmatpush1.bf16.msra.mxu0 %v1481
        %1509 = vmatprep.subr.bf16.mxu0 %v1480
        %1510 = vmatpush1.bf16.msra.mxu0 %v1479
        %1511 = vmatprep.subr.bf16.mxu0 %v1478
        %1512 = vmatpush1.bf16.msra.mxu0 %v1477
        %1513 = vmatprep.subr.bf16.mxu0 %v1476
        %1514 = vmatpush1.bf16.msra.mxu0 %v1475
        %1515 = vmatprep.subr.bf16.mxu0 %v1474
        %1516 = vmatpush1.bf16.msra.mxu0 %v1473
        %1517 = vmatprep.subr.bf16.mxu0 %v1472
        %1518 = vmatpush1.bf16.msra.mxu0 %v1471
        %1519 = vmatprep.subr.bf16.mxu0 0
        %1520 = vmatpush2.bf16.msra.mxu0 0
        %1521 = vmatprep.subr.bf16.mxu0 0
        %1522 = vmatpush2.bf16.msra.mxu0 0
        %1523 = vmatprep.subr.bf16.mxu0 0
        %1524 = vmatpush2.bf16.msra.mxu0 0
        %1525 = vmatprep.subr.bf16.mxu0 0
        %1526 = vmatpush2.bf16.msra.mxu0 0
        %1527 = vmatprep.subr.bf16.mxu0 0
        %1528 = vmatpush2.bf16.msra.mxu0 0
        %1529 = vmatprep.subr.bf16.mxu0 0
        %1530 = vmatpush2.bf16.msra.mxu0 0
        %1531 = vmatprep.subr.bf16.mxu0 0
        %1532 = vmatpush2.bf16.msra.mxu0 0
        %1533 = vmatprep.subr.bf16.mxu0 0
        %1534 = vmatpush2.bf16.msra.mxu0 0
        %1535 = vmatprep.mubr.bf16.mxu0 0
        %1536 = vmatmul.mubr.bf16.gmra.mxu0 %v1422
        %v1537 = vpop.f32.mrf.mxu0
        %v1538 = vadd.f32 0.0, %v1537
        %v1539 = vpop.f32.mrf.mxu0
        %v1540 = vadd.f32 0.0, %v1539
        %v1541 = vpop.f32.mrf.mxu0
        %v1542 = vpop.f32.mrf.mxu0
        %1543 = vdwg.mxu0
        %v1544 = vld [vmem:[%s5 + $0xf] sm:$0x1]
        %v1545 = vlaneseq
        %v1546 = vshrl.u32 %v1545, 7
        %v1547 = vsub.s32 0, %v1546
        %v1548 = vrot.slane %v1544, %v1547
        %v1549 = vadd.f32 %v1538, %v1548
        %v1550 = vld [vmem:[%s5 + $0x10] sm:$0x1]
        %v1551 = vlaneseq
        %v1552 = vshrl.u32 %v1551, 7
        %v1553 = vsub.s32 0, %v1552
        %v1554 = vrot.slane %v1550, %v1553
        %v1555 = vadd.f32 %v1540, %v1554
        %v1556 = vxor.u32 %v1555, 2147483648
        %v1557 = vmul.f32 %v1556, 1.442695
        %v1558 = vpow.pop %v1557
        %v1559 = vadd.f32 %v1558, 1.0
        %v1560 = vrcp.pop %v1559
        %v1561 = vmul.f32 1.0, %v1560
        %v1562 = vmul.f32 %v1555, %v1561
        %s1563 = scalar_lea.vmem [#allocation2], 256
        %v1564 = vld [vmem:[%s1563] sm:$0xf]
        %v1565 = vld [vmem:[%s1563 + $0x4] sm:$0xf]
        %v1566 = vld [vmem:[%s1563 + $0x8] sm:$0xf]
        %v1567 = vld [vmem:[%s1563 + $0xc] sm:$0xf]
        %v1568 = vld [vmem:[%s1563 + $0x10] sm:$0xf]
        %v1569 = vld [vmem:[%s1563 + $0x14] sm:$0xf]
        %v1570 = vld [vmem:[%s1563 + $0x18] sm:$0xf]
        %v1571 = vld [vmem:[%s1563 + $0x1c] sm:$0xf]
        %v1572 = vld [vmem:[%s1563 + $0x20] sm:$0xf]
        %v1573 = vld [vmem:[%s1563 + $0x24] sm:$0xf]
        %v1574 = vld [vmem:[%s1563 + $0x28] sm:$0xf]
        %v1575 = vld [vmem:[%s1563 + $0x2c] sm:$0xf]
        %v1576 = vld [vmem:[%s1563 + $0x30] sm:$0xf]
        %v1577 = vld [vmem:[%s1563 + $0x34] sm:$0xf]
        %v1578 = vld [vmem:[%s1563 + $0x38] sm:$0xf]
        %v1579 = vld [vmem:[%s1563 + $0x3c] sm:$0xf]
        %v1580 = vpack.c.bf16 %v1562, %v1562
        %v1581 = vld [vmem:[%s5 + $0x11] sm:$0x1]
        %v1582 = vlaneseq
        %v1583 = vshrl.u32 %v1582, 7
        %v1584 = vsub.s32 0, %v1583
        %v1585 = vrot.slane %v1581, %v1584
        %v1602 = vunpack.c.l.b16 %v1564
        %v1603 = vunpack.c.l.b16 %v1565
        %v1604 = vunpack.c.l.b16 %v1566
        %v1605 = vunpack.c.l.b16 %v1567
        %v1606 = vunpack.c.l.b16 %v1568
        %v1607 = vunpack.c.l.b16 %v1569
        %v1608 = vunpack.c.l.b16 %v1570
        %v1609 = vunpack.c.l.b16 %v1571
        %v1610 = vunpack.c.l.b16 %v1572
        %v1611 = vunpack.c.l.b16 %v1573
        %v1612 = vunpack.c.l.b16 %v1574
        %v1613 = vunpack.c.l.b16 %v1575
        %v1614 = vunpack.c.l.b16 %v1576
        %v1615 = vunpack.c.l.b16 %v1577
        %v1616 = vunpack.c.l.b16 %v1578
        %v1617 = vunpack.c.l.b16 %v1579
        %v1618 = vpack.c.b16 %v1603, %v1602
        %v1619 = vpack.c.b16 %v1605, %v1604
        %v1620 = vpack.c.b16 %v1607, %v1606
        %v1621 = vpack.c.b16 %v1609, %v1608
        %v1622 = vpack.c.b16 %v1611, %v1610
        %v1623 = vpack.c.b16 %v1613, %v1612
        %v1624 = vpack.c.b16 %v1615, %v1614
        %v1625 = vpack.c.b16 %v1617, %v1616
        %1634 = vmatprep.subr.bf16.mxu0 0
        %1635 = vmatpush1.bf16.msra.mxu0 %v1625
        %1636 = vmatprep.subr.bf16.mxu0 0
        %1637 = vmatpush1.bf16.msra.mxu0 %v1624
        %1638 = vmatprep.subr.bf16.mxu0 0
        %1639 = vmatpush1.bf16.msra.mxu0 %v1623
        %1640 = vmatprep.subr.bf16.mxu0 0
        %1641 = vmatpush1.bf16.msra.mxu0 %v1622
        %1642 = vmatprep.subr.bf16.mxu0 0
        %1643 = vmatpush1.bf16.msra.mxu0 %v1621
        %1644 = vmatprep.subr.bf16.mxu0 0
        %1645 = vmatpush1.bf16.msra.mxu0 %v1620
        %1646 = vmatprep.subr.bf16.mxu0 0
        %1647 = vmatpush1.bf16.msra.mxu0 %v1619
        %1648 = vmatprep.subr.bf16.mxu0 0
        %1649 = vmatpush1.bf16.msra.mxu0 %v1618
        %1650 = vmatprep.subr.bf16.mxu0 0
        %1651 = vmatpush2.bf16.msra.mxu0 0
        %1652 = vmatprep.subr.bf16.mxu0 0
        %1653 = vmatpush2.bf16.msra.mxu0 0
        %1654 = vmatprep.subr.bf16.mxu0 0
        %1655 = vmatpush2.bf16.msra.mxu0 0
        %1656 = vmatprep.subr.bf16.mxu0 0
        %1657 = vmatpush2.bf16.msra.mxu0 0
        %1658 = vmatprep.subr.bf16.mxu0 0
        %1659 = vmatpush2.bf16.msra.mxu0 0
        %1660 = vmatprep.subr.bf16.mxu0 0
        %1661 = vmatpush2.bf16.msra.mxu0 0
        %1662 = vmatprep.subr.bf16.mxu0 0
        %1663 = vmatpush2.bf16.msra.mxu0 0
        %1664 = vmatprep.subr.bf16.mxu0 0
        %1665 = vmatpush2.bf16.msra.mxu0 0
        %1666 = vmatprep.mubr.bf16.mxu0 0
        %1667 = vmatmul.mubr.bf16.gmra.mxu0 %v1580
        %v1668 = vpop.f32.mrf.mxu0
        %v1669 = vadd.f32 %v1585, %v1668
        %v1670 = vpop.f32.mrf.mxu0
        %v1671 = vpop.f32.mrf.mxu0
        %v1672 = vpop.f32.mrf.mxu0
        %1673 = vdwg.mxu0
        %v1674 = vxor.u32 %v1669, 2147483648
        %v1675 = vmul.f32 %v1674, 1.442695
        %v1676 = vpow.pop %v1675
        %v1677 = vadd.f32 %v1676, 1.0
        %v1678 = vrcp.pop %v1677
        %v1679 = vmul.f32 1.0, %v1678
        %v1680 = vmul.f32 %v1669, %v1679
        %s1681 = scalar_lea.vmem [#allocation2], 320
        %v1682 = vld [vmem:[%s1681] sm:$0xf]
        %v1683 = vld [vmem:[%s1681 + $0x4] sm:$0xf]
        %v1684 = vld [vmem:[%s1681 + $0x8] sm:$0xf]
        %v1685 = vld [vmem:[%s1681 + $0xc] sm:$0xf]
        %v1686 = vld [vmem:[%s1681 + $0x10] sm:$0xf]
        %v1687 = vld [vmem:[%s1681 + $0x14] sm:$0xf]
        %v1688 = vld [vmem:[%s1681 + $0x18] sm:$0xf]
        %v1689 = vld [vmem:[%s1681 + $0x1c] sm:$0xf]
        %v1690 = vld [vmem:[%s1681 + $0x20] sm:$0xf]
        %v1691 = vld [vmem:[%s1681 + $0x24] sm:$0xf]
        %v1692 = vld [vmem:[%s1681 + $0x28] sm:$0xf]
        %v1693 = vld [vmem:[%s1681 + $0x2c] sm:$0xf]
        %v1694 = vld [vmem:[%s1681 + $0x30] sm:$0xf]
        %v1695 = vld [vmem:[%s1681 + $0x34] sm:$0xf]
        %v1696 = vld [vmem:[%s1681 + $0x38] sm:$0xf]
        %v1697 = vld [vmem:[%s1681 + $0x3c] sm:$0xf]
        %v1698 = vpack.c.bf16 %v1680, %v1680
        %v1699 = vld [vmem:[%s5 + $0x12] sm:$0x1]
        %v1700 = vlaneseq
        %v1701 = vshrl.u32 %v1700, 7
        %v1702 = vsub.s32 0, %v1701
        %v1703 = vrot.slane %v1699, %v1702
        %v1720 = vunpack.c.l.b16 %v1682
        %v1721 = vunpack.c.l.b16 %v1683
        %v1722 = vunpack.c.l.b16 %v1684
        %v1723 = vunpack.c.l.b16 %v1685
        %v1724 = vunpack.c.l.b16 %v1686
        %v1725 = vunpack.c.l.b16 %v1687
        %v1726 = vunpack.c.l.b16 %v1688
        %v1727 = vunpack.c.l.b16 %v1689
        %v1728 = vunpack.c.l.b16 %v1690
        %v1729 = vunpack.c.l.b16 %v1691
        %v1730 = vunpack.c.l.b16 %v1692
        %v1731 = vunpack.c.l.b16 %v1693
        %v1732 = vunpack.c.l.b16 %v1694
        %v1733 = vunpack.c.l.b16 %v1695
        %v1734 = vunpack.c.l.b16 %v1696
        %v1735 = vunpack.c.l.b16 %v1697
        %v1736 = vpack.c.b16 %v1721, %v1720
        %v1737 = vpack.c.b16 %v1723, %v1722
        %v1738 = vpack.c.b16 %v1725, %v1724
        %v1739 = vpack.c.b16 %v1727, %v1726
        %v1740 = vpack.c.b16 %v1729, %v1728
        %v1741 = vpack.c.b16 %v1731, %v1730
        %v1742 = vpack.c.b16 %v1733, %v1732
        %v1743 = vpack.c.b16 %v1735, %v1734
        %1752 = vmatprep.subr.bf16.mxu0 0
        %1753 = vmatpush1.bf16.msra.mxu0 %v1743
        %1754 = vmatprep.subr.bf16.mxu0 0
        %1755 = vmatpush1.bf16.msra.mxu0 %v1742
        %1756 = vmatprep.subr.bf16.mxu0 0
        %1757 = vmatpush1.bf16.msra.mxu0 %v1741
        %1758 = vmatprep.subr.bf16.mxu0 0
        %1759 = vmatpush1.bf16.msra.mxu0 %v1740
        %1760 = vmatprep.subr.bf16.mxu0 0
        %1761 = vmatpush1.bf16.msra.mxu0 %v1739
        %1762 = vmatprep.subr.bf16.mxu0 0
        %1763 = vmatpush1.bf16.msra.mxu0 %v1738
        %1764 = vmatprep.subr.bf16.mxu0 0
        %1765 = vmatpush1.bf16.msra.mxu0 %v1737
        %1766 = vmatprep.subr.bf16.mxu0 0
        %1767 = vmatpush1.bf16.msra.mxu0 %v1736
        %1768 = vmatprep.subr.bf16.mxu0 0
        %1769 = vmatpush2.bf16.msra.mxu0 0
        %1770 = vmatprep.subr.bf16.mxu0 0
        %1771 = vmatpush2.bf16.msra.mxu0 0
        %1772 = vmatprep.subr.bf16.mxu0 0
        %1773 = vmatpush2.bf16.msra.mxu0 0
        %1774 = vmatprep.subr.bf16.mxu0 0
        %1775 = vmatpush2.bf16.msra.mxu0 0
        %1776 = vmatprep.subr.bf16.mxu0 0
        %1777 = vmatpush2.bf16.msra.mxu0 0
        %1778 = vmatprep.subr.bf16.mxu0 0
        %1779 = vmatpush2.bf16.msra.mxu0 0
        %1780 = vmatprep.subr.bf16.mxu0 0
        %1781 = vmatpush2.bf16.msra.mxu0 0
        %1782 = vmatprep.subr.bf16.mxu0 0
        %1783 = vmatpush2.bf16.msra.mxu0 0
        %1784 = vmatprep.mubr.bf16.mxu0 0
        %1785 = vmatmul.mubr.bf16.gmra.mxu0 %v1698
        %v1786 = vpop.f32.mrf.mxu0
        %v1787 = vadd.f32 %v1703, %v1786
        %v1788 = vpop.f32.mrf.mxu0
        %v1789 = vpop.f32.mrf.mxu0
        %v1790 = vpop.f32.mrf.mxu0
        %1791 = vdwg.mxu0
        %v1792 = vxor.u32 %v1787, 2147483648
        %v1793 = vmul.f32 %v1792, 1.442695
        %v1794 = vpow.pop %v1793
        %v1795 = vadd.f32 %v1794, 1.0
        %v1796 = vrcp.pop %v1795
        %v1797 = vmul.f32 1.0, %v1796
        %v1798 = vmul.f32 %v1787, %v1797
        %v1799 = vld [vmem:[%s5 + $0x13] sm:$0x1]
        %v1800 = vlaneseq
        %v1801 = vshrl.u32 %v1800, 7
        %v1802 = vsub.s32 0, %v1801
        %v1803 = vrot.slane %v1799, %v1802
        %v1804 = vmul.f32 %v1798, %v1803
        %v1805 = vadd.f32 %v1549, %v1804
        %v1806 = vld [vmem:[%s5 + $0x14] sm:$0x1]
        %v1807 = vld [vmem:[%s5 + $0x15] sm:$0x1]
        %1808 = vadd.xlane.f32.xlu0 %v1805
        %v1809 = vpop.xlane.xlu0 %1808
        %v1810 = vmul.f32 %v1809, 0.03125
        %v1811 = vmul.f32 %v1805, %v1805
        %1812 = vadd.xlane.f32.xlu0 %v1811
        %v1813 = vpop.xlane.xlu0 %1812
        %v1814 = vmul.f32 %v1813, 0.03125
        %v1815 = vmul.f32 %v1810, %v1810
        %v1816 = vsub.f32 %v1814, %v1815
        %v1817 = vsub.f32 %v1805, %v1810
        %v1818 = vadd.f32 %v1816, 1e-06
        %v1819 = vrsqrt.pop %v1818
        %v1820 = vmul.f32 %v1817, %v1819
        %v1821 = vlaneseq
        %v1822 = vshrl.u32 %v1821, 7
        %v1823 = vsub.s32 0, %v1822
        %v1824 = vrot.slane %v1806, %v1823
        %v1825 = vmul.f32 %v1820, %v1824
        %v1826 = vlaneseq
        %v1827 = vshrl.u32 %v1826, 7
        %v1828 = vsub.s32 0, %v1827
        %v1829 = vrot.slane %v1807, %v1828
        %v1830 = vadd.f32 %v1825, %v1829
        %s1831 = scalar_lea.vmem [#allocation2], 384
        %v1832 = vld [vmem:[%s1831] sm:$0xf]
        %v1833 = vld [vmem:[%s1831 + $0x4] sm:$0xf]
        %v1834 = vld [vmem:[%s1831 + $0x8] sm:$0xf]
        %v1835 = vld [vmem:[%s1831 + $0xc] sm:$0xf]
        %v1836 = vld [vmem:[%s1831 + $0x10] sm:$0xf]
        %v1837 = vld [vmem:[%s1831 + $0x14] sm:$0xf]
        %v1838 = vld [vmem:[%s1831 + $0x18] sm:$0xf]
        %v1839 = vld [vmem:[%s1831 + $0x1c] sm:$0xf]
        %v1840 = vld [vmem:[%s1831 + $0x20] sm:$0xf]
        %v1841 = vld [vmem:[%s1831 + $0x24] sm:$0xf]
        %v1842 = vld [vmem:[%s1831 + $0x28] sm:$0xf]
        %v1843 = vld [vmem:[%s1831 + $0x2c] sm:$0xf]
        %v1844 = vld [vmem:[%s1831 + $0x30] sm:$0xf]
        %v1845 = vld [vmem:[%s1831 + $0x34] sm:$0xf]
        %v1846 = vld [vmem:[%s1831 + $0x38] sm:$0xf]
        %v1847 = vld [vmem:[%s1831 + $0x3c] sm:$0xf]
        %v1848 = vpack.c.bf16 %v1830, %v1830
        %v1849 = vld [vmem:[%s5 + $0x16] sm:$0x1]
        %v1850 = vlaneseq
        %v1851 = vshrl.u32 %v1850, 7
        %v1852 = vsub.s32 0, %v1851
        %v1853 = vrot.slane %v1849, %v1852
        %v1870 = vunpack.c.l.b16 %v1832
        %v1871 = vunpack.c.l.b16 %v1833
        %v1872 = vunpack.c.l.b16 %v1834
        %v1873 = vunpack.c.l.b16 %v1835
        %v1874 = vunpack.c.l.b16 %v1836
        %v1875 = vunpack.c.l.b16 %v1837
        %v1876 = vunpack.c.l.b16 %v1838
        %v1877 = vunpack.c.l.b16 %v1839
        %v1878 = vunpack.c.l.b16 %v1840
        %v1879 = vunpack.c.l.b16 %v1841
        %v1880 = vunpack.c.l.b16 %v1842
        %v1881 = vunpack.c.l.b16 %v1843
        %v1882 = vunpack.c.l.b16 %v1844
        %v1883 = vunpack.c.l.b16 %v1845
        %v1884 = vunpack.c.l.b16 %v1846
        %v1885 = vunpack.c.l.b16 %v1847
        %v1886 = vpack.c.b16 %v1871, %v1870
        %v1887 = vpack.c.b16 %v1873, %v1872
        %v1888 = vpack.c.b16 %v1875, %v1874
        %v1889 = vpack.c.b16 %v1877, %v1876
        %v1890 = vpack.c.b16 %v1879, %v1878
        %v1891 = vpack.c.b16 %v1881, %v1880
        %v1892 = vpack.c.b16 %v1883, %v1882
        %v1893 = vpack.c.b16 %v1885, %v1884
        %1902 = vmatprep.subr.bf16.mxu0 0
        %1903 = vmatpush1.bf16.msra.mxu0 %v1893
        %1904 = vmatprep.subr.bf16.mxu0 0
        %1905 = vmatpush1.bf16.msra.mxu0 %v1892
        %1906 = vmatprep.subr.bf16.mxu0 0
        %1907 = vmatpush1.bf16.msra.mxu0 %v1891
        %1908 = vmatprep.subr.bf16.mxu0 0
        %1909 = vmatpush1.bf16.msra.mxu0 %v1890
        %1910 = vmatprep.subr.bf16.mxu0 0
        %1911 = vmatpush1.bf16.msra.mxu0 %v1889
        %1912 = vmatprep.subr.bf16.mxu0 0
        %1913 = vmatpush1.bf16.msra.mxu0 %v1888
        %1914 = vmatprep.subr.bf16.mxu0 0
        %1915 = vmatpush1.bf16.msra.mxu0 %v1887
        %1916 = vmatprep.subr.bf16.mxu0 0
        %1917 = vmatpush1.bf16.msra.mxu0 %v1886
        %1918 = vmatprep.subr.bf16.mxu0 0
        %1919 = vmatpush2.bf16.msra.mxu0 0
        %1920 = vmatprep.subr.bf16.mxu0 0
        %1921 = vmatpush2.bf16.msra.mxu0 0
        %1922 = vmatprep.subr.bf16.mxu0 0
        %1923 = vmatpush2.bf16.msra.mxu0 0
        %1924 = vmatprep.subr.bf16.mxu0 0
        %1925 = vmatpush2.bf16.msra.mxu0 0
        %1926 = vmatprep.subr.bf16.mxu0 0
        %1927 = vmatpush2.bf16.msra.mxu0 0
        %1928 = vmatprep.subr.bf16.mxu0 0
        %1929 = vmatpush2.bf16.msra.mxu0 0
        %1930 = vmatprep.subr.bf16.mxu0 0
        %1931 = vmatpush2.bf16.msra.mxu0 0
        %1932 = vmatprep.subr.bf16.mxu0 0
        %1933 = vmatpush2.bf16.msra.mxu0 0
        %1934 = vmatprep.mubr.bf16.mxu0 0
        %1935 = vmatmul.mubr.bf16.gmra.mxu0 %v1848
        %v1936 = vpop.f32.mrf.mxu0
        %v1937 = vadd.f32 %v1853, %v1936
        %v1938 = vpop.f32.mrf.mxu0
        %v1939 = vpop.f32.mrf.mxu0
        %v1940 = vpop.f32.mrf.mxu0
        %1941 = vdwg.mxu0
        %1942 = vst [vmem:[%s296] sm:$0xff] %v1937
        %p1943 = scmp.lt.s32.totalorder %s19, 1
        %s1944 = scalar_select %p1943, %s19, 1
        %s1945 = smul.addr %s1944, 8
        %s1946 = scalar_lea.vmem %s6, %s1945
        // Predicated region
        $region53: #{_forward.1} parent=43 // pred_check
          %p1947 = pneg %p173
        $region54: #{_forward.1} parent=43 // pred_check_branch
          %1949 = sbr.rel (%p1947) target = $region56
        $region55: #{_forward.1} parent=43 // pred_region
          _
        $region56: #{_forward.1} parent=43 // pred_fallthru
          _
      $region44: #{_forward.1} parent=5 // pred_fallthru
        _
      %p1950 = scmp.le.s32.totalorder 2, %s14
      // Predicated region
      $region57: #{_forward.1} parent=5 // pred_check
        %p1951 = pneg %p1950
      $region58: #{_forward.1} parent=5 // pred_check_branch
        %1953 = sbr.rel (%p1951) target = $region60
      $region59: #{_forward.1} parent=5 // pred_region
        %s1954 = ssub.s32 %s14, 2
        // Predicated region
        $region61: #{_forward.1} parent=59 // pred_check
          %p1955 = pneg %p179
        $region62: #{_forward.1} parent=59 // pred_check_branch
          %1957 = sbr.rel (%p1955) target = $region64
        $region63: #{_forward.1} parent=59 // pred_region
          %p1958 = scmp.lt.s32.totalorder %s20, 1
          %s1959 = scalar_select %p1958, %s20, 1
          %s1960 = smul.addr %s1959, 8
          %s1961 = scalar_lea.vmem %s6, %s1960
        $region64: #{_forward.1} parent=59 // pred_fallthru
          _
      $region60: #{_forward.1} parent=5 // pred_fallthru
        _
    $region6: #{_forward.1} parent=1 // loop_footer
      %s18 = sadd.s32 1, %s14
    $region7: #{_forward.1} parent=1 // loop_footer_branch
      %13 = sbr.rel target = $region3
    $region8: #{_forward.1} parent=1 // loop_exit
      _
    %1962 = vsyncpa [#allocation3], 1
    %s1963 = scalar_lea.sflag [#allocation3], 1
    %1964 = vsyncpa %s1963, 1
    %1965 = vsyncpa [#allocation5], 1

// kernel: _forward.1
$region0: #{_forward.1}
  #allocation0 [shape = 'u32[]', space=smem, size = 0x4, offset = 0x4, fixed_abs, tag = 'smem constant byte address 0x4 - core index']
  #allocation1 [shape = 'u32[144,128]{1,0:T(1,128)}', space=vmem, size = 0x12000, scoped, tag = 'internal scratch']
  %s0 = inlined_call_operand.vmem [shape: f32[16,128], index: 0, kind: input, shape index: {}]
  %s1 = inlined_call_operand.vmem [shape: f32[16,256], index: 1, kind: input, shape index: {}]
  %s2 = inlined_call_operand.hbm [shape: bf16[7,128,128], index: 2, kind: input, shape index: {}]
  %s3 = inlined_call_operand.hbm [shape: bf16[3,128,256], index: 3, kind: input, shape index: {}]
  %s4 = inlined_call_operand.vmem [shape: bf16[256,256], index: 4, kind: input, shape index: {}]
  %s5 = inlined_call_operand.vmem [shape: f32[24,128], index: 5, kind: input, shape index: {}]
  %s6 = inlined_call_operand.vmem [shape: f32[16,128], index: 6, kind: output, shape index: {}]
  %s7 = sld [smem:[#allocation0]]
  $region65: #{_forward.1} parent=0
    _
  %s9 = ssub.s32 1, %s7
  %s10 = scalar_select 0, %s9, %s7
  $region1: #{_forward.1} parent=0
    #allocation2 [shape = 'u8[229376]{0}', space=vmem, size = 0x38000, scoped, tag = 'input window, operand 2, single buffered']
    #allocation3 [shape = 's32[2]{0}', space=sflag, size = 0x8, scoped, tag = 'scoped memory for _forward.1']
    #allocation4 [shape = 'u8[196608]{0}', space=vmem, size = 0x30000, scoped, tag = 'input window, operand 3, single buffered']
    #allocation5 [shape = 's32[1]{0}', space=sflag, size = 0x4, scoped, tag = 'scoped memory for _forward.1']
    %11 = vsyncpa [#allocation3], 0
    %12 = vsyncpa [#allocation5], 0
    loop: start=0, step=1, limit=4
    $region2: #{_forward.1} parent=1 // loop_pre_header
      _
    $region3: #{_forward.1} parent=1 // loop_header
      %s14 = sphi 0, %s18
      %p15 = scmp.ge.s32.totalorder %s14, 4
      %s24 = sphi 0, %s26
      %s27 = sphi 0, %s24
      %s28 = sphi 0, %s27
      %s44 = sphi 0, %s28
      %s50 = sphi 0, %s52
      %s53 = sphi 0, %s50
      %s54 = sphi 0, %s53
      %s70 = sphi 0, %s54
      %s74 = sphi 0, %s74
      %s76 = sphi 0, %s74
      %s77 = sphi 0, %s76
      %s91 = sphi 0, %s77
      %s95 = sphi 0, %s95
      %s97 = sphi 0, %s95
      %s98 = sphi 0, %s97
      %s112 = sphi 0, %s98
      %s116 = sphi 0, %s116
      %s118 = sphi 0, %s116
      %s119 = sphi 0, %s118
      %s133 = sphi 0, %s119
      %s137 = sphi 0, %s137
      %s139 = sphi 0, %s137
      %s140 = sphi 0, %s139
      %s154 = sphi 0, %s140
      %s160 = sphi 0, %s162
      %s163 = sphi 0, %s160
      %s164 = sphi 0, %s163
      %s180 = sphi 0, %s164
    $region4: #{_forward.1} parent=1 // loop_header_branch
      %17 = sbr.rel (%p15) target = $region8
    $region5: #{_forward.1} parent=1 // loop_body
      %s19 = ssub.s32 %s14, 1
      %s20 = ssub.s32 %s14, 2
      %s21 = sadd.s32 %s14, 1
      %s22 = ssub.s32 %s14, %s21
      %p23 = scmp.eq.s32.totalorder %s22, 0
      %s25 = sadd.s32 %s24, 1
      %s26 = scalar_select %p23, %s24, %s25
      %p29 = pneg %p23
      %p30 = scmp.eq.s32.totalorder %s14, 1
      %p31 = por %p29, %p30
      %p32 = scmp.ne.s32.totalorder %s24, %s27
      %p33 = scmp.eq.s32.totalorder %s14, 0
      %p34 = por %p32, %p33
      %p35 = scmp.ne.s32.totalorder %s24, %s27
      %p36 = scmp.eq.s32.totalorder %s19, 1
      %p37 = por %p35, %p36
      %p38 = scmp.ne.s32.totalorder %s27, %s28
      %p39 = scmp.eq.s32.totalorder %s19, 0
      %p40 = por %p38, %p39
      %p41 = scmp.ne.s32.totalorder %s27, %s28
      %p42 = scmp.eq.s32.totalorder %s20, 1
      %p43 = por %p41, %p42
      %p45 = scmp.ne.s32.totalorder %s28, %s44
      %p46 = scmp.eq.s32.totalorder %s20, 0
      %p47 = por %p45, %p46
      %s48 = ssub.s32 %s14, %s21
      %p49 = scmp.eq.s32.totalorder %s48, 0
      %s51 = sadd.s32 %s50, 1
      %s52 = scalar_select %p49, %s50, %s51
      %p55 = pneg %p49
      %p56 = scmp.eq.s32.totalorder %s14, 1
      %p57 = por %p55, %p56
      %p58 = scmp.ne.s32.totalorder %s50, %s53
      %p59 = scmp.eq.s32.totalorder %s14, 0
      %p60 = por %p58, %p59
      %p61 = scmp.ne.s32.totalorder %s50, %s53
      %p62 = scmp.eq.s32.totalorder %s19, 1
      %p63 = por %p61, %p62
      %p64 = scmp.ne.s32.totalorder %s53, %s54
      %p65 = scmp.eq.s32.totalorder %s19, 0
      %p66 = por %p64, %p65
      %p67 = scmp.ne.s32.totalorder %s53, %s54
      %p68 = scmp.eq.s32.totalorder %s20, 1
      %p69 = por %p67, %p68
      %p71 = scmp.ne.s32.totalorder %s54, %s70
      %p72 = scmp.eq.s32.totalorder %s20, 0
      %p73 = por %p71, %p72
      %s75 = sadd.s32 %s74, 1
      %p78 = scmp.eq.s32.totalorder %s14, 1
      %p79 = scmp.ne.s32.totalorder %s74, %s76
      %p80 = scmp.eq.s32.totalorder %s14, 0
      %p81 = por %p79, %p80
      %p82 = scmp.ne.s32.totalorder %s74, %s76
      %p83 = scmp.eq.s32.totalorder %s19, 1
      %p84 = por %p82, %p83
      %p85 = scmp.ne.s32.totalorder %s76, %s77
      %p86 = scmp.eq.s32.totalorder %s19, 0
      %p87 = por %p85, %p86
      %p88 = scmp.ne.s32.totalorder %s76, %s77
      %p89 = scmp.eq.s32.totalorder %s20, 1
      %p90 = por %p88, %p89
      %p92 = scmp.ne.s32.totalorder %s77, %s91
      %p93 = scmp.eq.s32.totalorder %s20, 0
      %p94 = por %p92, %p93
      %s96 = sadd.s32 %s95, 1
      %p99 = scmp.eq.s32.totalorder %s14, 1
      %p100 = scmp.ne.s32.totalorder %s95, %s97
      %p101 = scmp.eq.s32.totalorder %s14, 0
      %p102 = por %p100, %p101
      %p103 = scmp.ne.s32.totalorder %s95, %s97
      %p104 = scmp.eq.s32.totalorder %s19, 1
      %p105 = por %p103, %p104
      %p106 = scmp.ne.s32.totalorder %s97, %s98
      %p107 = scmp.eq.s32.totalorder %s19, 0
      %p108 = por %p106, %p107
      %p109 = scmp.ne.s32.totalorder %s97, %s98
      %p110 = scmp.eq.s32.totalorder %s20, 1
      %p111 = por %p109, %p110
      %p113 = scmp.ne.s32.totalorder %s98, %s112
      %p114 = scmp.eq.s32.totalorder %s20, 0
      %p115 = por %p113, %p114
      %s117 = sadd.s32 %s116, 1
      %p120 = scmp.eq.s32.totalorder %s14, 1
      %p121 = scmp.ne.s32.totalorder %s116, %s118
      %p122 = scmp.eq.s32.totalorder %s14, 0
      %p123 = por %p121, %p122
      %p124 = scmp.ne.s32.totalorder %s116, %s118
      %p125 = scmp.eq.s32.totalorder %s19, 1
      %p126 = por %p124, %p125
      %p127 = scmp.ne.s32.totalorder %s118, %s119
      %p128 = scmp.eq.s32.totalorder %s19, 0
      %p129 = por %p127, %p128
      %p130 = scmp.ne.s32.totalorder %s118, %s119
      %p131 = scmp.eq.s32.totalorder %s20, 1
      %p132 = por %p130, %p131
      %p134 = scmp.ne.s32.totalorder %s119, %s133
      %p135 = scmp.eq.s32.totalorder %s20, 0
      %p136 = por %p134, %p135
      %s138 = sadd.s32 %s137, 1
      %p141 = scmp.eq.s32.totalorder %s14, 1
      %p142 = scmp.ne.s32.totalorder %s137, %s139
      %p143 = scmp.eq.s32.totalorder %s14, 0
      %p144 = por %p142, %p143
      %p145 = scmp.ne.s32.totalorder %s137, %s139
      %p146 = scmp.eq.s32.totalorder %s19, 1
      %p147 = por %p145, %p146
      %p148 = scmp.ne.s32.totalorder %s139, %s140
      %p149 = scmp.eq.s32.totalorder %s19, 0
      %p150 = por %p148, %p149
      %p151 = scmp.ne.s32.totalorder %s139, %s140
      %p152 = scmp.eq.s32.totalorder %s20, 1
      %p153 = por %p151, %p152
      %p155 = scmp.ne.s32.totalorder %s140, %s154
      %p156 = scmp.eq.s32.totalorder %s20, 0
      %p157 = por %p155, %p156
      %s158 = ssub.s32 %s14, %s21
      %p159 = scmp.eq.s32.totalorder %s158, 0
      %s161 = sadd.s32 %s160, 1
      %s162 = scalar_select %p159, %s160, %s161
      %p165 = pneg %p159
      %p166 = scmp.eq.s32.totalorder %s14, 1
      %p167 = por %p165, %p166
      %p168 = scmp.ne.s32.totalorder %s160, %s163
      %p169 = scmp.eq.s32.totalorder %s14, 0
      %p170 = por %p168, %p169
      %p171 = scmp.ne.s32.totalorder %s160, %s163
      %p172 = scmp.eq.s32.totalorder %s19, 1
      %p173 = por %p171, %p172
      %p174 = scmp.ne.s32.totalorder %s163, %s164
      %p175 = scmp.eq.s32.totalorder %s19, 0
      %p176 = por %p174, %p175
      %p177 = scmp.ne.s32.totalorder %s163, %s164
      %p178 = scmp.eq.s32.totalorder %s20, 1
      %p179 = por %p177, %p178
      %p181 = scmp.ne.s32.totalorder %s164, %s180
      %p182 = scmp.eq.s32.totalorder %s20, 0
      %p183 = por %p181, %p182
      %p184 = scmp.le.s32.totalorder 1, %s14
      %p185 = scmp.lt.s32.totalorder %s14, 3
      %p186 = pnand %p184, %p185
      %p187 = pneg %p186
      // Predicated region
      $region9: #{_forward.1} parent=5 // pred_check
        _
      $region10: #{_forward.1} parent=5 // pred_check_branch
        %189 = sbr.rel (%p186) target = $region12
      $region11: #{_forward.1} parent=5 // pred_region
        %s190 = ssub.s32 %s14, 1
        // Predicated region
        $region13: #{_forward.1} parent=11 // pred_check
          %p191 = pneg %p87
        $region14: #{_forward.1} parent=11 // pred_check_branch
          %193 = sbr.rel (%p191) target = $region16
        $region15: #{_forward.1} parent=11 // pred_region
          %s195 = ssub.s32 7168, 7168
          %196 = vsyncadd [#allocation3], %s195
          %s197 = sshll.u32 [#allocation2], 4
          %s198 = int_to_ptr.vmem [resolvable:$true] %s197
          %203 = dma.hbm_to_vmem [thread:$0]  %s2, 7168, %s198, [#allocation3], 64, 64, 4
        $region16: #{_forward.1} parent=11 // pred_fallthru
          _
        // Predicated region
        $region17: #{_forward.1} parent=11 // pred_check
          %p204 = pneg %p108
        $region18: #{_forward.1} parent=11 // pred_check_branch
          %206 = sbr.rel (%p204) target = $region20
        $region19: #{_forward.1} parent=11 // pred_region
          %s208 = ssub.s32 6144, 6144
          %209 = vsyncadd [#allocation5], %s208
          %s210 = sshll.u32 [#allocation4], 4
          %s211 = int_to_ptr.vmem [resolvable:$true] %s210
          %216 = dma.hbm_to_vmem [thread:$0]  %s3, 6144, %s211, [#allocation5], 128, 128, 8
        $region20: #{_forward.1} parent=11 // pred_fallthru
          _
        // Predicated region
        $region21: #{_forward.1} parent=11 // pred_check
          %p217 = pneg %p129
        $region22: #{_forward.1} parent=11 // pred_check_branch
          %219 = sbr.rel (%p217) target = $region24
        $region23: #{_forward.1} parent=11 // pred_region
          _
        $region24: #{_forward.1} parent=11 // pred_fallthru
          _
        // Predicated region
        $region25: #{_forward.1} parent=11 // pred_check
          %p220 = pneg %p150
        $region26: #{_forward.1} parent=11 // pred_check_branch
          %222 = sbr.rel (%p220) target = $region28
        $region27: #{_forward.1} parent=11 // pred_region
          _
        $region28: #{_forward.1} parent=11 // pred_fallthru
          _
      $region12: #{_forward.1} parent=5 // pred_fallthru
        _
      %p223 = scmp.lt.s32.totalorder %s14, 2
      // Predicated region
      $region29: #{_forward.1} parent=5 // pred_check
        %p224 = pneg %p223
      $region30: #{_forward.1} parent=5 // pred_check_branch
        %226 = sbr.rel (%p224) target = $region32
      $region31: #{_forward.1} parent=5 // pred_region
        // Predicated region
        $region33: #{_forward.1} parent=31 // pred_check
          %p227 = pneg %p34
        $region34: #{_forward.1} parent=31 // pred_check_branch
          %229 = sbr.rel (%p227) target = $region36
        $region35: #{_forward.1} parent=31 // pred_region
          %p230 = scmp.lt.s32.totalorder %s14, 1
          %s231 = scalar_select %p230, %s14, 1
          %s232 = smul.addr %s231, 8
          %s233 = scalar_lea.vmem %s0, %s232
        $region36: #{_forward.1} parent=31 // pred_fallthru
          _
        // Predicated region
        $region37: #{_forward.1} parent=31 // pred_check
          %p234 = pneg %p60
        $region38: #{_forward.1} parent=31 // pred_check_branch
          %236 = sbr.rel (%p234) target = $region40
        $region39: #{_forward.1} parent=31 // pred_region
          %p237 = scmp.lt.s32.totalorder %s14, 1
          %s238 = scalar_select %p237, %s14, 1
          %s239 = smul.addr %s238, 2
          %s240 = smul.addr %s239, 8
          %s241 = scalar_lea.vmem %s1, %s240
        $region40: #{_forward.1} parent=31 // pred_fallthru
          _
      $region32: #{_forward.1} parent=5 // pred_fallthru
        _
      %p242 = scmp.le.s32.totalorder 1, %s14
      %p243 = scmp.lt.s32.totalorder %s14, 3
      %p244 = pnand %p242, %p243
      %p245 = pneg %p244
      // Predicated region
      $region41: #{_forward.1} parent=5 // pred_check
        _
      $region42: #{_forward.1} parent=5 // pred_check_branch
        %247 = sbr.rel (%p244) target = $region44
      $region43: #{_forward.1} parent=5 // pred_region
        %s248 = ssub.s32 %s14, 1
        // Predicated region
        $region45: #{_forward.1} parent=43 // pred_check
          %p249 = pneg %p87
        $region46: #{_forward.1} parent=43 // pred_check_branch
          %251 = sbr.rel (%p249) target = $region48
        $region47: #{_forward.1} parent=43 // pred_region
          %252 = dma.done [#allocation3], 7168
        $region48: #{_forward.1} parent=43 // pred_fallthru
          _
        // Predicated region
        $region49: #{_forward.1} parent=43 // pred_check
          %p253 = pneg %p108
        $region50: #{_forward.1} parent=43 // pred_check_branch
          %255 = sbr.rel (%p253) target = $region52
        $region51: #{_forward.1} parent=43 // pred_region
          %256 = dma.done [#allocation5], 6144
        $region52: #{_forward.1} parent=43 // pred_fallthru
          _
        %p257 = scmp.lt.s32.totalorder %s19, 1
        %s258 = scalar_select %p257, %s19, 1
        %s259 = smul.addr %s258, 8
        %s260 = scalar_lea.vmem %s0, %s259
        %p261 = pneg %p40
        %p262 = pneg %p37
        %p263 = scmp.lt.s32.totalorder %s19, 1
        %s264 = scalar_select %p263, %s19, 1
        %s265 = smul.addr %s264, 2
        %s266 = smul.addr %s265, 8
        %s267 = scalar_lea.vmem %s1, %s266
        %p268 = pneg %p66
        %p269 = pneg %p63
        %p270 = pneg %p87
        %p271 = pneg %p84
        %p272 = pneg %p108
        %p273 = pneg %p105
        %p274 = pneg %p129
        %p275 = pneg %p126
        %p276 = pneg %p150
        %p277 = pneg %p147
        %p278 = pneg %p176
        %p279 = pneg %p173
        %p280 = scmp.lt.s32.totalorder %s19, 1
        %s281 = scalar_select %p280, %s19, 1
        %s282 = smul.addr %s281, 8
        %s283 = scalar_lea.vmem %s6, %s282
        %p284 = scmp.lt.s32.totalorder %s19, 1
        %s285 = scalar_select %p284, %s19, 1
        %s286 = smul.addr %s285, 8
        %s287 = scalar_lea.vmem %s0, %s286
        %p288 = scmp.lt.s32.totalorder %s19, 1
        %s289 = scalar_select %p288, %s19, 1
        %s290 = smul.addr %s289, 2
        %s291 = smul.addr %s290, 8
        %s292 = scalar_lea.vmem %s1, %s291
        %p293 = scmp.lt.s32.totalorder %s19, 1
        %s294 = scalar_select %p293, %s19, 1
        %s295 = smul.addr %s294, 8
        %s296 = scalar_lea.vmem %s6, %s295
        %v298 = vld [vmem:[%s292] sm:$0xff]
        %v299 = vld [vmem:[%s292 + $0x8] sm:$0xff]
        %v300 = vld [vmem:[%s4] sm:$0xff]
        %v301 = vld [vmem:[%s4 + $0x8] sm:$0xff]
        %v302 = vld [vmem:[%s4 + $0x10] sm:$0xff]
        %v303 = vld [vmem:[%s4 + $0x18] sm:$0xff]
        %v304 = vld [vmem:[%s4 + $0x20] sm:$0xff]
        %v305 = vld [vmem:[%s4 + $0x28] sm:$0xff]
        %v306 = vld [vmem:[%s4 + $0x30] sm:$0xff]
        %v307 = vld [vmem:[%s4 + $0x38] sm:$0xff]
        %v308 = vld [vmem:[%s4 + $0x40] sm:$0xff]
        %v309 = vld [vmem:[%s4 + $0x48] sm:$0xff]
        %v310 = vld [vmem:[%s4 + $0x50] sm:$0xff]
        %v311 = vld [vmem:[%s4 + $0x58] sm:$0xff]
        %v312 = vld [vmem:[%s4 + $0x60] sm:$0xff]
        %v313 = vld [vmem:[%s4 + $0x68] sm:$0xff]
        %v314 = vld [vmem:[%s4 + $0x70] sm:$0xff]
        %v315 = vld [vmem:[%s4 + $0x78] sm:$0xff]
        %v316 = vld [vmem:[%s4 + $0x80] sm:$0xff]
        %v317 = vld [vmem:[%s4 + $0x88] sm:$0xff]
        %v318 = vld [vmem:[%s4 + $0x90] sm:$0xff]
        %v319 = vld [vmem:[%s4 + $0x98] sm:$0xff]
        %v320 = vld [vmem:[%s4 + $0xa0] sm:$0xff]
        %v321 = vld [vmem:[%s4 + $0xa8] sm:$0xff]
        %v322 = vld [vmem:[%s4 + $0xb0] sm:$0xff]
        %v323 = vld [vmem:[%s4 + $0xb8] sm:$0xff]
        %v324 = vld [vmem:[%s4 + $0xc0] sm:$0xff]
        %v325 = vld [vmem:[%s4 + $0xc8] sm:$0xff]
        %v326 = vld [vmem:[%s4 + $0xd0] sm:$0xff]
        %v327 = vld [vmem:[%s4 + $0xd8] sm:$0xff]
        %v328 = vld [vmem:[%s4 + $0xe0] sm:$0xff]
        %v329 = vld [vmem:[%s4 + $0xe8] sm:$0xff]
        %v330 = vld [vmem:[%s4 + $0xf0] sm:$0xff]
        %v331 = vld [vmem:[%s4 + $0xf8] sm:$0xff]
        %v332 = vpack.c.bf16 %v298, %v298
        %v333 = vpack.c.bf16 %v299, %v299
        %v366 = vunpack.c.l.b16 %v300
        %v367 = vunpack.c.h.b16 %v300
        %v368 = vunpack.c.l.b16 %v301
        %v369 = vunpack.c.h.b16 %v301
        %v370 = vunpack.c.l.b16 %v302
        %v371 = vunpack.c.h.b16 %v302
        %v372 = vunpack.c.l.b16 %v303
        %v373 = vunpack.c.h.b16 %v303
        %v374 = vunpack.c.l.b16 %v304
        %v375 = vunpack.c.h.b16 %v304
        %v376 = vunpack.c.l.b16 %v305
        %v377 = vunpack.c.h.b16 %v305
        %v378 = vunpack.c.l.b16 %v306
        %v379 = vunpack.c.h.b16 %v306
        %v380 = vunpack.c.l.b16 %v307
        %v381 = vunpack.c.h.b16 %v307
        %v382 = vunpack.c.l.b16 %v308
        %v383 = vunpack.c.h.b16 %v308
        %v384 = vunpack.c.l.b16 %v309
        %v385 = vunpack.c.h.b16 %v309
        %v386 = vunpack.c.l.b16 %v310
        %v387 = vunpack.c.h.b16 %v310
        %v388 = vunpack.c.l.b16 %v311
        %v389 = vunpack.c.h.b16 %v311
        %v390 = vunpack.c.l.b16 %v312
        %v391 = vunpack.c.h.b16 %v312
        %v392 = vunpack.c.l.b16 %v313
        %v393 = vunpack.c.h.b16 %v313
        %v394 = vunpack.c.l.b16 %v314
        %v395 = vunpack.c.h.b16 %v314
        %v396 = vunpack.c.l.b16 %v315
        %v397 = vunpack.c.h.b16 %v315
        %v398 = vunpack.c.l.b16 %v316
        %v399 = vunpack.c.h.b16 %v316
        %v400 = vunpack.c.l.b16 %v317
        %v401 = vunpack.c.h.b16 %v317
        %v402 = vunpack.c.l.b16 %v318
        %v403 = vunpack.c.h.b16 %v318
        %v404 = vunpack.c.l.b16 %v319
        %v405 = vunpack.c.h.b16 %v319
        %v406 = vunpack.c.l.b16 %v320
        %v407 = vunpack.c.h.b16 %v320
        %v408 = vunpack.c.l.b16 %v321
        %v409 = vunpack.c.h.b16 %v321
        %v410 = vunpack.c.l.b16 %v322
        %v411 = vunpack.c.h.b16 %v322
        %v412 = vunpack.c.l.b16 %v323
        %v413 = vunpack.c.h.b16 %v323
        %v414 = vunpack.c.l.b16 %v324
        %v415 = vunpack.c.h.b16 %v324
        %v416 = vunpack.c.l.b16 %v325
        %v417 = vunpack.c.h.b16 %v325
        %v418 = vunpack.c.l.b16 %v326
        %v419 = vunpack.c.h.b16 %v326
        %v420 = vunpack.c.l.b16 %v327
        %v421 = vunpack.c.h.b16 %v327
        %v422 = vunpack.c.l.b16 %v328
        %v423 = vunpack.c.h.b16 %v328
        %v424 = vunpack.c.l.b16 %v329
        %v425 = vunpack.c.h.b16 %v329
        %v426 = vunpack.c.l.b16 %v330
        %v427 = vunpack.c.h.b16 %v330
        %v428 = vunpack.c.l.b16 %v331
        %v429 = vunpack.c.h.b16 %v331
        %v430 = vpack.c.b16 %v368, %v366
        %v431 = vpack.c.b16 %v369, %v367
        %v432 = vpack.c.b16 %v372, %v370
        %v433 = vpack.c.b16 %v373, %v371
        %v434 = vpack.c.b16 %v376, %v374
        %v435 = vpack.c.b16 %v377, %v375
        %v436 = vpack.c.b16 %v380, %v378
        %v437 = vpack.c.b16 %v381, %v379
        %v438 = vpack.c.b16 %v384, %v382
        %v439 = vpack.c.b16 %v385, %v383
        %v440 = vpack.c.b16 %v388, %v386
        %v441 = vpack.c.b16 %v389, %v387
        %v442 = vpack.c.b16 %v392, %v390
        %v443 = vpack.c.b16 %v393, %v391
        %v444 = vpack.c.b16 %v396, %v394
        %v445 = vpack.c.b16 %v397, %v395
        %v446 = vpack.c.b16 %v400, %v398
        %v447 = vpack.c.b16 %v401, %v399
        %v448 = vpack.c.b16 %v404, %v402
        %v449 = vpack.c.b16 %v405, %v403
        %v450 = vpack.c.b16 %v408, %v406
        %v451 = vpack.c.b16 %v409, %v407
        %v452 = vpack.c.b16 %v412, %v410
        %v453 = vpack.c.b16 %v413, %v411
        %v454 = vpack.c.b16 %v416, %v414
        %v455 = vpack.c.b16 %v417, %v415
        %v456 = vpack.c.b16 %v420, %v418
        %v457 = vpack.c.b16 %v421, %v419
        %v458 = vpack.c.b16 %v424, %v422
        %v459 = vpack.c.b16 %v425, %v423
        %v460 = vpack.c.b16 %v428, %v426
        %v461 = vpack.c.b16 %v429, %v427
        %494 = vmatprep.subr.bf16.mxu0 %v445
        %495 = vmatpush1.bf16.msra.mxu0 %v444
        %496 = vmatprep.subr.bf16.mxu0 %v443
        %497 = vmatpush1.bf16.msra.mxu0 %v442
        %498 = vmatprep.subr.bf16.mxu0 %v441
        %499 = vmatpush1.bf16.msra.mxu0 %v440
        %500 = vmatprep.subr.bf16.mxu0 %v439
        %501 = vmatpush1.bf16.msra.mxu0 %v438
        %502 = vmatprep.subr.bf16.mxu0 %v437
        %503 = vmatpush1.bf16.msra.mxu0 %v436
        %504 = vmatprep.subr.bf16.mxu0 %v435
        %505 = vmatpush1.bf16.msra.mxu0 %v434
        %506 = vmatprep.subr.bf16.mxu0 %v433
        %507 = vmatpush1.bf16.msra.mxu0 %v432
        %508 = vmatprep.subr.bf16.mxu0 %v431
        %509 = vmatpush1.bf16.msra.mxu0 %v430
        %510 = vmatprep.subr.bf16.mxu0 %v461
        %511 = vmatpush2.bf16.msra.mxu0 %v460
        %512 = vmatprep.subr.bf16.mxu0 %v459
        %513 = vmatpush2.bf16.msra.mxu0 %v458
        %514 = vmatprep.subr.bf16.mxu0 %v457
        %515 = vmatpush2.bf16.msra.mxu0 %v456
        %516 = vmatprep.subr.bf16.mxu0 %v455
        %517 = vmatpush2.bf16.msra.mxu0 %v454
        %518 = vmatprep.subr.bf16.mxu0 %v453
        %519 = vmatpush2.bf16.msra.mxu0 %v452
        %520 = vmatprep.subr.bf16.mxu0 %v451
        %521 = vmatpush2.bf16.msra.mxu0 %v450
        %522 = vmatprep.subr.bf16.mxu0 %v449
        %523 = vmatpush2.bf16.msra.mxu0 %v448
        %524 = vmatprep.subr.bf16.mxu0 %v447
        %525 = vmatpush2.bf16.msra.mxu0 %v446
        %526 = vmatprep.mubr.bf16.mxu0 %v333
        %527 = vmatmul.mubr.bf16.gmra.mxu0 %v332
        %v528 = vpop.f32.mrf.mxu0
        %v529 = vadd.f32 0.0, %v528
        %v530 = vpop.f32.mrf.mxu0
        %v531 = vadd.f32 0.0, %v530
        %v532 = vpop.f32.mrf.mxu0
        %v533 = vpop.f32.mrf.mxu0
        %534 = vdwg.mxu0
        %v535 = vld [vmem:[%s5] sm:$0x1]
        %v536 = vlaneseq
        %v537 = vshrl.u32 %v536, 7
        %v538 = vsub.s32 0, %v537
        %v539 = vrot.slane %v535, %v538
        %v540 = vadd.f32 %v529, %v539
        %v541 = vxor.u32 %v540, 2147483648
        %v542 = vmul.f32 %v541, 1.442695
        %v543 = vpow.pop %v542
        %v544 = vadd.f32 %v543, 1.0
        %v545 = vrcp.pop %v544
        %v546 = vmul.f32 1.0, %v545
        %v547 = vmul.f32 %v540, %v546
        %v548 = vld [vmem:[#allocation2] sm:$0xf]
        %v549 = vld [vmem:[#allocation2 + $0x4] sm:$0xf]
        %v550 = vld [vmem:[#allocation2 + $0x8] sm:$0xf]
        %v551 = vld [vmem:[#allocation2 + $0xc] sm:$0xf]
        %v552 = vld [vmem:[#allocation2 + $0x10] sm:$0xf]
        %v553 = vld [vmem:[#allocation2 + $0x14] sm:$0xf]
        %v554 = vld [vmem:[#allocation2 + $0x18] sm:$0xf]
        %v555 = vld [vmem:[#allocation2 + $0x1c] sm:$0xf]
        %v556 = vld [vmem:[#allocation2 + $0x20] sm:$0xf]
        %v557 = vld [vmem:[#allocation2 + $0x24] sm:$0xf]
        %v558 = vld [vmem:[#allocation2 + $0x28] sm:$0xf]
        %v559 = vld [vmem:[#allocation2 + $0x2c] sm:$0xf]
        %v560 = vld [vmem:[#allocation2 + $0x30] sm:$0xf]
        %v561 = vld [vmem:[#allocation2 + $0x34] sm:$0xf]
        %v562 = vld [vmem:[#allocation2 + $0x38] sm:$0xf]
        %v563 = vld [vmem:[#allocation2 + $0x3c] sm:$0xf]
        %v564 = vpack.c.bf16 %v547, %v547
        %v565 = vld [vmem:[%s5 + $0x1] sm:$0x1]
        %v566 = vlaneseq
        %v567 = vshrl.u32 %v566, 7
        %v568 = vsub.s32 0, %v567
        %v569 = vrot.slane %v565, %v568
        %v586 = vunpack.c.l.b16 %v548
        %v587 = vunpack.c.l.b16 %v549
        %v588 = vunpack.c.l.b16 %v550
        %v589 = vunpack.c.l.b16 %v551
        %v590 = vunpack.c.l.b16 %v552
        %v591 = vunpack.c.l.b16 %v553
        %v592 = vunpack.c.l.b16 %v554
        %v593 = vunpack.c.l.b16 %v555
        %v594 = vunpack.c.l.b16 %v556
        %v595 = vunpack.c.l.b16 %v557
        %v596 = vunpack.c.l.b16 %v558
        %v597 = vunpack.c.l.b16 %v559
        %v598 = vunpack.c.l.b16 %v560
        %v599 = vunpack.c.l.b16 %v561
        %v600 = vunpack.c.l.b16 %v562
        %v601 = vunpack.c.l.b16 %v563
        %v602 = vpack.c.b16 %v587, %v586
        %v603 = vpack.c.b16 %v589, %v588
        %v604 = vpack.c.b16 %v591, %v590
        %v605 = vpack.c.b16 %v593, %v592
        %v606 = vpack.c.b16 %v595, %v594
        %v607 = vpack.c.b16 %v597, %v596
        %v608 = vpack.c.b16 %v599, %v598
        %v609 = vpack.c.b16 %v601, %v600
        %618 = vmatprep.subr.bf16.mxu0 0
        %619 = vmatpush1.bf16.msra.mxu0 %v609
        %620 = vmatprep.subr.bf16.mxu0 0
        %621 = vmatpush1.bf16.msra.mxu0 %v608
        %622 = vmatprep.subr.bf16.mxu0 0
        %623 = vmatpush1.bf16.msra.mxu0 %v607
        %624 = vmatprep.subr.bf16.mxu0 0
        %625 = vmatpush1.bf16.msra.mxu0 %v606
        %626 = vmatprep.subr.bf16.mxu0 0
        %627 = vmatpush1.bf16.msra.mxu0 %v605
        %628 = vmatprep.subr.bf16.mxu0 0
        %629 = vmatpush1.bf16.msra.mxu0 %v604
        %630 = vmatprep.subr.bf16.mxu0 0
        %631 = vmatpush1.bf16.msra.mxu0 %v603
        %632 = vmatprep.subr.bf16.mxu0 0
        %633 = vmatpush1.bf16.msra.mxu0 %v602
        %634 = vmatprep.subr.bf16.mxu0 0
        %635 = vmatpush2.bf16.msra.mxu0 0
        %636 = vmatprep.subr.bf16.mxu0 0
        %637 = vmatpush2.bf16.msra.mxu0 0
        %638 = vmatprep.subr.bf16.mxu0 0
        %639 = vmatpush2.bf16.msra.mxu0 0
        %640 = vmatprep.subr.bf16.mxu0 0
        %641 = vmatpush2.bf16.msra.mxu0 0
        %642 = vmatprep.subr.bf16.mxu0 0
        %643 = vmatpush2.bf16.msra.mxu0 0
        %644 = vmatprep.subr.bf16.mxu0 0
        %645 = vmatpush2.bf16.msra.mxu0 0
        %646 = vmatprep.subr.bf16.mxu0 0
        %647 = vmatpush2.bf16.msra.mxu0 0
        %648 = vmatprep.subr.bf16.mxu0 0
        %649 = vmatpush2.bf16.msra.mxu0 0
        %650 = vmatprep.mubr.bf16.mxu0 0
        %651 = vmatmul.mubr.bf16.gmra.mxu0 %v564
        %v652 = vpop.f32.mrf.mxu0
        %v653 = vadd.f32 %v569, %v652
        %v654 = vpop.f32.mrf.mxu0
        %v655 = vpop.f32.mrf.mxu0
        %v656 = vpop.f32.mrf.mxu0
        %657 = vdwg.mxu0
        %v658 = vxor.u32 %v653, 2147483648
        %v659 = vmul.f32 %v658, 1.442695
        %v660 = vpow.pop %v659
        %v661 = vadd.f32 %v660, 1.0
        %v662 = vrcp.pop %v661
        %v663 = vmul.f32 1.0, %v662
        %v664 = vmul.f32 %v653, %v663
        %v665 = vld [vmem:[%s5 + $0x2] sm:$0x1]
        %v666 = vlaneseq
        %v667 = vshrl.u32 %v666, 7
        %v668 = vsub.s32 0, %v667
        %v669 = vrot.slane %v665, %v668
        %v670 = vadd.f32 %v531, %v669
        %v671 = vadd.f32 %v670, %v664
        %v672 = vld [vmem:[#allocation4] sm:$0xff]
        %v673 = vld [vmem:[#allocation4 + $0x8] sm:$0xff]
        %v674 = vld [vmem:[#allocation4 + $0x10] sm:$0xff]
        %v675 = vld [vmem:[#allocation4 + $0x18] sm:$0xff]
        %v676 = vld [vmem:[#allocation4 + $0x20] sm:$0xff]
        %v677 = vld [vmem:[#allocation4 + $0x28] sm:$0xff]
        %v678 = vld [vmem:[#allocation4 + $0x30] sm:$0xff]
        %v679 = vld [vmem:[#allocation4 + $0x38] sm:$0xff]
        %v680 = vld [vmem:[#allocation4 + $0x40] sm:$0xff]
        %v681 = vld [vmem:[#allocation4 + $0x48] sm:$0xff]
        %v682 = vld [vmem:[#allocation4 + $0x50] sm:$0xff]
        %v683 = vld [vmem:[#allocation4 + $0x58] sm:$0xff]
        %v684 = vld [vmem:[#allocation4 + $0x60] sm:$0xff]
        %v685 = vld [vmem:[#allocation4 + $0x68] sm:$0xff]
        %v686 = vld [vmem:[#allocation4 + $0x70] sm:$0xff]
        %v687 = vld [vmem:[#allocation4 + $0x78] sm:$0xff]
        %v688 = vpack.c.bf16 %v671, %v671
        %v705 = vunpack.c.l.b16 %v672
        %v706 = vunpack.c.h.b16 %v672
        %v707 = vunpack.c.l.b16 %v673
        %v708 = vunpack.c.h.b16 %v673
        %v709 = vunpack.c.l.b16 %v674
        %v710 = vunpack.c.h.b16 %v674
        %v711 = vunpack.c.l.b16 %v675
        %v712 = vunpack.c.h.b16 %v675
        %v713 = vunpack.c.l.b16 %v676
        %v714 = vunpack.c.h.b16 %v676
        %v715 = vunpack.c.l.b16 %v677
        %v716 = vunpack.c.h.b16 %v677
        %v717 = vunpack.c.l.b16 %v678
        %v718 = vunpack.c.h.b16 %v678
        %v719 = vunpack.c.l.b16 %v679
        %v720 = vunpack.c.h.b16 %v679
        %v721 = vunpack.c.l.b16 %v680
        %v722 = vunpack.c.h.b16 %v680
        %v723 = vunpack.c.l.b16 %v681
        %v724 = vunpack.c.h.b16 %v681
        %v725 = vunpack.c.l.b16 %v682
        %v726 = vunpack.c.h.b16 %v682
        %v727 = vunpack.c.l.b16 %v683
        %v728 = vunpack.c.h.b16 %v683
        %v729 = vunpack.c.l.b16 %v684
        %v730 = vunpack.c.h.b16 %v684
        %v731 = vunpack.c.l.b16 %v685
        %v732 = vunpack.c.h.b16 %v685
        %v733 = vunpack.c.l.b16 %v686
        %v734 = vunpack.c.h.b16 %v686
        %v735 = vunpack.c.l.b16 %v687
        %v736 = vunpack.c.h.b16 %v687
        %v737 = vpack.c.b16 %v707, %v705
        %v738 = vpack.c.b16 %v708, %v706
        %v739 = vpack.c.b16 %v711, %v709
        %v740 = vpack.c.b16 %v712, %v710
        %v741 = vpack.c.b16 %v715, %v713
        %v742 = vpack.c.b16 %v716, %v714
        %v743 = vpack.c.b16 %v719, %v717
        %v744 = vpack.c.b16 %v720, %v718
        %v745 = vpack.c.b16 %v723, %v721
        %v746 = vpack.c.b16 %v724, %v722
        %v747 = vpack.c.b16 %v727, %v725
        %v748 = vpack.c.b16 %v728, %v726
        %v749 = vpack.c.b16 %v731, %v729
        %v750 = vpack.c.b16 %v732, %v730
        %v751 = vpack.c.b16 %v735, %v733
        %v752 = vpack.c.b16 %v736, %v734
        %769 = vmatprep.subr.bf16.mxu0 %v752
        %770 = vmatpush1.bf16.msra.mxu0 %v751
        %771 = vmatprep.subr.bf16.mxu0 %v750
        %772 = vmatpush1.bf16.msra.mxu0 %v749
        %773 = vmatprep.subr.bf16.mxu0 %v748
        %774 = vmatpush1.bf16.msra.mxu0 %v747
        %775 = vmatprep.subr.bf16.mxu0 %v746
        %776 = vmatpush1.bf16.msra.mxu0 %v745
        %777 = vmatprep.subr.bf16.mxu0 %v744
        %778 = vmatpush1.bf16.msra.mxu0 %v743
        %779 = vmatprep.subr.bf16.mxu0 %v742
        %780 = vmatpush1.bf16.msra.mxu0 %v741
        %781 = vmatprep.subr.bf16.mxu0 %v740
        %782 = vmatpush1.bf16.msra.mxu0 %v739
        %783 = vmatprep.subr.bf16.mxu0 %v738
        %784 = vmatpush1.bf16.msra.mxu0 %v737
        %785 = vmatprep.subr.bf16.mxu0 0
        %786 = vmatpush2.bf16.msra.mxu0 0
        %787 = vmatprep.subr.bf16.mxu0 0
        %788 = vmatpush2.bf16.msra.mxu0 0
        %789 = vmatprep.subr.bf16.mxu0 0
        %790 = vmatpush2.bf16.msra.mxu0 0
        %791 = vmatprep.subr.bf16.mxu0 0
        %792 = vmatpush2.bf16.msra.mxu0 0
        %793 = vmatprep.subr.bf16.mxu0 0
        %794 = vmatpush2.bf16.msra.mxu0 0
        %795 = vmatprep.subr.bf16.mxu0 0
        %796 = vmatpush2.bf16.msra.mxu0 0
        %797 = vmatprep.subr.bf16.mxu0 0
        %798 = vmatpush2.bf16.msra.mxu0 0
        %799 = vmatprep.subr.bf16.mxu0 0
        %800 = vmatpush2.bf16.msra.mxu0 0
        %801 = vmatprep.mubr.bf16.mxu0 0
        %802 = vmatmul.mubr.bf16.gmra.mxu0 %v688
        %v803 = vpop.f32.mrf.mxu0
        %v804 = vadd.f32 0.0, %v803
        %v805 = vpop.f32.mrf.mxu0
        %v806 = vadd.f32 0.0, %v805
        %v807 = vpop.f32.mrf.mxu0
        %v808 = vpop.f32.mrf.mxu0
        %809 = vdwg.mxu0
        %v810 = vld [vmem:[%s5 + $0x3] sm:$0x1]
        %v811 = vlaneseq
        %v812 = vshrl.u32 %v811, 7
        %v813 = vsub.s32 0, %v812
        %v814 = vrot.slane %v810, %v813
        %v815 = vadd.f32 %v804, %v814
        %v816 = vmul.f32 %v815, 0.5
        %v817 = vmul.f32 %v815, 0.70710677
        %v818 = verf.f32.pop %v817
        %v819 = vadd.f32 %v818, 1.0
        %v820 = vmul.f32 %v816, %v819
        %v821 = vld [vmem:[%s5 + $0x4] sm:$0x1]
        %v822 = vlaneseq
        %v823 = vshrl.u32 %v822, 7
        %v824 = vsub.s32 0, %v823
        %v825 = vrot.slane %v821, %v824
        %v826 = vadd.f32 %v806, %v825
        %v827 = vmul.f32 %v826, 0.5
        %v828 = vmul.f32 %v826, 0.70710677
        %v829 = verf.f32.pop %v828
        %v830 = vadd.f32 %v829, 1.0
        %v831 = vmul.f32 %v827, %v830
        %v832 = vld [vmem:[%s287] sm:$0xff]
        %s833 = scalar_lea.vmem [#allocation2], 64
        %v834 = vld [vmem:[%s833] sm:$0xf]
        %v835 = vld [vmem:[%s833 + $0x4] sm:$0xf]
        %v836 = vld [vmem:[%s833 + $0x8] sm:$0xf]
        %v837 = vld [vmem:[%s833 + $0xc] sm:$0xf]
        %v838 = vld [vmem:[%s833 + $0x10] sm:$0xf]
        %v839 = vld [vmem:[%s833 + $0x14] sm:$0xf]
        %v840 = vld [vmem:[%s833 + $0x18] sm:$0xf]
        %v841 = vld [vmem:[%s833 + $0x1c] sm:$0xf]
        %v842 = vld [vmem:[%s833 + $0x20] sm:$0xf]
        %v843 = vld [vmem:[%s833 + $0x24] sm:$0xf]
        %v844 = vld [vmem:[%s833 + $0x28] sm:$0xf]
        %v845 = vld [vmem:[%s833 + $0x2c] sm:$0xf]
        %v846 = vld [vmem:[%s833 + $0x30] sm:$0xf]
        %v847 = vld [vmem:[%s833 + $0x34] sm:$0xf]
        %v848 = vld [vmem:[%s833 + $0x38] sm:$0xf]
        %v849 = vld [vmem:[%s833 + $0x3c] sm:$0xf]
        %v850 = vpack.c.bf16 %v832, %v832
        %v851 = vld [vmem:[%s5 + $0x5] sm:$0x1]
        %v852 = vlaneseq
        %v853 = vshrl.u32 %v852, 7
        %v854 = vsub.s32 0, %v853
        %v855 = vrot.slane %v851, %v854
        %v872 = vunpack.c.l.b16 %v834
        %v873 = vunpack.c.l.b16 %v835
        %v874 = vunpack.c.l.b16 %v836
        %v875 = vunpack.c.l.b16 %v837
        %v876 = vunpack.c.l.b16 %v838
        %v877 = vunpack.c.l.b16 %v839
        %v878 = vunpack.c.l.b16 %v840
        %v879 = vunpack.c.l.b16 %v841
        %v880 = vunpack.c.l.b16 %v842
        %v881 = vunpack.c.l.b16 %v843
        %v882 = vunpack.c.l.b16 %v844
        %v883 = vunpack.c.l.b16 %v845
        %v884 = vunpack.c.l.b16 %v846
        %v885 = vunpack.c.l.b16 %v847
        %v886 = vunpack.c.l.b16 %v848
        %v887 = vunpack.c.l.b16 %v849
        %v888 = vpack.c.b16 %v873, %v872
        %v889 = vpack.c.b16 %v875, %v874
        %v890 = vpack.c.b16 %v877, %v876
        %v891 = vpack.c.b16 %v879, %v878
        %v892 = vpack.c.b16 %v881, %v880
        %v893 = vpack.c.b16 %v883, %v882
        %v894 = vpack.c.b16 %v885, %v884
        %v895 = vpack.c.b16 %v887, %v886
        %904 = vmatprep.subr.bf16.mxu0 0
        %905 = vmatpush1.bf16.msra.mxu0 %v895
        %906 = vmatprep.subr.bf16.mxu0 0
        %907 = vmatpush1.bf16.msra.mxu0 %v894
        %908 = vmatprep.subr.bf16.mxu0 0
        %909 = vmatpush1.bf16.msra.mxu0 %v893
        %910 = vmatprep.subr.bf16.mxu0 0
        %911 = vmatpush1.bf16.msra.mxu0 %v892
        %912 = vmatprep.subr.bf16.mxu0 0
        %913 = vmatpush1.bf16.msra.mxu0 %v891
        %914 = vmatprep.subr.bf16.mxu0 0
        %915 = vmatpush1.bf16.msra.mxu0 %v890
        %916 = vmatprep.subr.bf16.mxu0 0
        %917 = vmatpush1.bf16.msra.mxu0 %v889
        %918 = vmatprep.subr.bf16.mxu0 0
        %919 = vmatpush1.bf16.msra.mxu0 %v888
        %920 = vmatprep.subr.bf16.mxu0 0
        %921 = vmatpush2.bf16.msra.mxu0 0
        %922 = vmatprep.subr.bf16.mxu0 0
        %923 = vmatpush2.bf16.msra.mxu0 0
        %924 = vmatprep.subr.bf16.mxu0 0
        %925 = vmatpush2.bf16.msra.mxu0 0
        %926 = vmatprep.subr.bf16.mxu0 0
        %927 = vmatpush2.bf16.msra.mxu0 0
        %928 = vmatprep.subr.bf16.mxu0 0
        %929 = vmatpush2.bf16.msra.mxu0 0
        %930 = vmatprep.subr.bf16.mxu0 0
        %931 = vmatpush2.bf16.msra.mxu0 0
        %932 = vmatprep.subr.bf16.mxu0 0
        %933 = vmatpush2.bf16.msra.mxu0 0
        %934 = vmatprep.subr.bf16.mxu0 0
        %935 = vmatpush2.bf16.msra.mxu0 0
        %936 = vmatprep.mubr.bf16.mxu0 0
        %937 = vmatmul.mubr.bf16.gmra.mxu0 %v850
        %v938 = vpop.f32.mrf.mxu0
        %v939 = vadd.f32 %v855, %v938
        %v940 = vpop.f32.mrf.mxu0
        %v941 = vpop.f32.mrf.mxu0
        %v942 = vpop.f32.mrf.mxu0
        %943 = vdwg.mxu0
        %v944 = vxor.u32 %v939, 2147483648
        %v945 = vmul.f32 %v944, 1.442695
        %v946 = vpow.pop %v945
        %v947 = vadd.f32 %v946, 1.0
        %v948 = vrcp.pop %v947
        %v949 = vmul.f32 1.0, %v948
        %v950 = vmul.f32 %v939, %v949
        %v951 = vadd.f32 %v820, 1.0
        %v952 = vmul.f32 %v950, %v951
        %v953 = vadd.f32 %v952, %v831
        %v954 = vld [vmem:[%s5 + $0x6] sm:$0x1]
        %v955 = vld [vmem:[%s5 + $0x7] sm:$0x1]
        %956 = vadd.xlane.f32.xlu0 %v953
        %v957 = vpop.xlane.xlu0 %956
        %v958 = vmul.f32 %v957, 0.03125
        %v959 = vmul.f32 %v953, %v953
        %960 = vadd.xlane.f32.xlu0 %v959
        %v961 = vpop.xlane.xlu0 %960
        %v962 = vmul.f32 %v961, 0.03125
        %v963 = vmul.f32 %v958, %v958
        %v964 = vsub.f32 %v962, %v963
        %v965 = vsub.f32 %v953, %v958
        %v966 = vadd.f32 %v964, 1e-06
        %v967 = vrsqrt.pop %v966
        %v968 = vmul.f32 %v965, %v967
        %v969 = vlaneseq
        %v970 = vshrl.u32 %v969, 7
        %v971 = vsub.s32 0, %v970
        %v972 = vrot.slane %v954, %v971
        %v973 = vmul.f32 %v968, %v972
        %v974 = vlaneseq
        %v975 = vshrl.u32 %v974, 7
        %v976 = vsub.s32 0, %v975
        %v977 = vrot.slane %v955, %v976
        %v978 = vadd.f32 %v973, %v977
        %s979 = scalar_lea.vmem [#allocation4], 128
        %v980 = vld [vmem:[%s979] sm:$0xff]
        %v981 = vld [vmem:[%s979 + $0x8] sm:$0xff]
        %v982 = vld [vmem:[%s979 + $0x10] sm:$0xff]
        %v983 = vld [vmem:[%s979 + $0x18] sm:$0xff]
        %v984 = vld [vmem:[%s979 + $0x20] sm:$0xff]
        %v985 = vld [vmem:[%s979 + $0x28] sm:$0xff]
        %v986 = vld [vmem:[%s979 + $0x30] sm:$0xff]
        %v987 = vld [vmem:[%s979 + $0x38] sm:$0xff]
        %v988 = vld [vmem:[%s979 + $0x40] sm:$0xff]
        %v989 = vld [vmem:[%s979 + $0x48] sm:$0xff]
        %v990 = vld [vmem:[%s979 + $0x50] sm:$0xff]
        %v991 = vld [vmem:[%s979 + $0x58] sm:$0xff]
        %v992 = vld [vmem:[%s979 + $0x60] sm:$0xff]
        %v993 = vld [vmem:[%s979 + $0x68] sm:$0xff]
        %v994 = vld [vmem:[%s979 + $0x70] sm:$0xff]
        %v995 = vld [vmem:[%s979 + $0x78] sm:$0xff]
        %v996 = vpack.c.bf16 %v978, %v978
        %v1013 = vunpack.c.l.b16 %v980
        %v1014 = vunpack.c.h.b16 %v980
        %v1015 = vunpack.c.l.b16 %v981
        %v1016 = vunpack.c.h.b16 %v981
        %v1017 = vunpack.c.l.b16 %v982
        %v1018 = vunpack.c.h.b16 %v982
        %v1019 = vunpack.c.l.b16 %v983
        %v1020 = vunpack.c.h.b16 %v983
        %v1021 = vunpack.c.l.b16 %v984
        %v1022 = vunpack.c.h.b16 %v984
        %v1023 = vunpack.c.l.b16 %v985
        %v1024 = vunpack.c.h.b16 %v985
        %v1025 = vunpack.c.l.b16 %v986
        %v1026 = vunpack.c.h.b16 %v986
        %v1027 = vunpack.c.l.b16 %v987
        %v1028 = vunpack.c.h.b16 %v987
        %v1029 = vunpack.c.l.b16 %v988
        %v1030 = vunpack.c.h.b16 %v988
        %v1031 = vunpack.c.l.b16 %v989
        %v1032 = vunpack.c.h.b16 %v989
        %v1033 = vunpack.c.l.b16 %v990
        %v1034 = vunpack.c.h.b16 %v990
        %v1035 = vunpack.c.l.b16 %v991
        %v1036 = vunpack.c.h.b16 %v991
        %v1037 = vunpack.c.l.b16 %v992
        %v1038 = vunpack.c.h.b16 %v992
        %v1039 = vunpack.c.l.b16 %v993
        %v1040 = vunpack.c.h.b16 %v993
        %v1041 = vunpack.c.l.b16 %v994
        %v1042 = vunpack.c.h.b16 %v994
        %v1043 = vunpack.c.l.b16 %v995
        %v1044 = vunpack.c.h.b16 %v995
        %v1045 = vpack.c.b16 %v1015, %v1013
        %v1046 = vpack.c.b16 %v1016, %v1014
        %v1047 = vpack.c.b16 %v1019, %v1017
        %v1048 = vpack.c.b16 %v1020, %v1018
        %v1049 = vpack.c.b16 %v1023, %v1021
        %v1050 = vpack.c.b16 %v1024, %v1022
        %v1051 = vpack.c.b16 %v1027, %v1025
        %v1052 = vpack.c.b16 %v1028, %v1026
        %v1053 = vpack.c.b16 %v1031, %v1029
        %v1054 = vpack.c.b16 %v1032, %v1030
        %v1055 = vpack.c.b16 %v1035, %v1033
        %v1056 = vpack.c.b16 %v1036, %v1034
        %v1057 = vpack.c.b16 %v1039, %v1037
        %v1058 = vpack.c.b16 %v1040, %v1038
        %v1059 = vpack.c.b16 %v1043, %v1041
        %v1060 = vpack.c.b16 %v1044, %v1042
        %1077 = vmatprep.subr.bf16.mxu0 %v1060
        %1078 = vmatpush1.bf16.msra.mxu0 %v1059
        %1079 = vmatprep.subr.bf16.mxu0 %v1058
        %1080 = vmatpush1.bf16.msra.mxu0 %v1057
        %1081 = vmatprep.subr.bf16.mxu0 %v1056
        %1082 = vmatpush1.bf16.msra.mxu0 %v1055
        %1083 = vmatprep.subr.bf16.mxu0 %v1054
        %1084 = vmatpush1.bf16.msra.mxu0 %v1053
        %1085 = vmatprep.subr.bf16.mxu0 %v1052
        %1086 = vmatpush1.bf16.msra.mxu0 %v1051
        %1087 = vmatprep.subr.bf16.mxu0 %v1050
        %1088 = vmatpush1.bf16.msra.mxu0 %v1049
        %1089 = vmatprep.subr.bf16.mxu0 %v1048
        %1090 = vmatpush1.bf16.msra.mxu0 %v1047
        %1091 = vmatprep.subr.bf16.mxu0 %v1046
        %1092 = vmatpush1.bf16.msra.mxu0 %v1045
        %1093 = vmatprep.subr.bf16.mxu0 0
        %1094 = vmatpush2.bf16.msra.mxu0 0
        %1095 = vmatprep.subr.bf16.mxu0 0
        %1096 = vmatpush2.bf16.msra.mxu0 0
        %1097 = vmatprep.subr.bf16.mxu0 0
        %1098 = vmatpush2.bf16.msra.mxu0 0
        %1099 = vmatprep.subr.bf16.mxu0 0
        %1100 = vmatpush2.bf16.msra.mxu0 0
        %1101 = vmatprep.subr.bf16.mxu0 0
        %1102 = vmatpush2.bf16.msra.mxu0 0
        %1103 = vmatprep.subr.bf16.mxu0 0
        %1104 = vmatpush2.bf16.msra.mxu0 0
        %1105 = vmatprep.subr.bf16.mxu0 0
        %1106 = vmatpush2.bf16.msra.mxu0 0
        %1107 = vmatprep.subr.bf16.mxu0 0
        %1108 = vmatpush2.bf16.msra.mxu0 0
        %1109 = vmatprep.mubr.bf16.mxu0 0
        %1110 = vmatmul.mubr.bf16.gmra.mxu0 %v996
        %v1111 = vpop.f32.mrf.mxu0
        %v1112 = vadd.f32 0.0, %v1111
        %v1113 = vpop.f32.mrf.mxu0
        %v1114 = vadd.f32 0.0, %v1113
        %v1115 = vpop.f32.mrf.mxu0
        %v1116 = vpop.f32.mrf.mxu0
        %1117 = vdwg.mxu0
        %v1118 = vld [vmem:[%s5 + $0x8] sm:$0x1]
        %v1119 = vlaneseq
        %v1120 = vshrl.u32 %v1119, 7
        %v1121 = vsub.s32 0, %v1120
        %v1122 = vrot.slane %v1118, %v1121
        %v1123 = vadd.f32 %v1112, %v1122
        %v1124 = vld [vmem:[%s5 + $0x9] sm:$0x1]
        %v1125 = vlaneseq
        %v1126 = vshrl.u32 %v1125, 7
        %v1127 = vsub.s32 0, %v1126
        %v1128 = vrot.slane %v1124, %v1127
        %v1129 = vadd.f32 %v1114, %v1128
        %v1130 = vxor.u32 %v1129, 2147483648
        %v1131 = vmul.f32 %v1130, 1.442695
        %v1132 = vpow.pop %v1131
        %v1133 = vadd.f32 %v1132, 1.0
        %v1134 = vrcp.pop %v1133
        %v1135 = vmul.f32 1.0, %v1134
        %v1136 = vmul.f32 %v1129, %v1135
        %s1137 = scalar_lea.vmem [#allocation2], 128
        %v1138 = vld [vmem:[%s1137] sm:$0xf]
        %v1139 = vld [vmem:[%s1137 + $0x4] sm:$0xf]
        %v1140 = vld [vmem:[%s1137 + $0x8] sm:$0xf]
        %v1141 = vld [vmem:[%s1137 + $0xc] sm:$0xf]
        %v1142 = vld [vmem:[%s1137 + $0x10] sm:$0xf]
        %v1143 = vld [vmem:[%s1137 + $0x14] sm:$0xf]
        %v1144 = vld [vmem:[%s1137 + $0x18] sm:$0xf]
        %v1145 = vld [vmem:[%s1137 + $0x1c] sm:$0xf]
        %v1146 = vld [vmem:[%s1137 + $0x20] sm:$0xf]
        %v1147 = vld [vmem:[%s1137 + $0x24] sm:$0xf]
        %v1148 = vld [vmem:[%s1137 + $0x28] sm:$0xf]
        %v1149 = vld [vmem:[%s1137 + $0x2c] sm:$0xf]
        %v1150 = vld [vmem:[%s1137 + $0x30] sm:$0xf]
        %v1151 = vld [vmem:[%s1137 + $0x34] sm:$0xf]
        %v1152 = vld [vmem:[%s1137 + $0x38] sm:$0xf]
        %v1153 = vld [vmem:[%s1137 + $0x3c] sm:$0xf]
        %v1154 = vpack.c.bf16 %v1136, %v1136
        %v1155 = vld [vmem:[%s5 + $0xa] sm:$0x1]
        %v1156 = vlaneseq
        %v1157 = vshrl.u32 %v1156, 7
        %v1158 = vsub.s32 0, %v1157
        %v1159 = vrot.slane %v1155, %v1158
        %v1176 = vunpack.c.l.b16 %v1138
        %v1177 = vunpack.c.l.b16 %v1139
        %v1178 = vunpack.c.l.b16 %v1140
        %v1179 = vunpack.c.l.b16 %v1141
        %v1180 = vunpack.c.l.b16 %v1142
        %v1181 = vunpack.c.l.b16 %v1143
        %v1182 = vunpack.c.l.b16 %v1144
        %v1183 = vunpack.c.l.b16 %v1145
        %v1184 = vunpack.c.l.b16 %v1146
        %v1185 = vunpack.c.l.b16 %v1147
        %v1186 = vunpack.c.l.b16 %v1148
        %v1187 = vunpack.c.l.b16 %v1149
        %v1188 = vunpack.c.l.b16 %v1150
        %v1189 = vunpack.c.l.b16 %v1151
        %v1190 = vunpack.c.l.b16 %v1152
        %v1191 = vunpack.c.l.b16 %v1153
        %v1192 = vpack.c.b16 %v1177, %v1176
        %v1193 = vpack.c.b16 %v1179, %v1178
        %v1194 = vpack.c.b16 %v1181, %v1180
        %v1195 = vpack.c.b16 %v1183, %v1182
        %v1196 = vpack.c.b16 %v1185, %v1184
        %v1197 = vpack.c.b16 %v1187, %v1186
        %v1198 = vpack.c.b16 %v1189, %v1188
        %v1199 = vpack.c.b16 %v1191, %v1190
        %1208 = vmatprep.subr.bf16.mxu0 0
        %1209 = vmatpush1.bf16.msra.mxu0 %v1199
        %1210 = vmatprep.subr.bf16.mxu0 0
        %1211 = vmatpush1.bf16.msra.mxu0 %v1198
        %1212 = vmatprep.subr.bf16.mxu0 0
        %1213 = vmatpush1.bf16.msra.mxu0 %v1197
        %1214 = vmatprep.subr.bf16.mxu0 0
        %1215 = vmatpush1.bf16.msra.mxu0 %v1196
        %1216 = vmatprep.subr.bf16.mxu0 0
        %1217 = vmatpush1.bf16.msra.mxu0 %v1195
        %1218 = vmatprep.subr.bf16.mxu0 0
        %1219 = vmatpush1.bf16.msra.mxu0 %v1194
        %1220 = vmatprep.subr.bf16.mxu0 0
        %1221 = vmatpush1.bf16.msra.mxu0 %v1193
        %1222 = vmatprep.subr.bf16.mxu0 0
        %1223 = vmatpush1.bf16.msra.mxu0 %v1192
        %1224 = vmatprep.subr.bf16.mxu0 0
        %1225 = vmatpush2.bf16.msra.mxu0 0
        %1226 = vmatprep.subr.bf16.mxu0 0
        %1227 = vmatpush2.bf16.msra.mxu0 0
        %1228 = vmatprep.subr.bf16.mxu0 0
        %1229 = vmatpush2.bf16.msra.mxu0 0
        %1230 = vmatprep.subr.bf16.mxu0 0
        %1231 = vmatpush2.bf16.msra.mxu0 0
        %1232 = vmatprep.subr.bf16.mxu0 0
        %1233 = vmatpush2.bf16.msra.mxu0 0
        %1234 = vmatprep.subr.bf16.mxu0 0
        %1235 = vmatpush2.bf16.msra.mxu0 0
        %1236 = vmatprep.subr.bf16.mxu0 0
        %1237 = vmatpush2.bf16.msra.mxu0 0
        %1238 = vmatprep.subr.bf16.mxu0 0
        %1239 = vmatpush2.bf16.msra.mxu0 0
        %1240 = vmatprep.mubr.bf16.mxu0 0
        %1241 = vmatmul.mubr.bf16.gmra.mxu0 %v1154
        %v1242 = vpop.f32.mrf.mxu0
        %v1243 = vadd.f32 %v1159, %v1242
        %v1244 = vpop.f32.mrf.mxu0
        %v1245 = vpop.f32.mrf.mxu0
        %v1246 = vpop.f32.mrf.mxu0
        %1247 = vdwg.mxu0
        %v1248 = vxor.u32 %v1243, 2147483648
        %v1249 = vmul.f32 %v1248, 1.442695
        %v1250 = vpow.pop %v1249
        %v1251 = vadd.f32 %v1250, 1.0
        %v1252 = vrcp.pop %v1251
        %v1253 = vmul.f32 1.0, %v1252
        %v1254 = vmul.f32 %v1243, %v1253
        %s1255 = scalar_lea.vmem [#allocation2], 192
        %v1256 = vld [vmem:[%s1255] sm:$0xf]
        %v1257 = vld [vmem:[%s1255 + $0x4] sm:$0xf]
        %v1258 = vld [vmem:[%s1255 + $0x8] sm:$0xf]
        %v1259 = vld [vmem:[%s1255 + $0xc] sm:$0xf]
        %v1260 = vld [vmem:[%s1255 + $0x10] sm:$0xf]
        %v1261 = vld [vmem:[%s1255 + $0x14] sm:$0xf]
        %v1262 = vld [vmem:[%s1255 + $0x18] sm:$0xf]
        %v1263 = vld [vmem:[%s1255 + $0x1c] sm:$0xf]
        %v1264 = vld [vmem:[%s1255 + $0x20] sm:$0xf]
        %v1265 = vld [vmem:[%s1255 + $0x24] sm:$0xf]
        %v1266 = vld [vmem:[%s1255 + $0x28] sm:$0xf]
        %v1267 = vld [vmem:[%s1255 + $0x2c] sm:$0xf]
        %v1268 = vld [vmem:[%s1255 + $0x30] sm:$0xf]
        %v1269 = vld [vmem:[%s1255 + $0x34] sm:$0xf]
        %v1270 = vld [vmem:[%s1255 + $0x38] sm:$0xf]
        %v1271 = vld [vmem:[%s1255 + $0x3c] sm:$0xf]
        %v1272 = vpack.c.bf16 %v1254, %v1254
        %v1273 = vld [vmem:[%s5 + $0xb] sm:$0x1]
        %v1274 = vlaneseq
        %v1275 = vshrl.u32 %v1274, 7
        %v1276 = vsub.s32 0, %v1275
        %v1277 = vrot.slane %v1273, %v1276
        %v1294 = vunpack.c.l.b16 %v1256
        %v1295 = vunpack.c.l.b16 %v1257
        %v1296 = vunpack.c.l.b16 %v1258
        %v1297 = vunpack.c.l.b16 %v1259
        %v1298 = vunpack.c.l.b16 %v1260
        %v1299 = vunpack.c.l.b16 %v1261
        %v1300 = vunpack.c.l.b16 %v1262
        %v1301 = vunpack.c.l.b16 %v1263
        %v1302 = vunpack.c.l.b16 %v1264
        %v1303 = vunpack.c.l.b16 %v1265
        %v1304 = vunpack.c.l.b16 %v1266
        %v1305 = vunpack.c.l.b16 %v1267
        %v1306 = vunpack.c.l.b16 %v1268
        %v1307 = vunpack.c.l.b16 %v1269
        %v1308 = vunpack.c.l.b16 %v1270
        %v1309 = vunpack.c.l.b16 %v1271
        %v1310 = vpack.c.b16 %v1295, %v1294
        %v1311 = vpack.c.b16 %v1297, %v1296
        %v1312 = vpack.c.b16 %v1299, %v1298
        %v1313 = vpack.c.b16 %v1301, %v1300
        %v1314 = vpack.c.b16 %v1303, %v1302
        %v1315 = vpack.c.b16 %v1305, %v1304
        %v1316 = vpack.c.b16 %v1307, %v1306
        %v1317 = vpack.c.b16 %v1309, %v1308
        %1326 = vmatprep.subr.bf16.mxu0 0
        %1327 = vmatpush1.bf16.msra.mxu0 %v1317
        %1328 = vmatprep.subr.bf16.mxu0 0
        %1329 = vmatpush1.bf16.msra.mxu0 %v1316
        %1330 = vmatprep.subr.bf16.mxu0 0
        %1331 = vmatpush1.bf16.msra.mxu0 %v1315
        %1332 = vmatprep.subr.bf16.mxu0 0
        %1333 = vmatpush1.bf16.msra.mxu0 %v1314
        %1334 = vmatprep.subr.bf16.mxu0 0
        %1335 = vmatpush1.bf16.msra.mxu0 %v1313
        %1336 = vmatprep.subr.bf16.mxu0 0
        %1337 = vmatpush1.bf16.msra.mxu0 %v1312
        %1338 = vmatprep.subr.bf16.mxu0 0
        %1339 = vmatpush1.bf16.msra.mxu0 %v1311
        %1340 = vmatprep.subr.bf16.mxu0 0
        %1341 = vmatpush1.bf16.msra.mxu0 %v1310
        %1342 = vmatprep.subr.bf16.mxu0 0
        %1343 = vmatpush2.bf16.msra.mxu0 0
        %1344 = vmatprep.subr.bf16.mxu0 0
        %1345 = vmatpush2.bf16.msra.mxu0 0
        %1346 = vmatprep.subr.bf16.mxu0 0
        %1347 = vmatpush2.bf16.msra.mxu0 0
        %1348 = vmatprep.subr.bf16.mxu0 0
        %1349 = vmatpush2.bf16.msra.mxu0 0
        %1350 = vmatprep.subr.bf16.mxu0 0
        %1351 = vmatpush2.bf16.msra.mxu0 0
        %1352 = vmatprep.subr.bf16.mxu0 0
        %1353 = vmatpush2.bf16.msra.mxu0 0
        %1354 = vmatprep.subr.bf16.mxu0 0
        %1355 = vmatpush2.bf16.msra.mxu0 0
        %1356 = vmatprep.subr.bf16.mxu0 0
        %1357 = vmatpush2.bf16.msra.mxu0 0
        %1358 = vmatprep.mubr.bf16.mxu0 0
        %1359 = vmatmul.mubr.bf16.gmra.mxu0 %v1272
        %v1360 = vpop.f32.mrf.mxu0
        %v1361 = vadd.f32 %v1277, %v1360
        %v1362 = vpop.f32.mrf.mxu0
        %v1363 = vpop.f32.mrf.mxu0
        %v1364 = vpop.f32.mrf.mxu0
        %1365 = vdwg.mxu0
        %v1366 = vxor.u32 %v1361, 2147483648
        %v1367 = vmul.f32 %v1366, 1.442695
        %v1368 = vpow.pop %v1367
        %v1369 = vadd.f32 %v1368, 1.0
        %v1370 = vrcp.pop %v1369
        %v1371 = vmul.f32 1.0, %v1370
        %v1372 = vmul.f32 %v1361, %v1371
        %v1373 = vld [vmem:[%s5 + $0xc] sm:$0x1]
        %v1374 = vlaneseq
        %v1375 = vshrl.u32 %v1374, 7
        %v1376 = vsub.s32 0, %v1375
        %v1377 = vrot.slane %v1373, %v1376
        %v1378 = vmul.f32 %v1372, %v1377
        %v1379 = vadd.f32 %v1123, %v1378
        %v1380 = vld [vmem:[%s5 + $0xd] sm:$0x1]
        %v1381 = vld [vmem:[%s5 + $0xe] sm:$0x1]
        %1382 = vadd.xlane.f32.xlu0 %v1379
        %v1383 = vpop.xlane.xlu0 %1382
        %v1384 = vmul.f32 %v1383, 0.03125
        %v1385 = vmul.f32 %v1379, %v1379
        %1386 = vadd.xlane.f32.xlu0 %v1385
        %v1387 = vpop.xlane.xlu0 %1386
        %v1388 = vmul.f32 %v1387, 0.03125
        %v1389 = vmul.f32 %v1384, %v1384
        %v1390 = vsub.f32 %v1388, %v1389
        %v1391 = vsub.f32 %v1379, %v1384
        %v1392 = vadd.f32 %v1390, 1e-06
        %v1393 = vrsqrt.pop %v1392
        %v1394 = vmul.f32 %v1391, %v1393
        %v1395 = vlaneseq
        %v1396 = vshrl.u32 %v1395, 7
        %v1397 = vsub.s32 0, %v1396
        %v1398 = vrot.slane %v1380, %v1397
        %v1399 = vmul.f32 %v1394, %v1398
        %v1400 = vlaneseq
        %v1401 = vshrl.u32 %v1400, 7
        %v1402 = vsub.s32 0, %v1401
        %v1403 = vrot.slane %v1381, %v1402
        %v1404 = vadd.f32 %v1399, %v1403
        %s1405 = scalar_lea.vmem [#allocation4], 256
        %v1406 = vld [vmem:[%s1405] sm:$0xff]
        %v1407 = vld [vmem:[%s1405 + $0x8] sm:$0xff]
        %v1408 = vld [vmem:[%s1405 + $0x10] sm:$0xff]
        %v1409 = vld [vmem:[%s1405 + $0x18] sm:$0xff]
        %v1410 = vld [vmem:[%s1405 + $0x20] sm:$0xff]
        %v1411 = vld [vmem:[%s1405 + $0x28] sm:$0xff]
        %v1412 = vld [vmem:[%s1405 + $0x30] sm:$0xff]
        %v1413 = vld [vmem:[%s1405 + $0x38] sm:$0xff]
        %v1414 = vld [vmem:[%s1405 + $0x40] sm:$0xff]
        %v1415 = vld [vmem:[%s1405 + $0x48] sm:$0xff]
        %v1416 = vld [vmem:[%s1405 + $0x50] sm:$0xff]
        %v1417 = vld [vmem:[%s1405 + $0x58] sm:$0xff]
        %v1418 = vld [vmem:[%s1405 + $0x60] sm:$0xff]
        %v1419 = vld [vmem:[%s1405 + $0x68] sm:$0xff]
        %v1420 = vld [vmem:[%s1405 + $0x70] sm:$0xff]
        %v1421 = vld [vmem:[%s1405 + $0x78] sm:$0xff]
        %v1422 = vpack.c.bf16 %v1404, %v1404
        %v1439 = vunpack.c.l.b16 %v1406
        %v1440 = vunpack.c.h.b16 %v1406
        %v1441 = vunpack.c.l.b16 %v1407
        %v1442 = vunpack.c.h.b16 %v1407
        %v1443 = vunpack.c.l.b16 %v1408
        %v1444 = vunpack.c.h.b16 %v1408
        %v1445 = vunpack.c.l.b16 %v1409
        %v1446 = vunpack.c.h.b16 %v1409
        %v1447 = vunpack.c.l.b16 %v1410
        %v1448 = vunpack.c.h.b16 %v1410
        %v1449 = vunpack.c.l.b16 %v1411
        %v1450 = vunpack.c.h.b16 %v1411
        %v1451 = vunpack.c.l.b16 %v1412
        %v1452 = vunpack.c.h.b16 %v1412
        %v1453 = vunpack.c.l.b16 %v1413
        %v1454 = vunpack.c.h.b16 %v1413
        %v1455 = vunpack.c.l.b16 %v1414
        %v1456 = vunpack.c.h.b16 %v1414
        %v1457 = vunpack.c.l.b16 %v1415
        %v1458 = vunpack.c.h.b16 %v1415
        %v1459 = vunpack.c.l.b16 %v1416
        %v1460 = vunpack.c.h.b16 %v1416
        %v1461 = vunpack.c.l.b16 %v1417
        %v1462 = vunpack.c.h.b16 %v1417
        %v1463 = vunpack.c.l.b16 %v1418
        %v1464 = vunpack.c.h.b16 %v1418
        %v1465 = vunpack.c.l.b16 %v1419
        %v1466 = vunpack.c.h.b16 %v1419
        %v1467 = vunpack.c.l.b16 %v1420
        %v1468 = vunpack.c.h.b16 %v1420
        %v1469 = vunpack.c.l.b16 %v1421
        %v1470 = vunpack.c.h.b16 %v1421
        %v1471 = vpack.c.b16 %v1441, %v1439
        %v1472 = vpack.c.b16 %v1442, %v1440
        %v1473 = vpack.c.b16 %v1445, %v1443
        %v1474 = vpack.c.b16 %v1446, %v1444
        %v1475 = vpack.c.b16 %v1449, %v1447
        %v1476 = vpack.c.b16 %v1450, %v1448
        %v1477 = vpack.c.b16 %v1453, %v1451
        %v1478 = vpack.c.b16 %v1454, %v1452
        %v1479 = vpack.c.b16 %v1457, %v1455
        %v1480 = vpack.c.b16 %v1458, %v1456
        %v1481 = vpack.c.b16 %v1461, %v1459
        %v1482 = vpack.c.b16 %v1462, %v1460
        %v1483 = vpack.c.b16 %v1465, %v1463
        %v1484 = vpack.c.b16 %v1466, %v1464
        %v1485 = vpack.c.b16 %v1469, %v1467
        %v1486 = vpack.c.b16 %v1470, %v1468
        %1503 = vmatprep.subr.bf16.mxu0 %v1486
        %1504 = vmatpush1.bf16.msra.mxu0 %v1485
        %1505 = vmatprep.subr.bf16.mxu0 %v1484
        %1506 = vmatpush1.bf16.msra.mxu0 %v1483
        %1507 = vmatprep.subr.bf16.mxu0 %v1482
        %1508 = vmatpush1.bf16.msra.mxu0 %v1481
        %1509 = vmatprep.subr.bf16.mxu0 %v1480
        %1510 = vmatpush1.bf16.msra.mxu0 %v1479
        %1511 = vmatprep.subr.bf16.mxu0 %v1478
        %1512 = vmatpush1.bf16.msra.mxu0 %v1477
        %1513 = vmatprep.subr.bf16.mxu0 %v1476
        %1514 = vmatpush1.bf16.msra.mxu0 %v1475
        %1515 = vmatprep.subr.bf16.mxu0 %v1474
        %1516 = vmatpush1.bf16.msra.mxu0 %v1473
        %1517 = vmatprep.subr.bf16.mxu0 %v1472
        %1518 = vmatpush1.bf16.msra.mxu0 %v1471
        %1519 = vmatprep.subr.bf16.mxu0 0
        %1520 = vmatpush2.bf16.msra.mxu0 0
        %1521 = vmatprep.subr.bf16.mxu0 0
        %1522 = vmatpush2.bf16.msra.mxu0 0
        %1523 = vmatprep.subr.bf16.mxu0 0
        %1524 = vmatpush2.bf16.msra.mxu0 0
        %1525 = vmatprep.subr.bf16.mxu0 0
        %1526 = vmatpush2.bf16.msra.mxu0 0
        %1527 = vmatprep.subr.bf16.mxu0 0
        %1528 = vmatpush2.bf16.msra.mxu0 0
        %1529 = vmatprep.subr.bf16.mxu0 0
        %1530 = vmatpush2.bf16.msra.mxu0 0
        %1531 = vmatprep.subr.bf16.mxu0 0
        %1532 = vmatpush2.bf16.msra.mxu0 0
        %1533 = vmatprep.subr.bf16.mxu0 0
        %1534 = vmatpush2.bf16.msra.mxu0 0
        %1535 = vmatprep.mubr.bf16.mxu0 0
        %1536 = vmatmul.mubr.bf16.gmra.mxu0 %v1422
        %v1537 = vpop.f32.mrf.mxu0
        %v1538 = vadd.f32 0.0, %v1537
        %v1539 = vpop.f32.mrf.mxu0
        %v1540 = vadd.f32 0.0, %v1539
        %v1541 = vpop.f32.mrf.mxu0
        %v1542 = vpop.f32.mrf.mxu0
        %1543 = vdwg.mxu0
        %v1544 = vld [vmem:[%s5 + $0xf] sm:$0x1]
        %v1545 = vlaneseq
        %v1546 = vshrl.u32 %v1545, 7
        %v1547 = vsub.s32 0, %v1546
        %v1548 = vrot.slane %v1544, %v1547
        %v1549 = vadd.f32 %v1538, %v1548
        %v1550 = vld [vmem:[%s5 + $0x10] sm:$0x1]
        %v1551 = vlaneseq
        %v1552 = vshrl.u32 %v1551, 7
        %v1553 = vsub.s32 0, %v1552
        %v1554 = vrot.slane %v1550, %v1553
        %v1555 = vadd.f32 %v1540, %v1554
        %v1556 = vxor.u32 %v1555, 2147483648
        %v1557 = vmul.f32 %v1556, 1.442695
        %v1558 = vpow.pop %v1557
        %v1559 = vadd.f32 %v1558, 1.0
        %v1560 = vrcp.pop %v1559
        %v1561 = vmul.f32 1.0, %v1560
        %v1562 = vmul.f32 %v1555, %v1561
        %s1563 = scalar_lea.vmem [#allocation2], 256
        %v1564 = vld [vmem:[%s1563] sm:$0xf]
        %v1565 = vld [vmem:[%s1563 + $0x4] sm:$0xf]
        %v1566 = vld [vmem:[%s1563 + $0x8] sm:$0xf]
        %v1567 = vld [vmem:[%s1563 + $0xc] sm:$0xf]
        %v1568 = vld [vmem:[%s1563 + $0x10] sm:$0xf]
        %v1569 = vld [vmem:[%s1563 + $0x14] sm:$0xf]
        %v1570 = vld [vmem:[%s1563 + $0x18] sm:$0xf]
        %v1571 = vld [vmem:[%s1563 + $0x1c] sm:$0xf]
        %v1572 = vld [vmem:[%s1563 + $0x20] sm:$0xf]
        %v1573 = vld [vmem:[%s1563 + $0x24] sm:$0xf]
        %v1574 = vld [vmem:[%s1563 + $0x28] sm:$0xf]
        %v1575 = vld [vmem:[%s1563 + $0x2c] sm:$0xf]
        %v1576 = vld [vmem:[%s1563 + $0x30] sm:$0xf]
        %v1577 = vld [vmem:[%s1563 + $0x34] sm:$0xf]
        %v1578 = vld [vmem:[%s1563 + $0x38] sm:$0xf]
        %v1579 = vld [vmem:[%s1563 + $0x3c] sm:$0xf]
        %v1580 = vpack.c.bf16 %v1562, %v1562
        %v1581 = vld [vmem:[%s5 + $0x11] sm:$0x1]
        %v1582 = vlaneseq
        %v1583 = vshrl.u32 %v1582, 7
        %v1584 = vsub.s32 0, %v1583
        %v1585 = vrot.slane %v1581, %v1584
        %v1602 = vunpack.c.l.b16 %v1564
        %v1603 = vunpack.c.l.b16 %v1565
        %v1604 = vunpack.c.l.b16 %v1566
        %v1605 = vunpack.c.l.b16 %v1567
        %v1606 = vunpack.c.l.b16 %v1568
        %v1607 = vunpack.c.l.b16 %v1569
        %v1608 = vunpack.c.l.b16 %v1570
        %v1609 = vunpack.c.l.b16 %v1571
        %v1610 = vunpack.c.l.b16 %v1572
        %v1611 = vunpack.c.l.b16 %v1573
        %v1612 = vunpack.c.l.b16 %v1574
        %v1613 = vunpack.c.l.b16 %v1575
        %v1614 = vunpack.c.l.b16 %v1576
        %v1615 = vunpack.c.l.b16 %v1577
        %v1616 = vunpack.c.l.b16 %v1578
        %v1617 = vunpack.c.l.b16 %v1579
        %v1618 = vpack.c.b16 %v1603, %v1602
        %v1619 = vpack.c.b16 %v1605, %v1604
        %v1620 = vpack.c.b16 %v1607, %v1606
        %v1621 = vpack.c.b16 %v1609, %v1608
        %v1622 = vpack.c.b16 %v1611, %v1610
        %v1623 = vpack.c.b16 %v1613, %v1612
        %v1624 = vpack.c.b16 %v1615, %v1614
        %v1625 = vpack.c.b16 %v1617, %v1616
        %1634 = vmatprep.subr.bf16.mxu0 0
        %1635 = vmatpush1.bf16.msra.mxu0 %v1625
        %1636 = vmatprep.subr.bf16.mxu0 0
        %1637 = vmatpush1.bf16.msra.mxu0 %v1624
        %1638 = vmatprep.subr.bf16.mxu0 0
        %1639 = vmatpush1.bf16.msra.mxu0 %v1623
        %1640 = vmatprep.subr.bf16.mxu0 0
        %1641 = vmatpush1.bf16.msra.mxu0 %v1622
        %1642 = vmatprep.subr.bf16.mxu0 0
        %1643 = vmatpush1.bf16.msra.mxu0 %v1621
        %1644 = vmatprep.subr.bf16.mxu0 0
        %1645 = vmatpush1.bf16.msra.mxu0 %v1620
        %1646 = vmatprep.subr.bf16.mxu0 0
        %1647 = vmatpush1.bf16.msra.mxu0 %v1619
        %1648 = vmatprep.subr.bf16.mxu0 0
        %1649 = vmatpush1.bf16.msra.mxu0 %v1618
        %1650 = vmatprep.subr.bf16.mxu0 0
        %1651 = vmatpush2.bf16.msra.mxu0 0
        %1652 = vmatprep.subr.bf16.mxu0 0
        %1653 = vmatpush2.bf16.msra.mxu0 0
        %1654 = vmatprep.subr.bf16.mxu0 0
        %1655 = vmatpush2.bf16.msra.mxu0 0
        %1656 = vmatprep.subr.bf16.mxu0 0
        %1657 = vmatpush2.bf16.msra.mxu0 0
        %1658 = vmatprep.subr.bf16.mxu0 0
        %1659 = vmatpush2.bf16.msra.mxu0 0
        %1660 = vmatprep.subr.bf16.mxu0 0
        %1661 = vmatpush2.bf16.msra.mxu0 0
        %1662 = vmatprep.subr.bf16.mxu0 0
        %1663 = vmatpush2.bf16.msra.mxu0 0
        %1664 = vmatprep.subr.bf16.mxu0 0
        %1665 = vmatpush2.bf16.msra.mxu0 0
        %1666 = vmatprep.mubr.bf16.mxu0 0
        %1667 = vmatmul.mubr.bf16.gmra.mxu0 %v1580
        %v1668 = vpop.f32.mrf.mxu0
        %v1669 = vadd.f32 %v1585, %v1668
        %v1670 = vpop.f32.mrf.mxu0
        %v1671 = vpop.f32.mrf.mxu0
        %v1672 = vpop.f32.mrf.mxu0
        %1673 = vdwg.mxu0
        %v1674 = vxor.u32 %v1669, 2147483648
        %v1675 = vmul.f32 %v1674, 1.442695
        %v1676 = vpow.pop %v1675
        %v1677 = vadd.f32 %v1676, 1.0
        %v1678 = vrcp.pop %v1677
        %v1679 = vmul.f32 1.0, %v1678
        %v1680 = vmul.f32 %v1669, %v1679
        %s1681 = scalar_lea.vmem [#allocation2], 320
        %v1682 = vld [vmem:[%s1681] sm:$0xf]
        %v1683 = vld [vmem:[%s1681 + $0x4] sm:$0xf]
        %v1684 = vld [vmem:[%s1681 + $0x8] sm:$0xf]
        %v1685 = vld [vmem:[%s1681 + $0xc] sm:$0xf]
        %v1686 = vld [vmem:[%s1681 + $0x10] sm:$0xf]
        %v1687 = vld [vmem:[%s1681 + $0x14] sm:$0xf]
        %v1688 = vld [vmem:[%s1681 + $0x18] sm:$0xf]
        %v1689 = vld [vmem:[%s1681 + $0x1c] sm:$0xf]
        %v1690 = vld [vmem:[%s1681 + $0x20] sm:$0xf]
        %v1691 = vld [vmem:[%s1681 + $0x24] sm:$0xf]
        %v1692 = vld [vmem:[%s1681 + $0x28] sm:$0xf]
        %v1693 = vld [vmem:[%s1681 + $0x2c] sm:$0xf]
        %v1694 = vld [vmem:[%s1681 + $0x30] sm:$0xf]
        %v1695 = vld [vmem:[%s1681 + $0x34] sm:$0xf]
        %v1696 = vld [vmem:[%s1681 + $0x38] sm:$0xf]
        %v1697 = vld [vmem:[%s1681 + $0x3c] sm:$0xf]
        %v1698 = vpack.c.bf16 %v1680, %v1680
        %v1699 = vld [vmem:[%s5 + $0x12] sm:$0x1]
        %v1700 = vlaneseq
        %v1701 = vshrl.u32 %v1700, 7
        %v1702 = vsub.s32 0, %v1701
        %v1703 = vrot.slane %v1699, %v1702
        %v1720 = vunpack.c.l.b16 %v1682
        %v1721 = vunpack.c.l.b16 %v1683
        %v1722 = vunpack.c.l.b16 %v1684
        %v1723 = vunpack.c.l.b16 %v1685
        %v1724 = vunpack.c.l.b16 %v1686
        %v1725 = vunpack.c.l.b16 %v1687
        %v1726 = vunpack.c.l.b16 %v1688
        %v1727 = vunpack.c.l.b16 %v1689
        %v1728 = vunpack.c.l.b16 %v1690
        %v1729 = vunpack.c.l.b16 %v1691
        %v1730 = vunpack.c.l.b16 %v1692
        %v1731 = vunpack.c.l.b16 %v1693
        %v1732 = vunpack.c.l.b16 %v1694
        %v1733 = vunpack.c.l.b16 %v1695
        %v1734 = vunpack.c.l.b16 %v1696
        %v1735 = vunpack.c.l.b16 %v1697
        %v1736 = vpack.c.b16 %v1721, %v1720
        %v1737 = vpack.c.b16 %v1723, %v1722
        %v1738 = vpack.c.b16 %v1725, %v1724
        %v1739 = vpack.c.b16 %v1727, %v1726
        %v1740 = vpack.c.b16 %v1729, %v1728
        %v1741 = vpack.c.b16 %v1731, %v1730
        %v1742 = vpack.c.b16 %v1733, %v1732
        %v1743 = vpack.c.b16 %v1735, %v1734
        %1752 = vmatprep.subr.bf16.mxu0 0
        %1753 = vmatpush1.bf16.msra.mxu0 %v1743
        %1754 = vmatprep.subr.bf16.mxu0 0
        %1755 = vmatpush1.bf16.msra.mxu0 %v1742
        %1756 = vmatprep.subr.bf16.mxu0 0
        %1757 = vmatpush1.bf16.msra.mxu0 %v1741
        %1758 = vmatprep.subr.bf16.mxu0 0
        %1759 = vmatpush1.bf16.msra.mxu0 %v1740
        %1760 = vmatprep.subr.bf16.mxu0 0
        %1761 = vmatpush1.bf16.msra.mxu0 %v1739
        %1762 = vmatprep.subr.bf16.mxu0 0
        %1763 = vmatpush1.bf16.msra.mxu0 %v1738
        %1764 = vmatprep.subr.bf16.mxu0 0
        %1765 = vmatpush1.bf16.msra.mxu0 %v1737
        %1766 = vmatprep.subr.bf16.mxu0 0
        %1767 = vmatpush1.bf16.msra.mxu0 %v1736
        %1768 = vmatprep.subr.bf16.mxu0 0
        %1769 = vmatpush2.bf16.msra.mxu0 0
        %1770 = vmatprep.subr.bf16.mxu0 0
        %1771 = vmatpush2.bf16.msra.mxu0 0
        %1772 = vmatprep.subr.bf16.mxu0 0
        %1773 = vmatpush2.bf16.msra.mxu0 0
        %1774 = vmatprep.subr.bf16.mxu0 0
        %1775 = vmatpush2.bf16.msra.mxu0 0
        %1776 = vmatprep.subr.bf16.mxu0 0
        %1777 = vmatpush2.bf16.msra.mxu0 0
        %1778 = vmatprep.subr.bf16.mxu0 0
        %1779 = vmatpush2.bf16.msra.mxu0 0
        %1780 = vmatprep.subr.bf16.mxu0 0
        %1781 = vmatpush2.bf16.msra.mxu0 0
        %1782 = vmatprep.subr.bf16.mxu0 0
        %1783 = vmatpush2.bf16.msra.mxu0 0
        %1784 = vmatprep.mubr.bf16.mxu0 0
        %1785 = vmatmul.mubr.bf16.gmra.mxu0 %v1698
        %v1786 = vpop.f32.mrf.mxu0
        %v1787 = vadd.f32 %v1703, %v1786
        %v1788 = vpop.f32.mrf.mxu0
        %v1789 = vpop.f32.mrf.mxu0
        %v1790 = vpop.f32.mrf.mxu0
        %1791 = vdwg.mxu0
        %v1792 = vxor.u32 %v1787, 2147483648
        %v1793 = vmul.f32 %v1792, 1.442695
        %v1794 = vpow.pop %v1793
        %v1795 = vadd.f32 %v1794, 1.0
        %v1796 = vrcp.pop %v1795
        %v1797 = vmul.f32 1.0, %v1796
        %v1798 = vmul.f32 %v1787, %v1797
        %v1799 = vld [vmem:[%s5 + $0x13] sm:$0x1]
        %v1800 = vlaneseq
        %v1801 = vshrl.u32 %v1800, 7
        %v1802 = vsub.s32 0, %v1801
        %v1803 = vrot.slane %v1799, %v1802
        %v1804 = vmul.f32 %v1798, %v1803
        %v1805 = vadd.f32 %v1549, %v1804
        %v1806 = vld [vmem:[%s5 + $0x14] sm:$0x1]
        %v1807 = vld [vmem:[%s5 + $0x15] sm:$0x1]
        %1808 = vadd.xlane.f32.xlu0 %v1805
        %v1809 = vpop.xlane.xlu0 %1808
        %v1810 = vmul.f32 %v1809, 0.03125
        %v1811 = vmul.f32 %v1805, %v1805
        %1812 = vadd.xlane.f32.xlu0 %v1811
        %v1813 = vpop.xlane.xlu0 %1812
        %v1814 = vmul.f32 %v1813, 0.03125
        %v1815 = vmul.f32 %v1810, %v1810
        %v1816 = vsub.f32 %v1814, %v1815
        %v1817 = vsub.f32 %v1805, %v1810
        %v1818 = vadd.f32 %v1816, 1e-06
        %v1819 = vrsqrt.pop %v1818
        %v1820 = vmul.f32 %v1817, %v1819
        %v1821 = vlaneseq
        %v1822 = vshrl.u32 %v1821, 7
        %v1823 = vsub.s32 0, %v1822
        %v1824 = vrot.slane %v1806, %v1823
        %v1825 = vmul.f32 %v1820, %v1824
        %v1826 = vlaneseq
        %v1827 = vshrl.u32 %v1826, 7
        %v1828 = vsub.s32 0, %v1827
        %v1829 = vrot.slane %v1807, %v1828
        %v1830 = vadd.f32 %v1825, %v1829
        %s1831 = scalar_lea.vmem [#allocation2], 384
        %v1832 = vld [vmem:[%s1831] sm:$0xf]
        %v1833 = vld [vmem:[%s1831 + $0x4] sm:$0xf]
        %v1834 = vld [vmem:[%s1831 + $0x8] sm:$0xf]
        %v1835 = vld [vmem:[%s1831 + $0xc] sm:$0xf]
        %v1836 = vld [vmem:[%s1831 + $0x10] sm:$0xf]
        %v1837 = vld [vmem:[%s1831 + $0x14] sm:$0xf]
        %v1838 = vld [vmem:[%s1831 + $0x18] sm:$0xf]
        %v1839 = vld [vmem:[%s1831 + $0x1c] sm:$0xf]
        %v1840 = vld [vmem:[%s1831 + $0x20] sm:$0xf]
        %v1841 = vld [vmem:[%s1831 + $0x24] sm:$0xf]
        %v1842 = vld [vmem:[%s1831 + $0x28] sm:$0xf]
        %v1843 = vld [vmem:[%s1831 + $0x2c] sm:$0xf]
        %v1844 = vld [vmem:[%s1831 + $0x30] sm:$0xf]
        %v1845 = vld [vmem:[%s1831 + $0x34] sm:$0xf]
        %v1846 = vld [vmem:[%s1831 + $0x38] sm:$0xf]
        %v1847 = vld [vmem:[%s1831 + $0x3c] sm:$0xf]
        %v1848 = vpack.c.bf16 %v1830, %v1830
        %v1849 = vld [vmem:[%s5 + $0x16] sm:$0x1]
        %v1850 = vlaneseq
        %v1851 = vshrl.u32 %v1850, 7
        %v1852 = vsub.s32 0, %v1851
        %v1853 = vrot.slane %v1849, %v1852
        %v1870 = vunpack.c.l.b16 %v1832
        %v1871 = vunpack.c.l.b16 %v1833
        %v1872 = vunpack.c.l.b16 %v1834
        %v1873 = vunpack.c.l.b16 %v1835
        %v1874 = vunpack.c.l.b16 %v1836
        %v1875 = vunpack.c.l.b16 %v1837
        %v1876 = vunpack.c.l.b16 %v1838
        %v1877 = vunpack.c.l.b16 %v1839
        %v1878 = vunpack.c.l.b16 %v1840
        %v1879 = vunpack.c.l.b16 %v1841
        %v1880 = vunpack.c.l.b16 %v1842
        %v1881 = vunpack.c.l.b16 %v1843
        %v1882 = vunpack.c.l.b16 %v1844
        %v1883 = vunpack.c.l.b16 %v1845
        %v1884 = vunpack.c.l.b16 %v1846
        %v1885 = vunpack.c.l.b16 %v1847
        %v1886 = vpack.c.b16 %v1871, %v1870
        %v1887 = vpack.c.b16 %v1873, %v1872
        %v1888 = vpack.c.b16 %v1875, %v1874
        %v1889 = vpack.c.b16 %v1877, %v1876
        %v1890 = vpack.c.b16 %v1879, %v1878
        %v1891 = vpack.c.b16 %v1881, %v1880
        %v1892 = vpack.c.b16 %v1883, %v1882
        %v1893 = vpack.c.b16 %v1885, %v1884
        %1902 = vmatprep.subr.bf16.mxu0 0
        %1903 = vmatpush1.bf16.msra.mxu0 %v1893
        %1904 = vmatprep.subr.bf16.mxu0 0
        %1905 = vmatpush1.bf16.msra.mxu0 %v1892
        %1906 = vmatprep.subr.bf16.mxu0 0
        %1907 = vmatpush1.bf16.msra.mxu0 %v1891
        %1908 = vmatprep.subr.bf16.mxu0 0
        %1909 = vmatpush1.bf16.msra.mxu0 %v1890
        %1910 = vmatprep.subr.bf16.mxu0 0
        %1911 = vmatpush1.bf16.msra.mxu0 %v1889
        %1912 = vmatprep.subr.bf16.mxu0 0
        %1913 = vmatpush1.bf16.msra.mxu0 %v1888
        %1914 = vmatprep.subr.bf16.mxu0 0
        %1915 = vmatpush1.bf16.msra.mxu0 %v1887
        %1916 = vmatprep.subr.bf16.mxu0 0
        %1917 = vmatpush1.bf16.msra.mxu0 %v1886
        %1918 = vmatprep.subr.bf16.mxu0 0
        %1919 = vmatpush2.bf16.msra.mxu0 0
        %1920 = vmatprep.subr.bf16.mxu0 0
        %1921 = vmatpush2.bf16.msra.mxu0 0
        %1922 = vmatprep.subr.bf16.mxu0 0
        %1923 = vmatpush2.bf16.msra.mxu0 0
        %1924 = vmatprep.subr.bf16.mxu0 0
        %1925 = vmatpush2.bf16.msra.mxu0 0
        %1926 = vmatprep.subr.bf16.mxu0 0
        %1927 = vmatpush2.bf16.msra.mxu0 0
        %1928 = vmatprep.subr.bf16.mxu0 0
        %1929 = vmatpush2.bf16.msra.mxu0 0
        %1930 = vmatprep.subr.bf16.mxu0 0
        %1931 = vmatpush2.bf16.msra.mxu0 0
        %1932 = vmatprep.subr.bf16.mxu0 0
        %1933 = vmatpush2.bf16.msra.mxu0 0
        %1934 = vmatprep.mubr.bf16.mxu0 0
        %1935 = vmatmul.mubr.bf16.gmra.mxu0 %v1848
        %v1936 = vpop.f32.mrf.mxu0
        %v1937 = vadd.f32 %v1853, %v1936
        %v1938 = vpop.f32.mrf.mxu0
        %v1939 = vpop.f32.mrf.mxu0
        %v1940 = vpop.f32.mrf.mxu0
        %1941 = vdwg.mxu0
        %1942 = vst [vmem:[%s296] sm:$0xff] %v1937
        %p1943 = scmp.lt.s32.totalorder %s19, 1
        %s1944 = scalar_select %p1943, %s19, 1
        %s1945 = smul.addr %s1944, 8
        %s1946 = scalar_lea.vmem %s6, %s1945
        // Predicated region
        $region53: #{_forward.1} parent=43 // pred_check
          %p1947 = pneg %p173
        $region54: #{_forward.1} parent=43 // pred_check_branch
          %1949 = sbr.rel (%p1947) target = $region56
        $region55: #{_forward.1} parent=43 // pred_region
          _
        $region56: #{_forward.1} parent=43 // pred_fallthru
          _
      $region44: #{_forward.1} parent=5 // pred_fallthru
        _
      %p1950 = scmp.le.s32.totalorder 2, %s14
      // Predicated region
      $region57: #{_forward.1} parent=5 // pred_check
        %p1951 = pneg %p1950
      $region58: #{_forward.1} parent=5 // pred_check_branch
        %1953 = sbr.rel (%p1951) target = $region60
      $region59: #{_forward.1} parent=5 // pred_region
        %s1954 = ssub.s32 %s14, 2
        // Predicated region
        $region61: #{_forward.1} parent=59 // pred_check
          %p1955 = pneg %p179
        $region62: #{_forward.1} parent=59 // pred_check_branch
          %1957 = sbr.rel (%p1955) target = $region64
        $region63: #{_forward.1} parent=59 // pred_region
          %p1958 = scmp.lt.s32.totalorder %s20, 1
          %s1959 = scalar_select %p1958, %s20, 1
          %s1960 = smul.addr %s1959, 8
          %s1961 = scalar_lea.vmem %s6, %s1960
        $region64: #{_forward.1} parent=59 // pred_fallthru
          _
      $region60: #{_forward.1} parent=5 // pred_fallthru
        _
    $region6: #{_forward.1} parent=1 // loop_footer
      %s18 = sadd.s32 1, %s14
    $region7: #{_forward.1} parent=1 // loop_footer_branch
      %13 = sbr.rel target = $region3
    $region8: #{_forward.1} parent=1 // loop_exit
      _
    %1962 = vsyncpa [#allocation3], 1
    %s1963 = scalar_lea.sflag [#allocation3], 1
    %1964 = vsyncpa %s1963, 1
    %1965 = vsyncpa [#allocation5], 1

</llo_original>
